<compile_context>
chip_gen: v7x
topology: tpu7x:2x2x1
jax: 0.10.0
libtpu: 0.0.40
codegen_flags: <defaults>
</compile_context>

<pallas_src>
import functools

import jax
import jax.numpy as jnp
from jax.experimental import pallas as pl
from jax.experimental.pallas import tpu as pltpu


HID = 400   # fc1 / LSTM hidden size
H2 = 256    # fc2 out
H3 = 128    # fc3 out
OUT = 7     # fc4 out (hard-coded 7 in the PyTorch module)

_BF16 = jnp.bfloat16
_F32 = jnp.float32


def _round_up(x, m):
    return ((x + m - 1) // m) * m


def _actor_kernel(
    x_ref,                               # (tb, D) = [goal | state | prev_action]
    w11_ref, b11_ref,                    # fc1_1, zero-padded to D input rows
    w12_ref, b12_ref,                    # fc1_2, zero-padded to D input rows
    wi_ref, bi_ref,                      # LSTM input gate  (400, 400)
    wg_ref, bg_ref,                      # LSTM cell  gate  (400, 400)
    wo_ref, bo_ref,                      # LSTM output gate (400, 400)
    w2a_ref, w2b_ref, b2_ref,            # fc2 split over [h1 | h_lstm]
    w3_ref, b3_ref,                      # fc3
    w4_ref, b4_ref,                      # fc4
    out_ref,
):
    x = x_ref[...].astype(_BF16)

    # fc1_1 / fc1_2: two small-K matmuls over the fused input (f32 accumulate),
    # ReLU, then immediately drop to bf16 (only consumed as bf16 downstream).
    h1 = jnp.maximum(
        jnp.dot(x, w11_ref[...], preferred_element_type=_F32) + b11_ref[...],
        0.0).astype(_BF16)
    h2 = jnp.maximum(
        jnp.dot(x, w12_ref[...], preferred_element_type=_F32) + b12_ref[...],
        0.0).astype(_BF16)

    # LSTM cell, single step, zero initial (h, c):
    #   i = sigma(x W_i + b_i), g = tanh(x W_g + b_g), o = sigma(x W_o + b_o)
    #   c = i * g ;  h = relu(o * tanh(c))   (forget-gate term is exactly zero)
    # Three separate (400,400) dots — no lane-unaligned slicing of a fused
    # gate buffer.  sigma(z) computed as 0.5*(tanh(z/2)+1) (one EUP op).
    zi = jnp.dot(h2, wi_ref[...], preferred_element_type=_F32) + bi_ref[...]
    zg = jnp.dot(h2, wg_ref[...], preferred_element_type=_F32) + bg_ref[...]
    zo = jnp.dot(h2, wo_ref[...], preferred_element_type=_F32) + bo_ref[...]
    gi = 0.5 * (jnp.tanh(0.5 * zi) + 1.0)
    gg = jnp.tanh(zg)
    go = 0.5 * (jnp.tanh(0.5 * zo) + 1.0)
    h_lstm = jnp.maximum(go * jnp.tanh(gi * gg), 0.0).astype(_BF16)

    # fc2 over the (conceptual) concat [h1 | h_lstm] as two K=400 dots —
    # same MXU pass count as one K=800 dot, no relayout copy.
    z2 = jnp.maximum(
        jnp.dot(h1, w2a_ref[...], preferred_element_type=_F32)
        + jnp.dot(h_lstm, w2b_ref[...], preferred_element_type=_F32)
        + b2_ref[...], 0.0).astype(_BF16)

    z3 = jnp.maximum(
        jnp.dot(z2, w3_ref[...], preferred_element_type=_F32) + b3_ref[...],
        0.0).astype(_BF16)

    out_ref[...] = jnp.tanh(
        jnp.dot(z3, w4_ref[...], preferred_element_type=_F32) + b4_ref[...])


def init_params(key, goal_dim, action_dim, state_dim):
    """Deterministic PyTorch-style uniform init; weights stored (in, out) bf16,
    already laid out for the kernel (zero-padded fc1 rows, split gates/fc2)."""
    D = goal_dim + state_dim + action_dim        # [goal | state | action]
    inp1 = goal_dim + state_dim                  # fc1_1 input: cat([goal, state])
    inp2 = state_dim + action_dim                # fc1_2 input: cat([state, action])

    def uniform(k, shape, fan_in):
        bound = 1.0 / jnp.sqrt(float(fan_in))
        return jax.random.uniform(k, shape, _F32, -bound, bound)

    keys = jax.random.split(key, 13)
    p = {}

    # fc1_1 — rows [goal | state] sit at the front of x_cat; action rows = 0.
    w11 = uniform(keys[0], (inp1, HID), inp1)
    p["w1_1"] = jnp.zeros((D, HID), _F32).at[:inp1].set(w11).astype(_BF16)
    p["b1_1"] = uniform(keys[1], (1, HID), inp1)

    # fc1_2 — rows [state | action] sit at the tail of x_cat; goal rows = 0.
    w12 = uniform(keys[2], (inp2, HID), inp2)
    p["w1_2"] = jnp.zeros((D, HID), _F32).at[goal_dim:].set(w12).astype(_BF16)
    p["b1_2"] = uniform(keys[3], (1, HID), inp2)

    # LSTM gates (PyTorch order i, f, g, o); forget gate unused since c0 = 0.
    # Kept as three separate (HID, HID) matrices; bias = b_ih + b_hh per gate.
    for name, ki in (("i", 4), ("g", 5), ("o", 6)):
        kw, kb1, kb2 = jax.random.split(keys[ki], 3)
        p[f"w_{name}"] = uniform(kw, (HID, HID), HID).astype(_BF16)
        p[f"b_{name}"] = uniform(kb1, (1, HID), HID) + uniform(kb2, (1, HID), HID)

    # fc2 over concat(x_out1, lstm_out) -> (800, 256), stored as two halves.
    # TODO(synk): __init__ declares fc2 = Linear(400, 256); forward implies 800 — forward wins.
    w2 = uniform(keys[7], (2 * HID, H2), 2 * HID)
    p["w2_h1"] = w2[:HID].astype(_BF16)
    p["w2_lstm"] = w2[HID:].astype(_BF16)
    p["b2"] = uniform(keys[8], (1, H2), 2 * HID)

    p["w3"] = uniform(keys[9], (H2, H3), H2).astype(_BF16)
    p["b3"] = uniform(keys[10], (1, H3), H2)
    p["w4"] = uniform(keys[11], (H3, OUT), H3).astype(_BF16)
    p["b4"] = uniform(keys[12], (1, OUT), H3)
    return p


_WEIGHT_ORDER = ("w1_1", "b1_1", "w1_2", "b1_2",
                 "w_i", "b_i", "w_g", "b_g", "w_o", "b_o",
                 "w2_h1", "w2_lstm", "b2",
                 "w3", "b3", "w4", "b4")


@functools.partial(jax.jit, static_argnames=("block_b",))
def rdpg_actor_forward(params, goal, state, prev_action, hidden_state=None,
                       *, block_b=512):
    """Returns (out, hidden_state), matching the PyTorch forward signature.

    block_b=512 is safe on v5e; on v6e-class parts with 128 MiB VMEM it can be
    raised to 1024-2048 for large batches.
    """
    # TODO(synk): the new LSTM (h, c) is not computed/returned; hidden_state is
    # passed through unchanged (zero-init assumed, as in the buggy reference).
    B = goal.shape[0]
    x = jnp.concatenate([goal, state, prev_action], axis=1).astype(_F32)
    D = x.shape[1]

    # Batch tile: multiple of 8; keep at least 2 tiles for larger B so the
    # "parallel" axis can shard across v7x's two TensorCores.
    tb = min(block_b, max(8, _round_up((B + 1) // 2, 8)))
    pad = (-B) % tb
    if pad:
        x = jnp.pad(x, ((0, pad), (0, 0)))
    bp = B + pad
    grid = (bp // tb,)

    weights = [params[n] for n in _WEIGHT_ORDER]

    def const_spec(arr):
        # Full array, same block every grid step -> loaded once, VMEM-resident.
        return pl.BlockSpec(arr.shape, lambda i: (0, 0))

    in_specs = ([pl.BlockSpec((tb, D), lambda i: (i, 0))]
                + [const_spec(w) for w in weights])

    # Explicit scoped-VMEM budget: ~1.5 MB bf16 weights (double-buffered) plus
    # roughly 20 KB of live activations per batch row, with headroom; capped
    # well under v7x's 64 MiB per-core VMEM.
    vmem_limit = int(min(48 * 2**20, 16 * 2**20 + tb * 20 * 1024))

    out = pl.pallas_call(
        _actor_kernel,
        out_shape=jax.ShapeDtypeStruct((bp, OUT), _F32),
        grid=grid,
        in_specs=in_specs,
        out_specs=pl.BlockSpec((tb, OUT), lambda i: (i, 0)),
        compiler_params=pltpu.CompilerParams(
            dimension_semantics=("parallel",),
            vmem_limit_bytes=vmem_limit),
    )(x, *weights)

    if pad:
        out = out[:B]
    return out, hidden_state


def _reference(params, goal, state, prev_action):
    """Pure-JAX reference mirroring the kernel math (bf16 matmuls, f32 accum)."""
    x = jnp.concatenate([goal, state, prev_action], axis=1).astype(_BF16)
    d32 = lambda a, w: jnp.dot(a, w, preferred_element_type=_F32)
    h1 = jax.nn.relu(d32(x, params["w1_1"]) + params["b1_1"]).astype(_BF16)
    h2 = jax.nn.relu(d32(x, params["w1_2"]) + params["b1_2"]).astype(_BF16)
    gi = jax.nn.sigmoid(d32(h2, params["w_i"]) + params["b_i"])
    gg = jnp.tanh(d32(h2, params["w_g"]) + params["b_g"])
    go = jax.nn.sigmoid(d32(h2, params["w_o"]) + params["b_o"])
    h_lstm = jax.nn.relu(go * jnp.tanh(gi * gg)).astype(_BF16)
    z2 = jax.nn.relu(d32(h1, params["w2_h1"])
                     + d32(h_lstm, params["w2_lstm"]) + params["b2"]).astype(_BF16)
    z3 = jax.nn.relu(d32(z2, params["w3"]) + params["b3"]).astype(_BF16)
    return jnp.tanh(d32(z3, params["w4"]) + params["b4"])


if __name__ == "__main__":
    B, GOAL, ACT, STATE = 2, 4, 7, 9

    key = jax.random.PRNGKey(0)
    kp, kg, ks, ka = jax.random.split(key, 4)
    params = init_params(kp, GOAL, ACT, STATE)

    goal = jax.random.normal(kg, (B, GOAL), _F32)
    state = jax.random.normal(ks, (B, STATE), _F32)
    prev_action = jax.random.normal(ka, (B, ACT), _F32)

    out, hidden = rdpg_actor_forward(params, goal, state, prev_action)
    out = jax.block_until_ready(out)

    ref = _reference(params, goal, state, prev_action)
    assert out.shape == (B, OUT)
    assert hidden is None
    assert jnp.allclose(out, ref, atol=3e-2, rtol=3e-2), (out, ref)
    print("KERNEL_OK")
</pallas_src>

<mosaic_0001>
module attributes {stable_mosaic.version = 11 : i64} {
  func.func @_actor_kernel(%arg0: i32, %arg1: memref<8x20xf32, #tpu.memory_space<vmem>>, %arg2: memref<20x400xbf16, #tpu.memory_space<vmem>>, %arg3: memref<1x400xf32, #tpu.memory_space<vmem>>, %arg4: memref<20x400xbf16, #tpu.memory_space<vmem>>, %arg5: memref<1x400xf32, #tpu.memory_space<vmem>>, %arg6: memref<400x400xbf16, #tpu.memory_space<vmem>>, %arg7: memref<1x400xf32, #tpu.memory_space<vmem>>, %arg8: memref<400x400xbf16, #tpu.memory_space<vmem>>, %arg9: memref<1x400xf32, #tpu.memory_space<vmem>>, %arg10: memref<400x400xbf16, #tpu.memory_space<vmem>>, %arg11: memref<1x400xf32, #tpu.memory_space<vmem>>, %arg12: memref<400x256xbf16, #tpu.memory_space<vmem>>, %arg13: memref<400x256xbf16, #tpu.memory_space<vmem>>, %arg14: memref<1x256xf32, #tpu.memory_space<vmem>>, %arg15: memref<256x128xbf16, #tpu.memory_space<vmem>>, %arg16: memref<1x128xf32, #tpu.memory_space<vmem>>, %arg17: memref<128x7xbf16, #tpu.memory_space<vmem>>, %arg18: memref<1x7xf32, #tpu.memory_space<vmem>>, %arg19: memref<8x7xf32, #tpu.memory_space<vmem>>) attributes {dimension_semantics = [#tpu.dimension_semantics<parallel>], iteration_bounds = array<i64: 1>, scalar_prefetch = 0 : i64, scratch_operands = 0 : i64, tpu.core_type = #tpu.core_type<tc>, window_params = [{transform_indices = @transform_0, window_bounds = array<i64: 8, 20>}, {pipeline_mode = #tpu.pipeline_mode<synchronous>, transform_indices = @transform_1, window_bounds = array<i64: 20, 400>}, {pipeline_mode = #tpu.pipeline_mode<synchronous>, transform_indices = @transform_2, window_bounds = array<i64: 1, 400>}, {pipeline_mode = #tpu.pipeline_mode<synchronous>, transform_indices = @transform_3, window_bounds = array<i64: 20, 400>}, {pipeline_mode = #tpu.pipeline_mode<synchronous>, transform_indices = @transform_4, window_bounds = array<i64: 1, 400>}, {pipeline_mode = #tpu.pipeline_mode<synchronous>, transform_indices = @transform_5, window_bounds = array<i64: 400, 400>}, {pipeline_mode = #tpu.pipeline_mode<synchronous>, transform_indices = @transform_6, window_bounds = array<i64: 1, 400>}, {pipeline_mode = #tpu.pipeline_mode<synchronous>, transform_indices = @transform_7, window_bounds = array<i64: 400, 400>}, {pipeline_mode = #tpu.pipeline_mode<synchronous>, transform_indices = @transform_8, window_bounds = array<i64: 1, 400>}, {pipeline_mode = #tpu.pipeline_mode<synchronous>, transform_indices = @transform_9, window_bounds = array<i64: 400, 400>}, {pipeline_mode = #tpu.pipeline_mode<synchronous>, transform_indices = @transform_10, window_bounds = array<i64: 1, 400>}, {pipeline_mode = #tpu.pipeline_mode<synchronous>, transform_indices = @transform_11, window_bounds = array<i64: 400, 256>}, {pipeline_mode = #tpu.pipeline_mode<synchronous>, transform_indices = @transform_12, window_bounds = array<i64: 400, 256>}, {pipeline_mode = #tpu.pipeline_mode<synchronous>, transform_indices = @transform_13, window_bounds = array<i64: 1, 256>}, {pipeline_mode = #tpu.pipeline_mode<synchronous>, transform_indices = @transform_14, window_bounds = array<i64: 256, 128>}, {pipeline_mode = #tpu.pipeline_mode<synchronous>, transform_indices = @transform_15, window_bounds = array<i64: 1, 128>}, {pipeline_mode = #tpu.pipeline_mode<synchronous>, transform_indices = @transform_16, window_bounds = array<i64: 128, 7>}, {pipeline_mode = #tpu.pipeline_mode<synchronous>, transform_indices = @transform_17, window_bounds = array<i64: 1, 7>}, {transform_indices = @transform_18, window_bounds = array<i64: 8, 7>}]} {
    %c0 = arith.constant 0 : index
    %c0_0 = arith.constant 0 : index
    %0 = vector.load %arg1[%c0, %c0_0] : memref<8x20xf32, #tpu.memory_space<vmem>>, vector<8x20xf32>
    %1 = arith.truncf %0 : vector<8x20xf32> to vector<8x20xbf16>
    %c0_1 = arith.constant 0 : index
    %c0_2 = arith.constant 0 : index
    %2 = vector.load %arg2[%c0_1, %c0_2] : memref<20x400xbf16, #tpu.memory_space<vmem>>, vector<20x400xbf16>
    %cst = arith.constant dense<0.000000e+00> : vector<8x400xf32>
    %3 = tpu.matmul %1, %2, %cst {dimension_numbers = #tpu.dot_dimension_numbers<[1], [0], [0], [1], [0, 0, 1, 1], [], []>} : vector<8x20xbf16>, vector<20x400xbf16>, vector<8x400xf32> -> vector<8x400xf32>
    %c0_3 = arith.constant 0 : index
    %c0_4 = arith.constant 0 : index
    %4 = vector.load %arg3[%c0_3, %c0_4] : memref<1x400xf32, #tpu.memory_space<vmem>>, vector<1x400xf32>
    %5 = vector.broadcast %4 : vector<1x400xf32> to vector<8x400xf32>
    %6 = arith.addf %3, %5 : vector<8x400xf32>
    %cst_5 = arith.constant 0.000000e+00 : f32
    %7 = vector.broadcast %cst_5 : f32 to vector<8x400xf32>
    %8 = arith.maximumf %6, %7 : vector<8x400xf32>
    %9 = arith.truncf %8 : vector<8x400xf32> to vector<8x400xbf16>
    %c0_6 = arith.constant 0 : index
    %c0_7 = arith.constant 0 : index
    %10 = vector.load %arg4[%c0_6, %c0_7] : memref<20x400xbf16, #tpu.memory_space<vmem>>, vector<20x400xbf16>
    %cst_8 = arith.constant dense<0.000000e+00> : vector<8x400xf32>
    %11 = tpu.matmul %1, %10, %cst_8 {dimension_numbers = #tpu.dot_dimension_numbers<[1], [0], [0], [1], [0, 0, 1, 1], [], []>} : vector<8x20xbf16>, vector<20x400xbf16>, vector<8x400xf32> -> vector<8x400xf32>
    %c0_9 = arith.constant 0 : index
    %c0_10 = arith.constant 0 : index
    %12 = vector.load %arg5[%c0_9, %c0_10] : memref<1x400xf32, #tpu.memory_space<vmem>>, vector<1x400xf32>
    %13 = vector.broadcast %12 : vector<1x400xf32> to vector<8x400xf32>
    %14 = arith.addf %11, %13 : vector<8x400xf32>
    %cst_11 = arith.constant 0.000000e+00 : f32
    %15 = vector.broadcast %cst_11 : f32 to vector<8x400xf32>
    %16 = arith.maximumf %14, %15 : vector<8x400xf32>
    %17 = arith.truncf %16 : vector<8x400xf32> to vector<8x400xbf16>
    %c0_12 = arith.constant 0 : index
    %c0_13 = arith.constant 0 : index
    %18 = vector.load %arg6[%c0_12, %c0_13] : memref<400x400xbf16, #tpu.memory_space<vmem>>, vector<400x400xbf16>
    %cst_14 = arith.constant dense<0.000000e+00> : vector<8x400xf32>
    %19 = tpu.matmul %17, %18, %cst_14 {dimension_numbers = #tpu.dot_dimension_numbers<[1], [0], [0], [1], [0, 0, 1, 1], [], []>} : vector<8x400xbf16>, vector<400x400xbf16>, vector<8x400xf32> -> vector<8x400xf32>
    %c0_15 = arith.constant 0 : index
    %c0_16 = arith.constant 0 : index
    %20 = vector.load %arg7[%c0_15, %c0_16] : memref<1x400xf32, #tpu.memory_space<vmem>>, vector<1x400xf32>
    %21 = vector.broadcast %20 : vector<1x400xf32> to vector<8x400xf32>
    %22 = arith.addf %19, %21 : vector<8x400xf32>
    %c0_17 = arith.constant 0 : index
    %c0_18 = arith.constant 0 : index
    %23 = vector.load %arg8[%c0_17, %c0_18] : memref<400x400xbf16, #tpu.memory_space<vmem>>, vector<400x400xbf16>
    %cst_19 = arith.constant dense<0.000000e+00> : vector<8x400xf32>
    %24 = tpu.matmul %17, %23, %cst_19 {dimension_numbers = #tpu.dot_dimension_numbers<[1], [0], [0], [1], [0, 0, 1, 1], [], []>} : vector<8x400xbf16>, vector<400x400xbf16>, vector<8x400xf32> -> vector<8x400xf32>
    %c0_20 = arith.constant 0 : index
    %c0_21 = arith.constant 0 : index
    %25 = vector.load %arg9[%c0_20, %c0_21] : memref<1x400xf32, #tpu.memory_space<vmem>>, vector<1x400xf32>
    %26 = vector.broadcast %25 : vector<1x400xf32> to vector<8x400xf32>
    %27 = arith.addf %24, %26 : vector<8x400xf32>
    %c0_22 = arith.constant 0 : index
    %c0_23 = arith.constant 0 : index
    %28 = vector.load %arg10[%c0_22, %c0_23] : memref<400x400xbf16, #tpu.memory_space<vmem>>, vector<400x400xbf16>
    %cst_24 = arith.constant dense<0.000000e+00> : vector<8x400xf32>
    %29 = tpu.matmul %17, %28, %cst_24 {dimension_numbers = #tpu.dot_dimension_numbers<[1], [0], [0], [1], [0, 0, 1, 1], [], []>} : vector<8x400xbf16>, vector<400x400xbf16>, vector<8x400xf32> -> vector<8x400xf32>
    %c0_25 = arith.constant 0 : index
    %c0_26 = arith.constant 0 : index
    %30 = vector.load %arg11[%c0_25, %c0_26] : memref<1x400xf32, #tpu.memory_space<vmem>>, vector<1x400xf32>
    %31 = vector.broadcast %30 : vector<1x400xf32> to vector<8x400xf32>
    %32 = arith.addf %29, %31 : vector<8x400xf32>
    %cst_27 = arith.constant 5.000000e-01 : f32
    %33 = vector.broadcast %cst_27 : f32 to vector<8x400xf32>
    %34 = arith.mulf %33, %22 : vector<8x400xf32>
    %35 = math.tanh %34 : vector<8x400xf32>
    %cst_28 = arith.constant 1.000000e+00 : f32
    %36 = vector.broadcast %cst_28 : f32 to vector<8x400xf32>
    %37 = arith.addf %35, %36 : vector<8x400xf32>
    %cst_29 = arith.constant 5.000000e-01 : f32
    %38 = vector.broadcast %cst_29 : f32 to vector<8x400xf32>
    %39 = arith.mulf %38, %37 : vector<8x400xf32>
    %40 = math.tanh %27 : vector<8x400xf32>
    %cst_30 = arith.constant 5.000000e-01 : f32
    %41 = vector.broadcast %cst_30 : f32 to vector<8x400xf32>
    %42 = arith.mulf %41, %32 : vector<8x400xf32>
    %43 = math.tanh %42 : vector<8x400xf32>
    %cst_31 = arith.constant 1.000000e+00 : f32
    %44 = vector.broadcast %cst_31 : f32 to vector<8x400xf32>
    %45 = arith.addf %43, %44 : vector<8x400xf32>
    %cst_32 = arith.constant 5.000000e-01 : f32
    %46 = vector.broadcast %cst_32 : f32 to vector<8x400xf32>
    %47 = arith.mulf %46, %45 : vector<8x400xf32>
    %48 = arith.mulf %39, %40 : vector<8x400xf32>
    %49 = math.tanh %48 : vector<8x400xf32>
    %50 = arith.mulf %47, %49 : vector<8x400xf32>
    %cst_33 = arith.constant 0.000000e+00 : f32
    %51 = vector.broadcast %cst_33 : f32 to vector<8x400xf32>
    %52 = arith.maximumf %50, %51 : vector<8x400xf32>
    %53 = arith.truncf %52 : vector<8x400xf32> to vector<8x400xbf16>
    %c0_34 = arith.constant 0 : index
    %c0_35 = arith.constant 0 : index
    %54 = vector.load %arg12[%c0_34, %c0_35] : memref<400x256xbf16, #tpu.memory_space<vmem>>, vector<400x256xbf16>
    %cst_36 = arith.constant dense<0.000000e+00> : vector<8x256xf32>
    %55 = tpu.matmul %9, %54, %cst_36 {dimension_numbers = #tpu.dot_dimension_numbers<[1], [0], [0], [1], [0, 0, 1, 1], [], []>} : vector<8x400xbf16>, vector<400x256xbf16>, vector<8x256xf32> -> vector<8x256xf32>
    %c0_37 = arith.constant 0 : index
    %c0_38 = arith.constant 0 : index
    %56 = vector.load %arg13[%c0_37, %c0_38] : memref<400x256xbf16, #tpu.memory_space<vmem>>, vector<400x256xbf16>
    %cst_39 = arith.constant dense<0.000000e+00> : vector<8x256xf32>
    %57 = tpu.matmul %53, %56, %cst_39 {dimension_numbers = #tpu.dot_dimension_numbers<[1], [0], [0], [1], [0, 0, 1, 1], [], []>} : vector<8x400xbf16>, vector<400x256xbf16>, vector<8x256xf32> -> vector<8x256xf32>
    %58 = arith.addf %55, %57 : vector<8x256xf32>
    %c0_40 = arith.constant 0 : index
    %c0_41 = arith.constant 0 : index
    %59 = vector.load %arg14[%c0_40, %c0_41] : memref<1x256xf32, #tpu.memory_space<vmem>>, vector<1x256xf32>
    %60 = vector.broadcast %59 : vector<1x256xf32> to vector<8x256xf32>
    %61 = arith.addf %58, %60 : vector<8x256xf32>
    %cst_42 = arith.constant 0.000000e+00 : f32
    %62 = vector.broadcast %cst_42 : f32 to vector<8x256xf32>
    %63 = arith.maximumf %61, %62 : vector<8x256xf32>
    %64 = arith.truncf %63 : vector<8x256xf32> to vector<8x256xbf16>
    %c0_43 = arith.constant 0 : index
    %c0_44 = arith.constant 0 : index
    %65 = vector.load %arg15[%c0_43, %c0_44] : memref<256x128xbf16, #tpu.memory_space<vmem>>, vector<256x128xbf16>
    %cst_45 = arith.constant dense<0.000000e+00> : vector<8x128xf32>
    %66 = tpu.matmul %64, %65, %cst_45 {dimension_numbers = #tpu.dot_dimension_numbers<[1], [0], [0], [1], [0, 0, 1, 1], [], []>} : vector<8x256xbf16>, vector<256x128xbf16>, vector<8x128xf32> -> vector<8x128xf32>
    %c0_46 = arith.constant 0 : index
    %c0_47 = arith.constant 0 : index
    %67 = vector.load %arg16[%c0_46, %c0_47] : memref<1x128xf32, #tpu.memory_space<vmem>>, vector<1x128xf32>
    %68 = vector.broadcast %67 : vector<1x128xf32> to vector<8x128xf32>
    %69 = arith.addf %66, %68 : vector<8x128xf32>
    %cst_48 = arith.constant 0.000000e+00 : f32
    %70 = vector.broadcast %cst_48 : f32 to vector<8x128xf32>
    %71 = arith.maximumf %69, %70 : vector<8x128xf32>
    %72 = arith.truncf %71 : vector<8x128xf32> to vector<8x128xbf16>
    %c0_49 = arith.constant 0 : index
    %c0_50 = arith.constant 0 : index
    %73 = vector.load %arg17[%c0_49, %c0_50] : memref<128x7xbf16, #tpu.memory_space<vmem>>, vector<128x7xbf16>
    %cst_51 = arith.constant dense<0.000000e+00> : vector<8x7xf32>
    %74 = tpu.matmul %72, %73, %cst_51 {dimension_numbers = #tpu.dot_dimension_numbers<[1], [0], [0], [1], [0, 0, 1, 1], [], []>} : vector<8x128xbf16>, vector<128x7xbf16>, vector<8x7xf32> -> vector<8x7xf32>
    %c0_52 = arith.constant 0 : index
    %c0_53 = arith.constant 0 : index
    %75 = vector.load %arg18[%c0_52, %c0_53] : memref<1x7xf32, #tpu.memory_space<vmem>>, vector<1x7xf32>
    %76 = vector.broadcast %75 : vector<1x7xf32> to vector<8x7xf32>
    %77 = arith.addf %74, %76 : vector<8x7xf32>
    %78 = math.tanh %77 : vector<8x7xf32>
    %c0_54 = arith.constant 0 : index
    %c0_55 = arith.constant 0 : index
    %79 = vector.load %arg19[%c0_54, %c0_55] : memref<8x7xf32, #tpu.memory_space<vmem>>, vector<8x7xf32>
    tpu.vector_store %arg19[%c0_54, %c0_55], %78 {strides = array<i32>} : memref<8x7xf32, #tpu.memory_space<vmem>>, vector<8x7xf32>,
    return
  }
  func.func @transform_0(%arg0: i32) -> (i32, i32) {
    %c0_i32 = arith.constant 0 : i32
    %c0_i32_0 = arith.constant 0 : i32
    return %arg0, %c0_i32 : i32, i32
  }
  func.func @transform_1(%arg0: i32) -> (i32, i32) {
    %c0_i32 = arith.constant 0 : i32
    %c0_i32_0 = arith.constant 0 : i32
    %c0_i32_1 = arith.constant 0 : i32
    return %c0_i32, %c0_i32_0 : i32, i32
  }
  func.func @transform_2(%arg0: i32) -> (i32, i32) {
    %c0_i32 = arith.constant 0 : i32
    %c0_i32_0 = arith.constant 0 : i32
    %c0_i32_1 = arith.constant 0 : i32
    return %c0_i32, %c0_i32_0 : i32, i32
  }
  func.func @transform_3(%arg0: i32) -> (i32, i32) {
    %c0_i32 = arith.constant 0 : i32
    %c0_i32_0 = arith.constant 0 : i32
    %c0_i32_1 = arith.constant 0 : i32
    return %c0_i32, %c0_i32_0 : i32, i32
  }
  func.func @transform_4(%arg0: i32) -> (i32, i32) {
    %c0_i32 = arith.constant 0 : i32
    %c0_i32_0 = arith.constant 0 : i32
    %c0_i32_1 = arith.constant 0 : i32
    return %c0_i32, %c0_i32_0 : i32, i32
  }
  func.func @transform_5(%arg0: i32) -> (i32, i32) {
    %c0_i32 = arith.constant 0 : i32
    %c0_i32_0 = arith.constant 0 : i32
    %c0_i32_1 = arith.constant 0 : i32
    return %c0_i32, %c0_i32_0 : i32, i32
  }
  func.func @transform_6(%arg0: i32) -> (i32, i32) {
    %c0_i32 = arith.constant 0 : i32
    %c0_i32_0 = arith.constant 0 : i32
    %c0_i32_1 = arith.constant 0 : i32
    return %c0_i32, %c0_i32_0 : i32, i32
  }
  func.func @transform_7(%arg0: i32) -> (i32, i32) {
    %c0_i32 = arith.constant 0 : i32
    %c0_i32_0 = arith.constant 0 : i32
    %c0_i32_1 = arith.constant 0 : i32
    return %c0_i32, %c0_i32_0 : i32, i32
  }
  func.func @transform_8(%arg0: i32) -> (i32, i32) {
    %c0_i32 = arith.constant 0 : i32
    %c0_i32_0 = arith.constant 0 : i32
    %c0_i32_1 = arith.constant 0 : i32
    return %c0_i32, %c0_i32_0 : i32, i32
  }
  func.func @transform_9(%arg0: i32) -> (i32, i32) {
    %c0_i32 = arith.constant 0 : i32
    %c0_i32_0 = arith.constant 0 : i32
    %c0_i32_1 = arith.constant 0 : i32
    return %c0_i32, %c0_i32_0 : i32, i32
  }
  func.func @transform_10(%arg0: i32) -> (i32, i32) {
    %c0_i32 = arith.constant 0 : i32
    %c0_i32_0 = arith.constant 0 : i32
    %c0_i32_1 = arith.constant 0 : i32
    return %c0_i32, %c0_i32_0 : i32, i32
  }
  func.func @transform_11(%arg0: i32) -> (i32, i32) {
    %c0_i32 = arith.constant 0 : i32
    %c0_i32_0 = arith.constant 0 : i32
    %c0_i32_1 = arith.constant 0 : i32
    return %c0_i32, %c0_i32_0 : i32, i32
  }
  func.func @transform_12(%arg0: i32) -> (i32, i32) {
    %c0_i32 = arith.constant 0 : i32
    %c0_i32_0 = arith.constant 0 : i32
    %c0_i32_1 = arith.constant 0 : i32
    return %c0_i32, %c0_i32_0 : i32, i32
  }
  func.func @transform_13(%arg0: i32) -> (i32, i32) {
    %c0_i32 = arith.constant 0 : i32
    %c0_i32_0 = arith.constant 0 : i32
    %c0_i32_1 = arith.constant 0 : i32
    return %c0_i32, %c0_i32_0 : i32, i32
  }
  func.func @transform_14(%arg0: i32) -> (i32, i32) {
    %c0_i32 = arith.constant 0 : i32
    %c0_i32_0 = arith.constant 0 : i32
    %c0_i32_1 = arith.constant 0 : i32
    return %c0_i32, %c0_i32_0 : i32, i32
  }
  func.func @transform_15(%arg0: i32) -> (i32, i32) {
    %c0_i32 = arith.constant 0 : i32
    %c0_i32_0 = arith.constant 0 : i32
    %c0_i32_1 = arith.constant 0 : i32
    return %c0_i32, %c0_i32_0 : i32, i32
  }
  func.func @transform_16(%arg0: i32) -> (i32, i32) {
    %c0_i32 = arith.constant 0 : i32
    %c0_i32_0 = arith.constant 0 : i32
    %c0_i32_1 = arith.constant 0 : i32
    return %c0_i32, %c0_i32_0 : i32, i32
  }
  func.func @transform_17(%arg0: i32) -> (i32, i32) {
    %c0_i32 = arith.constant 0 : i32
    %c0_i32_0 = arith.constant 0 : i32
    %c0_i32_1 = arith.constant 0 : i32
    return %c0_i32, %c0_i32_0 : i32, i32
  }
  func.func @transform_18(%arg0: i32) -> (i32, i32) {
    %c0_i32 = arith.constant 0 : i32
    %c0_i32_0 = arith.constant 0 : i32
    return %arg0, %c0_i32 : i32, i32
  }
}

</mosaic_0001>

<llo_original>
// kernel: rdpg_actor_forward.1
$region0: #{rdpg_actor_forward.1}
  #allocation0 [shape = 'u32[]', space=smem, size = 0x4, offset = 0x4, fixed_abs, tag = 'smem constant byte address 0x4 - core index']
  #allocation1 [shape = 'u32[144,128]{1,0:T(1,128)}', space=vmem, size = 0x12000, scoped, tag = 'internal scratch']
  %s0 = inlined_call_operand.vmem [shape: f32[8,20], index: 0, kind: input, shape index: {}]
  %s1 = inlined_call_operand.vmem [shape: bf16[20,400], index: 1, kind: input, shape index: {}]
  %s2 = inlined_call_operand.hbm [shape: f32[1,400], index: 2, kind: input, shape index: {}]
  %s3 = inlined_call_operand.vmem [shape: bf16[20,400], index: 3, kind: input, shape index: {}]
  %s4 = inlined_call_operand.hbm [shape: f32[1,400], index: 4, kind: input, shape index: {}]
  %s5 = inlined_call_operand.hbm [shape: bf16[400,400], index: 5, kind: input, shape index: {}]
  %s6 = inlined_call_operand.vmem [shape: f32[1,400], index: 6, kind: input, shape index: {}]
  %s7 = inlined_call_operand.hbm [shape: bf16[400,400], index: 7, kind: input, shape index: {}]
  %s8 = inlined_call_operand.hbm [shape: f32[1,400], index: 8, kind: input, shape index: {}]
  %s9 = inlined_call_operand.hbm [shape: bf16[400,400], index: 9, kind: input, shape index: {}]
  %s10 = inlined_call_operand.vmem [shape: f32[1,400], index: 10, kind: input, shape index: {}]
  %s11 = inlined_call_operand.hbm [shape: bf16[400,256], index: 11, kind: input, shape index: {}]
  %s12 = inlined_call_operand.hbm [shape: bf16[400,256], index: 12, kind: input, shape index: {}]
  %s13 = inlined_call_operand.hbm [shape: f32[1,256], index: 13, kind: input, shape index: {}]
  %s14 = inlined_call_operand.hbm [shape: bf16[256,128], index: 14, kind: input, shape index: {}]
  %s15 = inlined_call_operand.hbm [shape: f32[1,128], index: 15, kind: input, shape index: {}]
  %s16 = inlined_call_operand.vmem [shape: bf16[128,7], index: 16, kind: input, shape index: {}]
  %s17 = inlined_call_operand.hbm [shape: f32[1,7], index: 17, kind: input, shape index: {}]
  %s18 = inlined_call_operand.vmem [shape: f32[8,7], index: 18, kind: output, shape index: {}]
  %s19 = sld [smem:[#allocation0]]
  $region130: #{rdpg_actor_forward.1} parent=0
    _
  %s21 = ssub.s32 1, %s19
  %s22 = scalar_select 0, %s21, %s19
  $region1: #{rdpg_actor_forward.1} parent=0
    #allocation2 [shape = 'u8[2048]{0}', space=vmem, size = 0x800, scoped, tag = 'input window, operand 2, single buffered']
    #allocation3 [shape = 's32[1]{0}', space=sflag, size = 0x4, scoped, tag = 'scoped memory for rdpg_actor_forward.1']
    #allocation4 [shape = 'u8[2048]{0}', space=vmem, size = 0x800, scoped, tag = 'input window, operand 4, single buffered']
    #allocation5 [shape = 's32[1]{0}', space=sflag, size = 0x4, scoped, tag = 'scoped memory for rdpg_actor_forward.1']
    #allocation6 [shape = 'u8[409600]{0}', space=vmem, size = 0x64000, scoped, tag = 'input window, operand 5, single buffered']
    #allocation7 [shape = 'u8[409600]{0}', space=vmem, size = 0x64000, scoped, tag = 'input window, operand 7, single buffered']
    #allocation8 [shape = 's32[1]{0}', space=sflag, size = 0x4, scoped, tag = 'scoped memory for rdpg_actor_forward.1']
    #allocation9 [shape = 'u8[2048]{0}', space=vmem, size = 0x800, scoped, tag = 'input window, operand 8, single buffered']
    #allocation10 [shape = 'u8[409600]{0}', space=vmem, size = 0x64000, scoped, tag = 'input window, operand 9, single buffered']
    #allocation11 [shape = 's32[1]{0}', space=sflag, size = 0x4, scoped, tag = 'scoped memory for rdpg_actor_forward.1']
    #allocation12 [shape = 'u8[204800]{0}', space=vmem, size = 0x32000, scoped, tag = 'input window, operand 11, single buffered']
    #allocation13 [shape = 'u8[204800]{0}', space=vmem, size = 0x32000, scoped, tag = 'input window, operand 12, single buffered']
    #allocation14 [shape = 's32[1]{0}', space=sflag, size = 0x4, scoped, tag = 'scoped memory for rdpg_actor_forward.1']
    #allocation15 [shape = 'u8[1024]{0}', space=vmem, size = 0x400, scoped, tag = 'input window, operand 13, single buffered']
    #allocation16 [shape = 'u8[65536]{0}', space=vmem, size = 0x10000, scoped, tag = 'input window, operand 14, single buffered']
    #allocation17 [shape = 's32[1]{0}', space=sflag, size = 0x4, scoped, tag = 'scoped memory for rdpg_actor_forward.1']
    #allocation18 [shape = 'u8[512]{0}', space=vmem, size = 0x400, scoped, tag = 'input window, operand 15, single buffered']
    #allocation19 [shape = 'u8[512]{0}', space=vmem, size = 0x400, scoped, tag = 'input window, operand 17, single buffered']
    #allocation20 [shape = 's32[1]{0}', space=sflag, size = 0x4, scoped, tag = 'scoped memory for rdpg_actor_forward.1']
    %23 = vsyncpa [#allocation3], 0
    %24 = vsyncpa [#allocation5], 0
    %25 = vsyncpa [#allocation8], 0
    %26 = vsyncpa [#allocation11], 0
    %27 = vsyncpa [#allocation14], 0
    %28 = vsyncpa [#allocation17], 0
    %29 = vsyncpa [#allocation20], 0
    // Predicated region
    $region2: #{rdpg_actor_forward.1} parent=1 // pred_check
      _
    $region3: #{rdpg_actor_forward.1} parent=1 // pred_check_branch
      %31 = sbr.rel (0) target = $region5
    $region4: #{rdpg_actor_forward.1} parent=1 // pred_region
      _
    $region5: #{rdpg_actor_forward.1} parent=1 // pred_fallthru
      _
    // Predicated region
    $region6: #{rdpg_actor_forward.1} parent=1 // pred_check
      _
    $region7: #{rdpg_actor_forward.1} parent=1 // pred_check_branch
      %33 = sbr.rel (0) target = $region9
    $region8: #{rdpg_actor_forward.1} parent=1 // pred_region
      _
    $region9: #{rdpg_actor_forward.1} parent=1 // pred_fallthru
      _
    // Predicated region
    $region10: #{rdpg_actor_forward.1} parent=1 // pred_check
      _
    $region11: #{rdpg_actor_forward.1} parent=1 // pred_check_branch
      %35 = sbr.rel (0) target = $region13
    $region12: #{rdpg_actor_forward.1} parent=1 // pred_region
      %s37 = ssub.s32 64, 64
      %38 = vsyncadd [#allocation3], %s37
      %s40 = sshll.u32 [#allocation2], 4
      %s41 = int_to_ptr.vmem [resolvable:$true] %s40
      %43 = dma.hbm_to_vmem [thread:$0]  %s2, 64, %s41, [#allocation3]
    $region13: #{rdpg_actor_forward.1} parent=1 // pred_fallthru
      _
    // Predicated region
    $region14: #{rdpg_actor_forward.1} parent=1 // pred_check
      _
    $region15: #{rdpg_actor_forward.1} parent=1 // pred_check_branch
      %45 = sbr.rel (0) target = $region17
    $region16: #{rdpg_actor_forward.1} parent=1 // pred_region
      _
    $region17: #{rdpg_actor_forward.1} parent=1 // pred_fallthru
      _
    // Predicated region
    $region18: #{rdpg_actor_forward.1} parent=1 // pred_check
      _
    $region19: #{rdpg_actor_forward.1} parent=1 // pred_check_branch
      %47 = sbr.rel (0) target = $region21
    $region20: #{rdpg_actor_forward.1} parent=1 // pred_region
      %s49 = ssub.s32 64, 64
      %50 = vsyncadd [#allocation5], %s49
      %s52 = sshll.u32 [#allocation4], 4
      %s53 = int_to_ptr.vmem [resolvable:$true] %s52
      %55 = dma.hbm_to_vmem [thread:$0]  %s4, 64, %s53, [#allocation5]
    $region21: #{rdpg_actor_forward.1} parent=1 // pred_fallthru
      _
    // Predicated region
    $region22: #{rdpg_actor_forward.1} parent=1 // pred_check
      _
    $region23: #{rdpg_actor_forward.1} parent=1 // pred_check_branch
      %57 = sbr.rel (0) target = $region25
    $region24: #{rdpg_actor_forward.1} parent=1 // pred_region
      %s59 = ssub.s32 12800, 12800
      %60 = vsyncadd [#allocation5], %s59
      %s61 = sshll.u32 [#allocation6], 4
      %s62 = int_to_ptr.vmem [resolvable:$true] %s61
      %67 = dma.hbm_to_vmem [thread:$0]  %s5, 12800, %s62, [#allocation5], 256, 256, 16
    $region25: #{rdpg_actor_forward.1} parent=1 // pred_fallthru
      _
    // Predicated region
    $region26: #{rdpg_actor_forward.1} parent=1 // pred_check
      _
    $region27: #{rdpg_actor_forward.1} parent=1 // pred_check_branch
      %69 = sbr.rel (0) target = $region29
    $region28: #{rdpg_actor_forward.1} parent=1 // pred_region
      _
    $region29: #{rdpg_actor_forward.1} parent=1 // pred_fallthru
      _
    // Predicated region
    $region30: #{rdpg_actor_forward.1} parent=1 // pred_check
      _
    $region31: #{rdpg_actor_forward.1} parent=1 // pred_check_branch
      %71 = sbr.rel (0) target = $region33
    $region32: #{rdpg_actor_forward.1} parent=1 // pred_region
      %s73 = ssub.s32 12800, 12800
      %74 = vsyncadd [#allocation8], %s73
      %s75 = sshll.u32 [#allocation7], 4
      %s76 = int_to_ptr.vmem [resolvable:$true] %s75
      %81 = dma.hbm_to_vmem [thread:$0]  %s7, 12800, %s76, [#allocation8], 256, 256, 16
    $region33: #{rdpg_actor_forward.1} parent=1 // pred_fallthru
      _
    // Predicated region
    $region34: #{rdpg_actor_forward.1} parent=1 // pred_check
      _
    $region35: #{rdpg_actor_forward.1} parent=1 // pred_check_branch
      %83 = sbr.rel (0) target = $region37
    $region36: #{rdpg_actor_forward.1} parent=1 // pred_region
      %s85 = ssub.s32 64, 64
      %86 = vsyncadd [#allocation8], %s85
      %s88 = sshll.u32 [#allocation9], 4
      %s89 = int_to_ptr.vmem [resolvable:$true] %s88
      %91 = dma.hbm_to_vmem [thread:$0]  %s8, 64, %s89, [#allocation8]
    $region37: #{rdpg_actor_forward.1} parent=1 // pred_fallthru
      _
    // Predicated region
    $region38: #{rdpg_actor_forward.1} parent=1 // pred_check
      _
    $region39: #{rdpg_actor_forward.1} parent=1 // pred_check_branch
      %93 = sbr.rel (0) target = $region41
    $region40: #{rdpg_actor_forward.1} parent=1 // pred_region
      %s95 = ssub.s32 12800, 12800
      %96 = vsyncadd [#allocation11], %s95
      %s97 = sshll.u32 [#allocation10], 4
      %s98 = int_to_ptr.vmem [resolvable:$true] %s97
      %103 = dma.hbm_to_vmem [thread:$0]  %s9, 12800, %s98, [#allocation11], 256, 256, 16
    $region41: #{rdpg_actor_forward.1} parent=1 // pred_fallthru
      _
    // Predicated region
    $region42: #{rdpg_actor_forward.1} parent=1 // pred_check
      _
    $region43: #{rdpg_actor_forward.1} parent=1 // pred_check_branch
      %105 = sbr.rel (0) target = $region45
    $region44: #{rdpg_actor_forward.1} parent=1 // pred_region
      _
    $region45: #{rdpg_actor_forward.1} parent=1 // pred_fallthru
      _
    // Predicated region
    $region46: #{rdpg_actor_forward.1} parent=1 // pred_check
      _
    $region47: #{rdpg_actor_forward.1} parent=1 // pred_check_branch
      %107 = sbr.rel (0) target = $region49
    $region48: #{rdpg_actor_forward.1} parent=1 // pred_region
      %s109 = ssub.s32 6400, 6400
      %110 = vsyncadd [#allocation11], %s109
      %s111 = sshll.u32 [#allocation12], 4
      %s112 = int_to_ptr.vmem [resolvable:$true] %s111
      %117 = dma.hbm_to_vmem [thread:$0]  %s11, 6400, %s112, [#allocation11], 128, 128, 8
    $region49: #{rdpg_actor_forward.1} parent=1 // pred_fallthru
      _
    // Predicated region
    $region50: #{rdpg_actor_forward.1} parent=1 // pred_check
      _
    $region51: #{rdpg_actor_forward.1} parent=1 // pred_check_branch
      %119 = sbr.rel (0) target = $region53
    $region52: #{rdpg_actor_forward.1} parent=1 // pred_region
      %s121 = ssub.s32 6400, 6400
      %122 = vsyncadd [#allocation14], %s121
      %s123 = sshll.u32 [#allocation13], 4
      %s124 = int_to_ptr.vmem [resolvable:$true] %s123
      %129 = dma.hbm_to_vmem [thread:$0]  %s12, 6400, %s124, [#allocation14], 128, 128, 8
    $region53: #{rdpg_actor_forward.1} parent=1 // pred_fallthru
      _
    // Predicated region
    $region54: #{rdpg_actor_forward.1} parent=1 // pred_check
      _
    $region55: #{rdpg_actor_forward.1} parent=1 // pred_check_branch
      %131 = sbr.rel (0) target = $region57
    $region56: #{rdpg_actor_forward.1} parent=1 // pred_region
      %s133 = ssub.s32 32, 32
      %134 = vsyncadd [#allocation14], %s133
      %s136 = sshll.u32 [#allocation15], 4
      %s137 = int_to_ptr.vmem [resolvable:$true] %s136
      %139 = dma.hbm_to_vmem [thread:$0]  %s13, 32, %s137, [#allocation14]
    $region57: #{rdpg_actor_forward.1} parent=1 // pred_fallthru
      _
    // Predicated region
    $region58: #{rdpg_actor_forward.1} parent=1 // pred_check
      _
    $region59: #{rdpg_actor_forward.1} parent=1 // pred_check_branch
      %141 = sbr.rel (0) target = $region61
    $region60: #{rdpg_actor_forward.1} parent=1 // pred_region
      %s143 = ssub.s32 2048, 2048
      %144 = vsyncadd [#allocation17], %s143
      %s145 = sshll.u32 [#allocation16], 4
      %s146 = int_to_ptr.vmem [resolvable:$true] %s145
      %151 = dma.hbm_to_vmem [thread:$0]  %s14, 2048, %s146, [#allocation17], 64, 64, 4
    $region61: #{rdpg_actor_forward.1} parent=1 // pred_fallthru
      _
    // Predicated region
    $region62: #{rdpg_actor_forward.1} parent=1 // pred_check
      _
    $region63: #{rdpg_actor_forward.1} parent=1 // pred_check_branch
      %153 = sbr.rel (0) target = $region65
    $region64: #{rdpg_actor_forward.1} parent=1 // pred_region
      %s155 = ssub.s32 16, 16
      %156 = vsyncadd [#allocation17], %s155
      %s158 = sshll.u32 [#allocation18], 4
      %s159 = int_to_ptr.vmem [resolvable:$true] %s158
      %161 = dma.hbm_to_vmem [thread:$0]  %s15, 16, %s159, [#allocation17]
    $region65: #{rdpg_actor_forward.1} parent=1 // pred_fallthru
      _
    // Predicated region
    $region66: #{rdpg_actor_forward.1} parent=1 // pred_check
      _
    $region67: #{rdpg_actor_forward.1} parent=1 // pred_check_branch
      %163 = sbr.rel (0) target = $region69
    $region68: #{rdpg_actor_forward.1} parent=1 // pred_region
      _
    $region69: #{rdpg_actor_forward.1} parent=1 // pred_fallthru
      _
    // Predicated region
    $region70: #{rdpg_actor_forward.1} parent=1 // pred_check
      _
    $region71: #{rdpg_actor_forward.1} parent=1 // pred_check_branch
      %165 = sbr.rel (0) target = $region73
    $region72: #{rdpg_actor_forward.1} parent=1 // pred_region
      %s167 = ssub.s32 16, 16
      %168 = vsyncadd [#allocation20], %s167
      %s170 = sshll.u32 [#allocation19], 4
      %s171 = int_to_ptr.vmem [resolvable:$true] %s170
      %173 = dma.hbm_to_vmem [thread:$0]  %s17, 16, %s171, [#allocation20]
    $region73: #{rdpg_actor_forward.1} parent=1 // pred_fallthru
      _
    // Predicated region
    $region74: #{rdpg_actor_forward.1} parent=1 // pred_check
      _
    $region75: #{rdpg_actor_forward.1} parent=1 // pred_check_branch
      %175 = sbr.rel (0) target = $region77
    $region76: #{rdpg_actor_forward.1} parent=1 // pred_region
      %176 = dma.done [#allocation3], 64
    $region77: #{rdpg_actor_forward.1} parent=1 // pred_fallthru
      _
    // Predicated region
    $region78: #{rdpg_actor_forward.1} parent=1 // pred_check
      _
    $region79: #{rdpg_actor_forward.1} parent=1 // pred_check_branch
      %178 = sbr.rel (0) target = $region81
    $region80: #{rdpg_actor_forward.1} parent=1 // pred_region
      %179 = dma.done [#allocation5], 64
    $region81: #{rdpg_actor_forward.1} parent=1 // pred_fallthru
      _
    // Predicated region
    $region82: #{rdpg_actor_forward.1} parent=1 // pred_check
      _
    $region83: #{rdpg_actor_forward.1} parent=1 // pred_check_branch
      %181 = sbr.rel (0) target = $region85
    $region84: #{rdpg_actor_forward.1} parent=1 // pred_region
      %182 = dma.done [#allocation5], 12800
    $region85: #{rdpg_actor_forward.1} parent=1 // pred_fallthru
      _
    // Predicated region
    $region86: #{rdpg_actor_forward.1} parent=1 // pred_check
      _
    $region87: #{rdpg_actor_forward.1} parent=1 // pred_check_branch
      %184 = sbr.rel (0) target = $region89
    $region88: #{rdpg_actor_forward.1} parent=1 // pred_region
      %185 = dma.done [#allocation8], 12800
    $region89: #{rdpg_actor_forward.1} parent=1 // pred_fallthru
      _
    // Predicated region
    $region90: #{rdpg_actor_forward.1} parent=1 // pred_check
      _
    $region91: #{rdpg_actor_forward.1} parent=1 // pred_check_branch
      %187 = sbr.rel (0) target = $region93
    $region92: #{rdpg_actor_forward.1} parent=1 // pred_region
      %188 = dma.done [#allocation8], 64
    $region93: #{rdpg_actor_forward.1} parent=1 // pred_fallthru
      _
    // Predicated region
    $region94: #{rdpg_actor_forward.1} parent=1 // pred_check
      _
    $region95: #{rdpg_actor_forward.1} parent=1 // pred_check_branch
      %190 = sbr.rel (0) target = $region97
    $region96: #{rdpg_actor_forward.1} parent=1 // pred_region
      %191 = dma.done [#allocation11], 12800
    $region97: #{rdpg_actor_forward.1} parent=1 // pred_fallthru
      _
    // Predicated region
    $region98: #{rdpg_actor_forward.1} parent=1 // pred_check
      _
    $region99: #{rdpg_actor_forward.1} parent=1 // pred_check_branch
      %193 = sbr.rel (0) target = $region101
    $region100: #{rdpg_actor_forward.1} parent=1 // pred_region
      %194 = dma.done [#allocation11], 6400
    $region101: #{rdpg_actor_forward.1} parent=1 // pred_fallthru
      _
    // Predicated region
    $region102: #{rdpg_actor_forward.1} parent=1 // pred_check
      _
    $region103: #{rdpg_actor_forward.1} parent=1 // pred_check_branch
      %196 = sbr.rel (0) target = $region105
    $region104: #{rdpg_actor_forward.1} parent=1 // pred_region
      %197 = dma.done [#allocation14], 6400
    $region105: #{rdpg_actor_forward.1} parent=1 // pred_fallthru
      _
    // Predicated region
    $region106: #{rdpg_actor_forward.1} parent=1 // pred_check
      _
    $region107: #{rdpg_actor_forward.1} parent=1 // pred_check_branch
      %199 = sbr.rel (0) target = $region109
    $region108: #{rdpg_actor_forward.1} parent=1 // pred_region
      %200 = dma.done [#allocation14], 32
    $region109: #{rdpg_actor_forward.1} parent=1 // pred_fallthru
      _
    // Predicated region
    $region110: #{rdpg_actor_forward.1} parent=1 // pred_check
      _
    $region111: #{rdpg_actor_forward.1} parent=1 // pred_check_branch
      %202 = sbr.rel (0) target = $region113
    $region112: #{rdpg_actor_forward.1} parent=1 // pred_region
      %203 = dma.done [#allocation17], 2048
    $region113: #{rdpg_actor_forward.1} parent=1 // pred_fallthru
      _
    // Predicated region
    $region114: #{rdpg_actor_forward.1} parent=1 // pred_check
      _
    $region115: #{rdpg_actor_forward.1} parent=1 // pred_check_branch
      %205 = sbr.rel (0) target = $region117
    $region116: #{rdpg_actor_forward.1} parent=1 // pred_region
      %206 = dma.done [#allocation17], 16
    $region117: #{rdpg_actor_forward.1} parent=1 // pred_fallthru
      _
    // Predicated region
    $region118: #{rdpg_actor_forward.1} parent=1 // pred_check
      _
    $region119: #{rdpg_actor_forward.1} parent=1 // pred_check_branch
      %208 = sbr.rel (0) target = $region121
    $region120: #{rdpg_actor_forward.1} parent=1 // pred_region
      %209 = dma.done [#allocation20], 16
    $region121: #{rdpg_actor_forward.1} parent=1 // pred_fallthru
      _
    %v211 = vld [vmem:[%s0] sm:$0xff]
    %v212 = vpack.c.bf16 %v211, %v211
    %v213 = vld [vmem:[%s1] sm:$0xff]
    %v214 = vld [vmem:[%s1 + $0x8] sm:$0xff]
    %v215 = vld [vmem:[%s1 + $0x10] sm:$0xff]
    %v216 = vld [vmem:[%s1 + $0x18] sm:$0xff]
    %v217 = vld [vmem:[%s1 + $0x20] sm:$0x33]
    %v218 = vld [vmem:[%s1 + $0x28] sm:$0x33]
    %v219 = vld [vmem:[#allocation2] sm:$0xf]
    %v221 = vlaneseq
    %v222 = vshrl.u32 %v221, 7
    %v223 = vsub.s32 0, %v222
    %v224 = vrot.slane %v219, %v223
    %v225 = vlaneseq
    %v226 = vshrl.u32 %v225, 7
    %v227 = vsub.s32 1, %v226
    %v228 = vrot.slane %v219, %v227
    %v229 = vlaneseq
    %v230 = vshrl.u32 %v229, 7
    %v231 = vsub.s32 2, %v230
    %v232 = vrot.slane %v219, %v231
    %v233 = vlaneseq
    %v234 = vshrl.u32 %v233, 7
    %v235 = vsub.s32 3, %v234
    %v236 = vrot.slane %v219, %v235
    %v247 = vunpack.c.l.b16 %v213
    %v248 = vunpack.c.h.b16 %v213
    %v249 = vunpack.c.l.b16 %v214
    %v250 = vunpack.c.h.b16 %v214
    %v251 = vunpack.c.l.b16 %v215
    %v252 = vunpack.c.h.b16 %v215
    %v253 = vunpack.c.l.b16 %v216
    %v254 = vunpack.c.h.b16 %v216
    %v255 = vunpack.c.l.b16 %v217
    %v256 = vunpack.c.h.b16 %v217
    %v257 = vunpack.c.l.b16 %v218
    %v258 = vunpack.c.h.b16 %v218
    %v259 = vpack.c.b16 %v251, %v247
    %v260 = vpack.c.b16 %v252, %v248
    %v261 = vpack.c.b16 %v253, %v249
    %v262 = vpack.c.b16 %v254, %v250
    %v263 = vpack.c.b16 %v255, %v255
    %v264 = vpack.c.b16 %v256, %v256
    %v265 = vpack.c.b16 %v257, %v257
    %v266 = vpack.c.b16 %v258, %v258
    %vm271 = vcmask 162816
    %v273 = vsel %vm271, %v212, 0
    %vm275 = vcmask 1041408
    %v277 = vsel %vm275, %v263, 0
    %v280 = vsel %vm275, %v264, 0
    %v283 = vsel %vm275, %v265, 0
    %v286 = vsel %vm275, %v266, 0
    %288 = vmatprep.subr.bf16.mxu0 %v260
    %289 = vmatpush1.bf16.msra.mxu0 %v259
    %290 = vmatprep.subr.bf16.mxu0 %v280
    %291 = vmatpush1.bf16.msra.mxu0 %v277
    %292 = vmatprep.subr.bf16.mxu0 0
    %293 = vmatpush1.bf16.msra.mxu0 0
    %294 = vmatprep.subr.bf16.mxu0 0
    %295 = vmatpush1.bf16.msra.mxu0 0
    %296 = vmatprep.subr.bf16.mxu0 0
    %297 = vmatpush1.bf16.msra.mxu0 0
    %298 = vmatprep.subr.bf16.mxu0 0
    %299 = vmatpush1.bf16.msra.mxu0 0
    %300 = vmatprep.subr.bf16.mxu0 0
    %301 = vmatpush1.bf16.msra.mxu0 0
    %302 = vmatprep.subr.bf16.mxu0 0
    %303 = vmatpush1.bf16.msra.mxu0 0
    %304 = vmatprep.subr.bf16.mxu0 0
    %305 = vmatpush1.bf16.msra.mxu0 0
    %306 = vmatprep.subr.bf16.mxu0 0
    %307 = vmatpush1.bf16.msra.mxu0 0
    %308 = vmatprep.subr.bf16.mxu0 0
    %309 = vmatpush1.bf16.msra.mxu0 0
    %310 = vmatprep.subr.bf16.mxu0 0
    %311 = vmatpush1.bf16.msra.mxu0 0
    %312 = vmatprep.subr.bf16.mxu0 0
    %313 = vmatpush1.bf16.msra.mxu0 0
    %314 = vmatprep.subr.bf16.mxu0 0
    %315 = vmatpush1.bf16.msra.mxu0 0
    %316 = vmatprep.subr.bf16.mxu0 0
    %317 = vmatpush1.bf16.msra.mxu0 0
    %318 = vmatprep.subr.bf16.mxu0 0
    %319 = vmatpush1.bf16.msra.mxu0 0
    %320 = vmatprep.mubr.bf16.mxu0 0
    %321 = vmatmul.mubr.bf16.gmra.mrb[0].mxu0 %v273
    %v322 = vpop.f32.mrb[0].mxu0
    %v323 = vadd.f32 %v224, %v322
    %v324 = vpop.f32.mrb[0].mxu0
    %v325 = vadd.f32 %v228, %v324
    %v326 = vpop.f32.mrb[0].mxu0
    %v327 = vpop.f32.mrb[0].mxu0
    %328 = vdwg.mxu0
    %329 = vmatprep.subr.bf16.mxu0 %v262
    %330 = vmatpush1.bf16.msra.mxu0 %v261
    %331 = vmatprep.subr.bf16.mxu0 %v286
    %332 = vmatpush1.bf16.msra.mxu0 %v283
    %333 = vmatprep.subr.bf16.mxu0 0
    %334 = vmatpush1.bf16.msra.mxu0 0
    %335 = vmatprep.subr.bf16.mxu0 0
    %336 = vmatpush1.bf16.msra.mxu0 0
    %337 = vmatprep.subr.bf16.mxu0 0
    %338 = vmatpush1.bf16.msra.mxu0 0
    %339 = vmatprep.subr.bf16.mxu0 0
    %340 = vmatpush1.bf16.msra.mxu0 0
    %341 = vmatprep.subr.bf16.mxu0 0
    %342 = vmatpush1.bf16.msra.mxu0 0
    %343 = vmatprep.subr.bf16.mxu0 0
    %344 = vmatpush1.bf16.msra.mxu0 0
    %345 = vmatprep.subr.bf16.mxu0 0
    %346 = vmatpush1.bf16.msra.mxu0 0
    %347 = vmatprep.subr.bf16.mxu0 0
    %348 = vmatpush1.bf16.msra.mxu0 0
    %349 = vmatprep.subr.bf16.mxu0 0
    %350 = vmatpush1.bf16.msra.mxu0 0
    %351 = vmatprep.subr.bf16.mxu0 0
    %352 = vmatpush1.bf16.msra.mxu0 0
    %353 = vmatprep.subr.bf16.mxu0 0
    %354 = vmatpush1.bf16.msra.mxu0 0
    %355 = vmatprep.subr.bf16.mxu0 0
    %356 = vmatpush1.bf16.msra.mxu0 0
    %357 = vmatprep.subr.bf16.mxu0 0
    %358 = vmatpush1.bf16.msra.mxu0 0
    %359 = vmatprep.subr.bf16.mxu0 0
    %360 = vmatpush1.bf16.msra.mxu0 0
    %361 = vmatprep.mubr.bf16.mxu0 0
    %362 = vmatmul.mubr.bf16.gmra.mrb[0].mxu0 %v273
    %v363 = vpop.f32.mrb[0].mxu0
    %v364 = vadd.f32 %v232, %v363
    %v365 = vpop.f32.mrb[0].mxu0
    %v366 = vadd.f32 %v236, %v365
    %v367 = vpop.f32.mrb[0].mxu0
    %v368 = vpop.f32.mrb[0].mxu0
    %369 = vdwg.mxu0
    %v370 = vmax.f32 %v323, 0.0
    %v371 = vmax.f32 %v325, 0.0
    %v372 = vmax.f32 %v364, 0.0
    %v373 = vmax.f32 %v366, 0.0
    %v374 = vpack.c.bf16 %v370, %v370
    %v375 = vpack.c.bf16 %v371, %v371
    %v376 = vpack.c.bf16 %v372, %v372
    %v377 = vpack.c.bf16 %v373, %v373
    %v378 = vld [vmem:[%s3] sm:$0xff]
    %v379 = vld [vmem:[%s3 + $0x8] sm:$0xff]
    %v380 = vld [vmem:[%s3 + $0x10] sm:$0xff]
    %v381 = vld [vmem:[%s3 + $0x18] sm:$0xff]
    %v382 = vld [vmem:[%s3 + $0x20] sm:$0x33]
    %v383 = vld [vmem:[%s3 + $0x28] sm:$0x33]
    %v384 = vld [vmem:[#allocation4] sm:$0xf]
    %v386 = vlaneseq
    %v387 = vshrl.u32 %v386, 7
    %v388 = vsub.s32 0, %v387
    %v389 = vrot.slane %v384, %v388
    %v390 = vlaneseq
    %v391 = vshrl.u32 %v390, 7
    %v392 = vsub.s32 1, %v391
    %v393 = vrot.slane %v384, %v392
    %v394 = vlaneseq
    %v395 = vshrl.u32 %v394, 7
    %v396 = vsub.s32 2, %v395
    %v397 = vrot.slane %v384, %v396
    %v398 = vlaneseq
    %v399 = vshrl.u32 %v398, 7
    %v400 = vsub.s32 3, %v399
    %v401 = vrot.slane %v384, %v400
    %v412 = vunpack.c.l.b16 %v378
    %v413 = vunpack.c.h.b16 %v378
    %v414 = vunpack.c.l.b16 %v379
    %v415 = vunpack.c.h.b16 %v379
    %v416 = vunpack.c.l.b16 %v380
    %v417 = vunpack.c.h.b16 %v380
    %v418 = vunpack.c.l.b16 %v381
    %v419 = vunpack.c.h.b16 %v381
    %v420 = vunpack.c.l.b16 %v382
    %v421 = vunpack.c.h.b16 %v382
    %v422 = vunpack.c.l.b16 %v383
    %v423 = vunpack.c.h.b16 %v383
    %v424 = vpack.c.b16 %v416, %v412
    %v425 = vpack.c.b16 %v417, %v413
    %v426 = vpack.c.b16 %v418, %v414
    %v427 = vpack.c.b16 %v419, %v415
    %v428 = vpack.c.b16 %v420, %v420
    %v429 = vpack.c.b16 %v421, %v421
    %v430 = vpack.c.b16 %v422, %v422
    %v431 = vpack.c.b16 %v423, %v423
    %v437 = vsel %vm275, %v428, 0
    %v440 = vsel %vm275, %v429, 0
    %v443 = vsel %vm275, %v430, 0
    %v446 = vsel %vm275, %v431, 0
    %448 = vmatprep.subr.bf16.mxu0 %v425
    %449 = vmatpush1.bf16.msra.mxu0 %v424
    %450 = vmatprep.subr.bf16.mxu0 %v440
    %451 = vmatpush1.bf16.msra.mxu0 %v437
    %452 = vmatprep.subr.bf16.mxu0 0
    %453 = vmatpush1.bf16.msra.mxu0 0
    %454 = vmatprep.subr.bf16.mxu0 0
    %455 = vmatpush1.bf16.msra.mxu0 0
    %456 = vmatprep.subr.bf16.mxu0 0
    %457 = vmatpush1.bf16.msra.mxu0 0
    %458 = vmatprep.subr.bf16.mxu0 0
    %459 = vmatpush1.bf16.msra.mxu0 0
    %460 = vmatprep.subr.bf16.mxu0 0
    %461 = vmatpush1.bf16.msra.mxu0 0
    %462 = vmatprep.subr.bf16.mxu0 0
    %463 = vmatpush1.bf16.msra.mxu0 0
    %464 = vmatprep.subr.bf16.mxu0 0
    %465 = vmatpush1.bf16.msra.mxu0 0
    %466 = vmatprep.subr.bf16.mxu0 0
    %467 = vmatpush1.bf16.msra.mxu0 0
    %468 = vmatprep.subr.bf16.mxu0 0
    %469 = vmatpush1.bf16.msra.mxu0 0
    %470 = vmatprep.subr.bf16.mxu0 0
    %471 = vmatpush1.bf16.msra.mxu0 0
    %472 = vmatprep.subr.bf16.mxu0 0
    %473 = vmatpush1.bf16.msra.mxu0 0
    %474 = vmatprep.subr.bf16.mxu0 0
    %475 = vmatpush1.bf16.msra.mxu0 0
    %476 = vmatprep.subr.bf16.mxu0 0
    %477 = vmatpush1.bf16.msra.mxu0 0
    %478 = vmatprep.subr.bf16.mxu0 0
    %479 = vmatpush1.bf16.msra.mxu0 0
    %480 = vmatprep.mubr.bf16.mxu0 0
    %481 = vmatmul.mubr.bf16.gmra.mrb[0].mxu0 %v273
    %v482 = vpop.f32.mrb[0].mxu0
    %v483 = vadd.f32 %v389, %v482
    %v484 = vpop.f32.mrb[0].mxu0
    %v485 = vadd.f32 %v393, %v484
    %v486 = vpop.f32.mrb[0].mxu0
    %v487 = vpop.f32.mrb[0].mxu0
    %488 = vdwg.mxu0
    %489 = vmatprep.subr.bf16.mxu0 %v427
    %490 = vmatpush1.bf16.msra.mxu0 %v426
    %491 = vmatprep.subr.bf16.mxu0 %v446
    %492 = vmatpush1.bf16.msra.mxu0 %v443
    %493 = vmatprep.subr.bf16.mxu0 0
    %494 = vmatpush1.bf16.msra.mxu0 0
    %495 = vmatprep.subr.bf16.mxu0 0
    %496 = vmatpush1.bf16.msra.mxu0 0
    %497 = vmatprep.subr.bf16.mxu0 0
    %498 = vmatpush1.bf16.msra.mxu0 0
    %499 = vmatprep.subr.bf16.mxu0 0
    %500 = vmatpush1.bf16.msra.mxu0 0
    %501 = vmatprep.subr.bf16.mxu0 0
    %502 = vmatpush1.bf16.msra.mxu0 0
    %503 = vmatprep.subr.bf16.mxu0 0
    %504 = vmatpush1.bf16.msra.mxu0 0
    %505 = vmatprep.subr.bf16.mxu0 0
    %506 = vmatpush1.bf16.msra.mxu0 0
    %507 = vmatprep.subr.bf16.mxu0 0
    %508 = vmatpush1.bf16.msra.mxu0 0
    %509 = vmatprep.subr.bf16.mxu0 0
    %510 = vmatpush1.bf16.msra.mxu0 0
    %511 = vmatprep.subr.bf16.mxu0 0
    %512 = vmatpush1.bf16.msra.mxu0 0
    %513 = vmatprep.subr.bf16.mxu0 0
    %514 = vmatpush1.bf16.msra.mxu0 0
    %515 = vmatprep.subr.bf16.mxu0 0
    %516 = vmatpush1.bf16.msra.mxu0 0
    %517 = vmatprep.subr.bf16.mxu0 0
    %518 = vmatpush1.bf16.msra.mxu0 0
    %519 = vmatprep.subr.bf16.mxu0 0
    %520 = vmatpush1.bf16.msra.mxu0 0
    %521 = vmatprep.mubr.bf16.mxu0 0
    %522 = vmatmul.mubr.bf16.gmra.mrb[0].mxu0 %v273
    %v523 = vpop.f32.mrb[0].mxu0
    %v524 = vadd.f32 %v397, %v523
    %v525 = vpop.f32.mrb[0].mxu0
    %v526 = vadd.f32 %v401, %v525
    %v527 = vpop.f32.mrb[0].mxu0
    %v528 = vpop.f32.mrb[0].mxu0
    %529 = vdwg.mxu0
    %v530 = vmax.f32 %v483, 0.0
    %v531 = vmax.f32 %v485, 0.0
    %v532 = vmax.f32 %v524, 0.0
    %v533 = vmax.f32 %v526, 0.0
    %v534 = vpack.c.bf16 %v530, %v530
    %v535 = vpack.c.bf16 %v531, %v531
    %v536 = vpack.c.bf16 %v532, %v532
    %v537 = vpack.c.bf16 %v533, %v533
    %v538 = vld [vmem:[#allocation6] sm:$0xff]
    %v539 = vld [vmem:[#allocation6 + $0x8] sm:$0xff]
    %v540 = vld [vmem:[#allocation6 + $0x10] sm:$0xff]
    %v541 = vld [vmem:[#allocation6 + $0x18] sm:$0xff]
    %v542 = vld [vmem:[#allocation6 + $0x20] sm:$0xff]
    %v543 = vld [vmem:[#allocation6 + $0x28] sm:$0xff]
    %v544 = vld [vmem:[#allocation6 + $0x30] sm:$0xff]
    %v545 = vld [vmem:[#allocation6 + $0x38] sm:$0xff]
    %v546 = vld [vmem:[#allocation6 + $0x40] sm:$0xff]
    %v547 = vld [vmem:[#allocation6 + $0x48] sm:$0xff]
    %v548 = vld [vmem:[#allocation6 + $0x50] sm:$0xff]
    %v549 = vld [vmem:[#allocation6 + $0x58] sm:$0xff]
    %v550 = vld [vmem:[#allocation6 + $0x60] sm:$0xff]
    %v551 = vld [vmem:[#allocation6 + $0x68] sm:$0xff]
    %v552 = vld [vmem:[#allocation6 + $0x70] sm:$0xff]
    %v553 = vld [vmem:[#allocation6 + $0x78] sm:$0xff]
    %v554 = vld [vmem:[#allocation6 + $0x80] sm:$0xff]
    %v555 = vld [vmem:[#allocation6 + $0x88] sm:$0xff]
    %v556 = vld [vmem:[#allocation6 + $0x90] sm:$0xff]
    %v557 = vld [vmem:[#allocation6 + $0x98] sm:$0xff]
    %v558 = vld [vmem:[#allocation6 + $0xa0] sm:$0xff]
    %v559 = vld [vmem:[#allocation6 + $0xa8] sm:$0xff]
    %v560 = vld [vmem:[#allocation6 + $0xb0] sm:$0xff]
    %v561 = vld [vmem:[#allocation6 + $0xb8] sm:$0xff]
    %v562 = vld [vmem:[#allocation6 + $0xc0] sm:$0xff]
    %v563 = vld [vmem:[#allocation6 + $0xc8] sm:$0xff]
    %v564 = vld [vmem:[#allocation6 + $0xd0] sm:$0xff]
    %v565 = vld [vmem:[#allocation6 + $0xd8] sm:$0xff]
    %v566 = vld [vmem:[#allocation6 + $0xe0] sm:$0xff]
    %v567 = vld [vmem:[#allocation6 + $0xe8] sm:$0xff]
    %v568 = vld [vmem:[#allocation6 + $0xf0] sm:$0xff]
    %v569 = vld [vmem:[#allocation6 + $0xf8] sm:$0xff]
    %v570 = vld [vmem:[#allocation6 + $0x100] sm:$0xff]
    %v571 = vld [vmem:[#allocation6 + $0x108] sm:$0xff]
    %v572 = vld [vmem:[#allocation6 + $0x110] sm:$0xff]
    %v573 = vld [vmem:[#allocation6 + $0x118] sm:$0xff]
    %v574 = vld [vmem:[#allocation6 + $0x120] sm:$0xff]
    %v575 = vld [vmem:[#allocation6 + $0x128] sm:$0xff]
    %v576 = vld [vmem:[#allocation6 + $0x130] sm:$0xff]
    %v577 = vld [vmem:[#allocation6 + $0x138] sm:$0xff]
    %v578 = vld [vmem:[#allocation6 + $0x140] sm:$0xff]
    %v579 = vld [vmem:[#allocation6 + $0x148] sm:$0xff]
    %v580 = vld [vmem:[#allocation6 + $0x150] sm:$0xff]
    %v581 = vld [vmem:[#allocation6 + $0x158] sm:$0xff]
    %v582 = vld [vmem:[#allocation6 + $0x160] sm:$0xff]
    %v583 = vld [vmem:[#allocation6 + $0x168] sm:$0xff]
    %v584 = vld [vmem:[#allocation6 + $0x170] sm:$0xff]
    %v585 = vld [vmem:[#allocation6 + $0x178] sm:$0xff]
    %v586 = vld [vmem:[#allocation6 + $0x180] sm:$0xff]
    %v587 = vld [vmem:[#allocation6 + $0x188] sm:$0xff]
    %v588 = vld [vmem:[#allocation6 + $0x190] sm:$0xff]
    %v589 = vld [vmem:[#allocation6 + $0x198] sm:$0xff]
    %v590 = vld [vmem:[#allocation6 + $0x1a0] sm:$0xff]
    %v591 = vld [vmem:[#allocation6 + $0x1a8] sm:$0xff]
    %v592 = vld [vmem:[#allocation6 + $0x1b0] sm:$0xff]
    %v593 = vld [vmem:[#allocation6 + $0x1b8] sm:$0xff]
    %v594 = vld [vmem:[#allocation6 + $0x1c0] sm:$0xff]
    %v595 = vld [vmem:[#allocation6 + $0x1c8] sm:$0xff]
    %v596 = vld [vmem:[#allocation6 + $0x1d0] sm:$0xff]
    %v597 = vld [vmem:[#allocation6 + $0x1d8] sm:$0xff]
    %v598 = vld [vmem:[#allocation6 + $0x1e0] sm:$0xff]
    %v599 = vld [vmem:[#allocation6 + $0x1e8] sm:$0xff]
    %v600 = vld [vmem:[#allocation6 + $0x1f0] sm:$0xff]
    %v601 = vld [vmem:[#allocation6 + $0x1f8] sm:$0xff]
    %v602 = vld [vmem:[#allocation6 + $0x200] sm:$0xff]
    %v603 = vld [vmem:[#allocation6 + $0x208] sm:$0xff]
    %v604 = vld [vmem:[#allocation6 + $0x210] sm:$0xff]
    %v605 = vld [vmem:[#allocation6 + $0x218] sm:$0xff]
    %v606 = vld [vmem:[#allocation6 + $0x220] sm:$0xff]
    %v607 = vld [vmem:[#allocation6 + $0x228] sm:$0xff]
    %v608 = vld [vmem:[#allocation6 + $0x230] sm:$0xff]
    %v609 = vld [vmem:[#allocation6 + $0x238] sm:$0xff]
    %v610 = vld [vmem:[#allocation6 + $0x240] sm:$0xff]
    %v611 = vld [vmem:[#allocation6 + $0x248] sm:$0xff]
    %v612 = vld [vmem:[#allocation6 + $0x250] sm:$0xff]
    %v613 = vld [vmem:[#allocation6 + $0x258] sm:$0xff]
    %v614 = vld [vmem:[#allocation6 + $0x260] sm:$0xff]
    %v615 = vld [vmem:[#allocation6 + $0x268] sm:$0xff]
    %v616 = vld [vmem:[#allocation6 + $0x270] sm:$0xff]
    %v617 = vld [vmem:[#allocation6 + $0x278] sm:$0xff]
    %v618 = vld [vmem:[#allocation6 + $0x280] sm:$0xff]
    %v619 = vld [vmem:[#allocation6 + $0x288] sm:$0xff]
    %v620 = vld [vmem:[#allocation6 + $0x290] sm:$0xff]
    %v621 = vld [vmem:[#allocation6 + $0x298] sm:$0xff]
    %v622 = vld [vmem:[#allocation6 + $0x2a0] sm:$0xff]
    %v623 = vld [vmem:[#allocation6 + $0x2a8] sm:$0xff]
    %v624 = vld [vmem:[#allocation6 + $0x2b0] sm:$0xff]
    %v625 = vld [vmem:[#allocation6 + $0x2b8] sm:$0xff]
    %v626 = vld [vmem:[#allocation6 + $0x2c0] sm:$0xff]
    %v627 = vld [vmem:[#allocation6 + $0x2c8] sm:$0xff]
    %v628 = vld [vmem:[#allocation6 + $0x2d0] sm:$0xff]
    %v629 = vld [vmem:[#allocation6 + $0x2d8] sm:$0xff]
    %v630 = vld [vmem:[#allocation6 + $0x2e0] sm:$0xff]
    %v631 = vld [vmem:[#allocation6 + $0x2e8] sm:$0xff]
    %v632 = vld [vmem:[#allocation6 + $0x2f0] sm:$0xff]
    %v633 = vld [vmem:[#allocation6 + $0x2f8] sm:$0xff]
    %v634 = vld [vmem:[#allocation6 + $0x300] sm:$0xff]
    %v635 = vld [vmem:[#allocation6 + $0x308] sm:$0xff]
    %v636 = vld [vmem:[#allocation6 + $0x310] sm:$0xff]
    %v637 = vld [vmem:[#allocation6 + $0x318] sm:$0xff]
    %v638 = vld [vmem:[%s6] sm:$0xf]
    %v640 = vlaneseq
    %v641 = vshrl.u32 %v640, 7
    %v642 = vsub.s32 0, %v641
    %v643 = vrot.slane %v638, %v642
    %v644 = vlaneseq
    %v645 = vshrl.u32 %v644, 7
    %v646 = vsub.s32 1, %v645
    %v647 = vrot.slane %v638, %v646
    %v648 = vlaneseq
    %v649 = vshrl.u32 %v648, 7
    %v650 = vsub.s32 2, %v649
    %v651 = vrot.slane %v638, %v650
    %v652 = vlaneseq
    %v653 = vshrl.u32 %v652, 7
    %v654 = vsub.s32 3, %v653
    %v655 = vrot.slane %v638, %v654
    %v760 = vunpack.c.l.b16 %v538
    %v761 = vunpack.c.h.b16 %v538
    %v762 = vunpack.c.l.b16 %v539
    %v763 = vunpack.c.h.b16 %v539
    %v764 = vunpack.c.l.b16 %v540
    %v765 = vunpack.c.h.b16 %v540
    %v766 = vunpack.c.l.b16 %v541
    %v767 = vunpack.c.h.b16 %v541
    %v768 = vunpack.c.l.b16 %v542
    %v769 = vunpack.c.h.b16 %v542
    %v770 = vunpack.c.l.b16 %v543
    %v771 = vunpack.c.h.b16 %v543
    %v772 = vunpack.c.l.b16 %v544
    %v773 = vunpack.c.h.b16 %v544
    %v774 = vunpack.c.l.b16 %v545
    %v775 = vunpack.c.h.b16 %v545
    %v776 = vunpack.c.l.b16 %v546
    %v777 = vunpack.c.h.b16 %v546
    %v778 = vunpack.c.l.b16 %v547
    %v779 = vunpack.c.h.b16 %v547
    %v780 = vunpack.c.l.b16 %v548
    %v781 = vunpack.c.h.b16 %v548
    %v782 = vunpack.c.l.b16 %v549
    %v783 = vunpack.c.h.b16 %v549
    %v784 = vunpack.c.l.b16 %v550
    %v785 = vunpack.c.h.b16 %v550
    %v786 = vunpack.c.l.b16 %v551
    %v787 = vunpack.c.h.b16 %v551
    %v788 = vunpack.c.l.b16 %v552
    %v789 = vunpack.c.h.b16 %v552
    %v790 = vunpack.c.l.b16 %v553
    %v791 = vunpack.c.h.b16 %v553
    %v792 = vunpack.c.l.b16 %v554
    %v793 = vunpack.c.h.b16 %v554
    %v794 = vunpack.c.l.b16 %v555
    %v795 = vunpack.c.h.b16 %v555
    %v796 = vunpack.c.l.b16 %v556
    %v797 = vunpack.c.h.b16 %v556
    %v798 = vunpack.c.l.b16 %v557
    %v799 = vunpack.c.h.b16 %v557
    %v800 = vunpack.c.l.b16 %v558
    %v801 = vunpack.c.h.b16 %v558
    %v802 = vunpack.c.l.b16 %v559
    %v803 = vunpack.c.h.b16 %v559
    %v804 = vunpack.c.l.b16 %v560
    %v805 = vunpack.c.h.b16 %v560
    %v806 = vunpack.c.l.b16 %v561
    %v807 = vunpack.c.h.b16 %v561
    %v808 = vunpack.c.l.b16 %v562
    %v809 = vunpack.c.h.b16 %v562
    %v810 = vunpack.c.l.b16 %v563
    %v811 = vunpack.c.h.b16 %v563
    %v812 = vunpack.c.l.b16 %v564
    %v813 = vunpack.c.h.b16 %v564
    %v814 = vunpack.c.l.b16 %v565
    %v815 = vunpack.c.h.b16 %v565
    %v816 = vunpack.c.l.b16 %v566
    %v817 = vunpack.c.h.b16 %v566
    %v818 = vunpack.c.l.b16 %v567
    %v819 = vunpack.c.h.b16 %v567
    %v820 = vunpack.c.l.b16 %v568
    %v821 = vunpack.c.h.b16 %v568
    %v822 = vunpack.c.l.b16 %v569
    %v823 = vunpack.c.h.b16 %v569
    %v824 = vunpack.c.l.b16 %v570
    %v825 = vunpack.c.h.b16 %v570
    %v826 = vunpack.c.l.b16 %v571
    %v827 = vunpack.c.h.b16 %v571
    %v828 = vunpack.c.l.b16 %v572
    %v829 = vunpack.c.h.b16 %v572
    %v830 = vunpack.c.l.b16 %v573
    %v831 = vunpack.c.h.b16 %v573
    %v832 = vunpack.c.l.b16 %v574
    %v833 = vunpack.c.h.b16 %v574
    %v834 = vunpack.c.l.b16 %v575
    %v835 = vunpack.c.h.b16 %v575
    %v836 = vunpack.c.l.b16 %v576
    %v837 = vunpack.c.h.b16 %v576
    %v838 = vunpack.c.l.b16 %v577
    %v839 = vunpack.c.h.b16 %v577
    %v840 = vunpack.c.l.b16 %v578
    %v841 = vunpack.c.h.b16 %v578
    %v842 = vunpack.c.l.b16 %v579
    %v843 = vunpack.c.h.b16 %v579
    %v844 = vunpack.c.l.b16 %v580
    %v845 = vunpack.c.h.b16 %v580
    %v846 = vunpack.c.l.b16 %v581
    %v847 = vunpack.c.h.b16 %v581
    %v848 = vunpack.c.l.b16 %v582
    %v849 = vunpack.c.h.b16 %v582
    %v850 = vunpack.c.l.b16 %v583
    %v851 = vunpack.c.h.b16 %v583
    %v852 = vunpack.c.l.b16 %v584
    %v853 = vunpack.c.h.b16 %v584
    %v854 = vunpack.c.l.b16 %v585
    %v855 = vunpack.c.h.b16 %v585
    %v856 = vunpack.c.l.b16 %v586
    %v857 = vunpack.c.h.b16 %v586
    %v858 = vunpack.c.l.b16 %v587
    %v859 = vunpack.c.h.b16 %v587
    %v860 = vunpack.c.l.b16 %v588
    %v861 = vunpack.c.h.b16 %v588
    %v862 = vunpack.c.l.b16 %v589
    %v863 = vunpack.c.h.b16 %v589
    %v864 = vunpack.c.l.b16 %v590
    %v865 = vunpack.c.h.b16 %v590
    %v866 = vunpack.c.l.b16 %v591
    %v867 = vunpack.c.h.b16 %v591
    %v868 = vunpack.c.l.b16 %v592
    %v869 = vunpack.c.h.b16 %v592
    %v870 = vunpack.c.l.b16 %v593
    %v871 = vunpack.c.h.b16 %v593
    %v872 = vunpack.c.l.b16 %v594
    %v873 = vunpack.c.h.b16 %v594
    %v874 = vunpack.c.l.b16 %v595
    %v875 = vunpack.c.h.b16 %v595
    %v876 = vunpack.c.l.b16 %v596
    %v877 = vunpack.c.h.b16 %v596
    %v878 = vunpack.c.l.b16 %v597
    %v879 = vunpack.c.h.b16 %v597
    %v880 = vunpack.c.l.b16 %v598
    %v881 = vunpack.c.h.b16 %v598
    %v882 = vunpack.c.l.b16 %v599
    %v883 = vunpack.c.h.b16 %v599
    %v884 = vunpack.c.l.b16 %v600
    %v885 = vunpack.c.h.b16 %v600
    %v886 = vunpack.c.l.b16 %v601
    %v887 = vunpack.c.h.b16 %v601
    %v888 = vunpack.c.l.b16 %v602
    %v889 = vunpack.c.h.b16 %v602
    %v890 = vunpack.c.l.b16 %v603
    %v891 = vunpack.c.h.b16 %v603
    %v892 = vunpack.c.l.b16 %v604
    %v893 = vunpack.c.h.b16 %v604
    %v894 = vunpack.c.l.b16 %v605
    %v895 = vunpack.c.h.b16 %v605
    %v896 = vunpack.c.l.b16 %v606
    %v897 = vunpack.c.h.b16 %v606
    %v898 = vunpack.c.l.b16 %v607
    %v899 = vunpack.c.h.b16 %v607
    %v900 = vunpack.c.l.b16 %v608
    %v901 = vunpack.c.h.b16 %v608
    %v902 = vunpack.c.l.b16 %v609
    %v903 = vunpack.c.h.b16 %v609
    %v904 = vunpack.c.l.b16 %v610
    %v905 = vunpack.c.h.b16 %v610
    %v906 = vunpack.c.l.b16 %v611
    %v907 = vunpack.c.h.b16 %v611
    %v908 = vunpack.c.l.b16 %v612
    %v909 = vunpack.c.h.b16 %v612
    %v910 = vunpack.c.l.b16 %v613
    %v911 = vunpack.c.h.b16 %v613
    %v912 = vunpack.c.l.b16 %v614
    %v913 = vunpack.c.h.b16 %v614
    %v914 = vunpack.c.l.b16 %v615
    %v915 = vunpack.c.h.b16 %v615
    %v916 = vunpack.c.l.b16 %v616
    %v917 = vunpack.c.h.b16 %v616
    %v918 = vunpack.c.l.b16 %v617
    %v919 = vunpack.c.h.b16 %v617
    %v920 = vunpack.c.l.b16 %v618
    %v921 = vunpack.c.h.b16 %v618
    %v922 = vunpack.c.l.b16 %v619
    %v923 = vunpack.c.h.b16 %v619
    %v924 = vunpack.c.l.b16 %v620
    %v925 = vunpack.c.h.b16 %v620
    %v926 = vunpack.c.l.b16 %v621
    %v927 = vunpack.c.h.b16 %v621
    %v928 = vunpack.c.l.b16 %v622
    %v929 = vunpack.c.h.b16 %v622
    %v930 = vunpack.c.l.b16 %v623
    %v931 = vunpack.c.h.b16 %v623
    %v932 = vunpack.c.l.b16 %v624
    %v933 = vunpack.c.h.b16 %v624
    %v934 = vunpack.c.l.b16 %v625
    %v935 = vunpack.c.h.b16 %v625
    %v936 = vunpack.c.l.b16 %v626
    %v937 = vunpack.c.h.b16 %v626
    %v938 = vunpack.c.l.b16 %v627
    %v939 = vunpack.c.h.b16 %v627
    %v940 = vunpack.c.l.b16 %v628
    %v941 = vunpack.c.h.b16 %v628
    %v942 = vunpack.c.l.b16 %v629
    %v943 = vunpack.c.h.b16 %v629
    %v944 = vunpack.c.l.b16 %v630
    %v945 = vunpack.c.h.b16 %v630
    %v946 = vunpack.c.l.b16 %v631
    %v947 = vunpack.c.h.b16 %v631
    %v948 = vunpack.c.l.b16 %v632
    %v949 = vunpack.c.h.b16 %v632
    %v950 = vunpack.c.l.b16 %v633
    %v951 = vunpack.c.h.b16 %v633
    %v952 = vunpack.c.l.b16 %v634
    %v953 = vunpack.c.h.b16 %v634
    %v954 = vunpack.c.l.b16 %v635
    %v955 = vunpack.c.h.b16 %v635
    %v956 = vunpack.c.l.b16 %v636
    %v957 = vunpack.c.h.b16 %v636
    %v958 = vunpack.c.l.b16 %v637
    %v959 = vunpack.c.h.b16 %v637
    %v960 = vpack.c.b16 %v764, %v760
    %v961 = vpack.c.b16 %v765, %v761
    %v962 = vpack.c.b16 %v766, %v762
    %v963 = vpack.c.b16 %v767, %v763
    %v964 = vpack.c.b16 %v772, %v768
    %v965 = vpack.c.b16 %v773, %v769
    %v966 = vpack.c.b16 %v774, %v770
    %v967 = vpack.c.b16 %v775, %v771
    %v968 = vpack.c.b16 %v780, %v776
    %v969 = vpack.c.b16 %v781, %v777
    %v970 = vpack.c.b16 %v782, %v778
    %v971 = vpack.c.b16 %v783, %v779
    %v972 = vpack.c.b16 %v788, %v784
    %v973 = vpack.c.b16 %v789, %v785
    %v974 = vpack.c.b16 %v790, %v786
    %v975 = vpack.c.b16 %v791, %v787
    %v976 = vpack.c.b16 %v796, %v792
    %v977 = vpack.c.b16 %v797, %v793
    %v978 = vpack.c.b16 %v798, %v794
    %v979 = vpack.c.b16 %v799, %v795
    %v980 = vpack.c.b16 %v804, %v800
    %v981 = vpack.c.b16 %v805, %v801
    %v982 = vpack.c.b16 %v806, %v802
    %v983 = vpack.c.b16 %v807, %v803
    %v984 = vpack.c.b16 %v812, %v808
    %v985 = vpack.c.b16 %v813, %v809
    %v986 = vpack.c.b16 %v814, %v810
    %v987 = vpack.c.b16 %v815, %v811
    %v988 = vpack.c.b16 %v820, %v816
    %v989 = vpack.c.b16 %v821, %v817
    %v990 = vpack.c.b16 %v822, %v818
    %v991 = vpack.c.b16 %v823, %v819
    %v992 = vpack.c.b16 %v828, %v824
    %v993 = vpack.c.b16 %v829, %v825
    %v994 = vpack.c.b16 %v830, %v826
    %v995 = vpack.c.b16 %v831, %v827
    %v996 = vpack.c.b16 %v836, %v832
    %v997 = vpack.c.b16 %v837, %v833
    %v998 = vpack.c.b16 %v838, %v834
    %v999 = vpack.c.b16 %v839, %v835
    %v1000 = vpack.c.b16 %v844, %v840
    %v1001 = vpack.c.b16 %v845, %v841
    %v1002 = vpack.c.b16 %v846, %v842
    %v1003 = vpack.c.b16 %v847, %v843
    %v1004 = vpack.c.b16 %v852, %v848
    %v1005 = vpack.c.b16 %v853, %v849
    %v1006 = vpack.c.b16 %v854, %v850
    %v1007 = vpack.c.b16 %v855, %v851
    %v1008 = vpack.c.b16 %v860, %v856
    %v1009 = vpack.c.b16 %v861, %v857
    %v1010 = vpack.c.b16 %v862, %v858
    %v1011 = vpack.c.b16 %v863, %v859
    %v1012 = vpack.c.b16 %v868, %v864
    %v1013 = vpack.c.b16 %v869, %v865
    %v1014 = vpack.c.b16 %v870, %v866
    %v1015 = vpack.c.b16 %v871, %v867
    %v1016 = vpack.c.b16 %v876, %v872
    %v1017 = vpack.c.b16 %v877, %v873
    %v1018 = vpack.c.b16 %v878, %v874
    %v1019 = vpack.c.b16 %v879, %v875
    %v1020 = vpack.c.b16 %v884, %v880
    %v1021 = vpack.c.b16 %v885, %v881
    %v1022 = vpack.c.b16 %v886, %v882
    %v1023 = vpack.c.b16 %v887, %v883
    %v1024 = vpack.c.b16 %v892, %v888
    %v1025 = vpack.c.b16 %v893, %v889
    %v1026 = vpack.c.b16 %v894, %v890
    %v1027 = vpack.c.b16 %v895, %v891
    %v1028 = vpack.c.b16 %v900, %v896
    %v1029 = vpack.c.b16 %v901, %v897
    %v1030 = vpack.c.b16 %v902, %v898
    %v1031 = vpack.c.b16 %v903, %v899
    %v1032 = vpack.c.b16 %v908, %v904
    %v1033 = vpack.c.b16 %v909, %v905
    %v1034 = vpack.c.b16 %v910, %v906
    %v1035 = vpack.c.b16 %v911, %v907
    %v1036 = vpack.c.b16 %v916, %v912
    %v1037 = vpack.c.b16 %v917, %v913
    %v1038 = vpack.c.b16 %v918, %v914
    %v1039 = vpack.c.b16 %v919, %v915
    %v1040 = vpack.c.b16 %v924, %v920
    %v1041 = vpack.c.b16 %v925, %v921
    %v1042 = vpack.c.b16 %v926, %v922
    %v1043 = vpack.c.b16 %v927, %v923
    %v1044 = vpack.c.b16 %v932, %v928
    %v1045 = vpack.c.b16 %v933, %v929
    %v1046 = vpack.c.b16 %v934, %v930
    %v1047 = vpack.c.b16 %v935, %v931
    %v1048 = vpack.c.b16 %v940, %v936
    %v1049 = vpack.c.b16 %v941, %v937
    %v1050 = vpack.c.b16 %v942, %v938
    %v1051 = vpack.c.b16 %v943, %v939
    %v1052 = vpack.c.b16 %v948, %v944
    %v1053 = vpack.c.b16 %v949, %v945
    %v1054 = vpack.c.b16 %v950, %v946
    %v1055 = vpack.c.b16 %v951, %v947
    %v1056 = vpack.c.b16 %v956, %v952
    %v1057 = vpack.c.b16 %v957, %v953
    %v1058 = vpack.c.b16 %v958, %v954
    %v1059 = vpack.c.b16 %v959, %v955
    %vm1160 = vcmask 130048
    %v1162 = vsel %vm1160, %v537, 0
    %1164 = vmatprep.subr.bf16.mxu0 %v961
    %1165 = vmatpush1.bf16.msra.mxu0 %v960
    %1166 = vmatprep.subr.bf16.mxu0 %v965
    %1167 = vmatpush1.bf16.msra.mxu0 %v964
    %1168 = vmatprep.subr.bf16.mxu0 %v969
    %1169 = vmatpush1.bf16.msra.mxu0 %v968
    %1170 = vmatprep.subr.bf16.mxu0 %v973
    %1171 = vmatpush1.bf16.msra.mxu0 %v972
    %1172 = vmatprep.subr.bf16.mxu0 %v977
    %1173 = vmatpush1.bf16.msra.mxu0 %v976
    %1174 = vmatprep.subr.bf16.mxu0 %v981
    %1175 = vmatpush1.bf16.msra.mxu0 %v980
    %1176 = vmatprep.subr.bf16.mxu0 %v985
    %1177 = vmatpush1.bf16.msra.mxu0 %v984
    %1178 = vmatprep.subr.bf16.mxu0 %v989
    %1179 = vmatpush1.bf16.msra.mxu0 %v988
    %1180 = vmatprep.subr.bf16.mxu0 %v993
    %1181 = vmatpush1.bf16.msra.mxu0 %v992
    %1182 = vmatprep.subr.bf16.mxu0 %v997
    %1183 = vmatpush1.bf16.msra.mxu0 %v996
    %1184 = vmatprep.subr.bf16.mxu0 %v1001
    %1185 = vmatpush1.bf16.msra.mxu0 %v1000
    %1186 = vmatprep.subr.bf16.mxu0 %v1005
    %1187 = vmatpush1.bf16.msra.mxu0 %v1004
    %1188 = vmatprep.subr.bf16.mxu0 %v1009
    %1189 = vmatpush1.bf16.msra.mxu0 %v1008
    %1190 = vmatprep.subr.bf16.mxu0 %v1013
    %1191 = vmatpush1.bf16.msra.mxu0 %v1012
    %1192 = vmatprep.subr.bf16.mxu0 %v1017
    %1193 = vmatpush1.bf16.msra.mxu0 %v1016
    %1194 = vmatprep.subr.bf16.mxu0 %v1021
    %1195 = vmatpush1.bf16.msra.mxu0 %v1020
    %1196 = vmatprep.mubr.bf16.mxu0 %v535
    %1197 = vmatmul.mubr.bf16.gmra.mrb[0].mxu0 %v534
    %v1198 = vpop.f32.mrb[0].mxu0
    %v1199 = vadd.f32 %v643, %v1198
    %v1200 = vpop.f32.mrb[0].mxu0
    %v1201 = vadd.f32 %v647, %v1200
    %v1202 = vpop.f32.mrb[0].mxu0
    %v1203 = vpop.f32.mrb[0].mxu0
    %1204 = vdwg.mxu0
    %1205 = vmatprep.subr.bf16.mxu0 %v1025
    %1206 = vmatpush1.bf16.msra.mxu0 %v1024
    %1207 = vmatprep.subr.bf16.mxu0 %v1029
    %1208 = vmatpush1.bf16.msra.mxu0 %v1028
    %1209 = vmatprep.subr.bf16.mxu0 %v1033
    %1210 = vmatpush1.bf16.msra.mxu0 %v1032
    %1211 = vmatprep.subr.bf16.mxu0 %v1037
    %1212 = vmatpush1.bf16.msra.mxu0 %v1036
    %1213 = vmatprep.subr.bf16.mxu0 %v1041
    %1214 = vmatpush1.bf16.msra.mxu0 %v1040
    %1215 = vmatprep.subr.bf16.mxu0 %v1045
    %1216 = vmatpush1.bf16.msra.mxu0 %v1044
    %1217 = vmatprep.subr.bf16.mxu0 %v1049
    %1218 = vmatpush1.bf16.msra.mxu0 %v1048
    %1219 = vmatprep.subr.bf16.mxu0 %v1053
    %1220 = vmatpush1.bf16.msra.mxu0 %v1052
    %1221 = vmatprep.subr.bf16.mxu0 %v1057
    %1222 = vmatpush1.bf16.msra.mxu0 %v1056
    %1223 = vmatprep.subr.bf16.mxu0 0
    %1224 = vmatpush1.bf16.msra.mxu0 0
    %1225 = vmatprep.subr.bf16.mxu0 0
    %1226 = vmatpush1.bf16.msra.mxu0 0
    %1227 = vmatprep.subr.bf16.mxu0 0
    %1228 = vmatpush1.bf16.msra.mxu0 0
    %1229 = vmatprep.subr.bf16.mxu0 0
    %1230 = vmatpush1.bf16.msra.mxu0 0
    %1231 = vmatprep.subr.bf16.mxu0 0
    %1232 = vmatpush1.bf16.msra.mxu0 0
    %1233 = vmatprep.subr.bf16.mxu0 0
    %1234 = vmatpush1.bf16.msra.mxu0 0
    %1235 = vmatprep.subr.bf16.mxu0 0
    %1236 = vmatpush1.bf16.msra.mxu0 0
    %1237 = vmatprep.mubr.bf16.mxu0 %v1162
    %1238 = vmatmul.mubr.bf16.gmra.mrb[0].mxu0 %v536
    %v1239 = vpop.f32.mrb[0].mxu0
    %v1240 = vadd.f32 %v1199, %v1239
    %v1241 = vpop.f32.mrb[0].mxu0
    %v1242 = vadd.f32 %v1201, %v1241
    %v1243 = vpop.f32.mrb[0].mxu0
    %v1244 = vpop.f32.mrb[0].mxu0
    %1245 = vdwg.mxu0
    %1246 = vmatprep.subr.bf16.mxu0 %v963
    %1247 = vmatpush1.bf16.msra.mxu0 %v962
    %1248 = vmatprep.subr.bf16.mxu0 %v967
    %1249 = vmatpush1.bf16.msra.mxu0 %v966
    %1250 = vmatprep.subr.bf16.mxu0 %v971
    %1251 = vmatpush1.bf16.msra.mxu0 %v970
    %1252 = vmatprep.subr.bf16.mxu0 %v975
    %1253 = vmatpush1.bf16.msra.mxu0 %v974
    %1254 = vmatprep.subr.bf16.mxu0 %v979
    %1255 = vmatpush1.bf16.msra.mxu0 %v978
    %1256 = vmatprep.subr.bf16.mxu0 %v983
    %1257 = vmatpush1.bf16.msra.mxu0 %v982
    %1258 = vmatprep.subr.bf16.mxu0 %v987
    %1259 = vmatpush1.bf16.msra.mxu0 %v986
    %1260 = vmatprep.subr.bf16.mxu0 %v991
    %1261 = vmatpush1.bf16.msra.mxu0 %v990
    %1262 = vmatprep.subr.bf16.mxu0 %v995
    %1263 = vmatpush1.bf16.msra.mxu0 %v994
    %1264 = vmatprep.subr.bf16.mxu0 %v999
    %1265 = vmatpush1.bf16.msra.mxu0 %v998
    %1266 = vmatprep.subr.bf16.mxu0 %v1003
    %1267 = vmatpush1.bf16.msra.mxu0 %v1002
    %1268 = vmatprep.subr.bf16.mxu0 %v1007
    %1269 = vmatpush1.bf16.msra.mxu0 %v1006
    %1270 = vmatprep.subr.bf16.mxu0 %v1011
    %1271 = vmatpush1.bf16.msra.mxu0 %v1010
    %1272 = vmatprep.subr.bf16.mxu0 %v1015
    %1273 = vmatpush1.bf16.msra.mxu0 %v1014
    %1274 = vmatprep.subr.bf16.mxu0 %v1019
    %1275 = vmatpush1.bf16.msra.mxu0 %v1018
    %1276 = vmatprep.subr.bf16.mxu0 %v1023
    %1277 = vmatpush1.bf16.msra.mxu0 %v1022
    %1278 = vmatprep.mubr.bf16.mxu0 %v535
    %1279 = vmatmul.mubr.bf16.gmra.mrb[0].mxu0 %v534
    %v1280 = vpop.f32.mrb[0].mxu0
    %v1281 = vadd.f32 %v651, %v1280
    %v1282 = vpop.f32.mrb[0].mxu0
    %v1283 = vadd.f32 %v655, %v1282
    %v1284 = vpop.f32.mrb[0].mxu0
    %v1285 = vpop.f32.mrb[0].mxu0
    %1286 = vdwg.mxu0
    %1287 = vmatprep.subr.bf16.mxu0 %v1027
    %1288 = vmatpush1.bf16.msra.mxu0 %v1026
    %1289 = vmatprep.subr.bf16.mxu0 %v1031
    %1290 = vmatpush1.bf16.msra.mxu0 %v1030
    %1291 = vmatprep.subr.bf16.mxu0 %v1035
    %1292 = vmatpush1.bf16.msra.mxu0 %v1034
    %1293 = vmatprep.subr.bf16.mxu0 %v1039
    %1294 = vmatpush1.bf16.msra.mxu0 %v1038
    %1295 = vmatprep.subr.bf16.mxu0 %v1043
    %1296 = vmatpush1.bf16.msra.mxu0 %v1042
    %1297 = vmatprep.subr.bf16.mxu0 %v1047
    %1298 = vmatpush1.bf16.msra.mxu0 %v1046
    %1299 = vmatprep.subr.bf16.mxu0 %v1051
    %1300 = vmatpush1.bf16.msra.mxu0 %v1050
    %1301 = vmatprep.subr.bf16.mxu0 %v1055
    %1302 = vmatpush1.bf16.msra.mxu0 %v1054
    %1303 = vmatprep.subr.bf16.mxu0 %v1059
    %1304 = vmatpush1.bf16.msra.mxu0 %v1058
    %1305 = vmatprep.subr.bf16.mxu0 0
    %1306 = vmatpush1.bf16.msra.mxu0 0
    %1307 = vmatprep.subr.bf16.mxu0 0
    %1308 = vmatpush1.bf16.msra.mxu0 0
    %1309 = vmatprep.subr.bf16.mxu0 0
    %1310 = vmatpush1.bf16.msra.mxu0 0
    %1311 = vmatprep.subr.bf16.mxu0 0
    %1312 = vmatpush1.bf16.msra.mxu0 0
    %1313 = vmatprep.subr.bf16.mxu0 0
    %1314 = vmatpush1.bf16.msra.mxu0 0
    %1315 = vmatprep.subr.bf16.mxu0 0
    %1316 = vmatpush1.bf16.msra.mxu0 0
    %1317 = vmatprep.subr.bf16.mxu0 0
    %1318 = vmatpush1.bf16.msra.mxu0 0
    %1319 = vmatprep.mubr.bf16.mxu0 %v1162
    %1320 = vmatmul.mubr.bf16.gmra.mrb[0].mxu0 %v536
    %v1321 = vpop.f32.mrb[0].mxu0
    %v1322 = vadd.f32 %v1281, %v1321
    %v1323 = vpop.f32.mrb[0].mxu0
    %v1324 = vadd.f32 %v1283, %v1323
    %v1325 = vpop.f32.mrb[0].mxu0
    %v1326 = vpop.f32.mrb[0].mxu0
    %1327 = vdwg.mxu0
    %v1328 = vld [vmem:[#allocation7] sm:$0xff]
    %v1329 = vld [vmem:[#allocation7 + $0x8] sm:$0xff]
    %v1330 = vld [vmem:[#allocation7 + $0x10] sm:$0xff]
    %v1331 = vld [vmem:[#allocation7 + $0x18] sm:$0xff]
    %v1332 = vld [vmem:[#allocation7 + $0x20] sm:$0xff]
    %v1333 = vld [vmem:[#allocation7 + $0x28] sm:$0xff]
    %v1334 = vld [vmem:[#allocation7 + $0x30] sm:$0xff]
    %v1335 = vld [vmem:[#allocation7 + $0x38] sm:$0xff]
    %v1336 = vld [vmem:[#allocation7 + $0x40] sm:$0xff]
    %v1337 = vld [vmem:[#allocation7 + $0x48] sm:$0xff]
    %v1338 = vld [vmem:[#allocation7 + $0x50] sm:$0xff]
    %v1339 = vld [vmem:[#allocation7 + $0x58] sm:$0xff]
    %v1340 = vld [vmem:[#allocation7 + $0x60] sm:$0xff]
    %v1341 = vld [vmem:[#allocation7 + $0x68] sm:$0xff]
    %v1342 = vld [vmem:[#allocation7 + $0x70] sm:$0xff]
    %v1343 = vld [vmem:[#allocation7 + $0x78] sm:$0xff]
    %v1344 = vld [vmem:[#allocation7 + $0x80] sm:$0xff]
    %v1345 = vld [vmem:[#allocation7 + $0x88] sm:$0xff]
    %v1346 = vld [vmem:[#allocation7 + $0x90] sm:$0xff]
    %v1347 = vld [vmem:[#allocation7 + $0x98] sm:$0xff]
    %v1348 = vld [vmem:[#allocation7 + $0xa0] sm:$0xff]
    %v1349 = vld [vmem:[#allocation7 + $0xa8] sm:$0xff]
    %v1350 = vld [vmem:[#allocation7 + $0xb0] sm:$0xff]
    %v1351 = vld [vmem:[#allocation7 + $0xb8] sm:$0xff]
    %v1352 = vld [vmem:[#allocation7 + $0xc0] sm:$0xff]
    %v1353 = vld [vmem:[#allocation7 + $0xc8] sm:$0xff]
    %v1354 = vld [vmem:[#allocation7 + $0xd0] sm:$0xff]
    %v1355 = vld [vmem:[#allocation7 + $0xd8] sm:$0xff]
    %v1356 = vld [vmem:[#allocation7 + $0xe0] sm:$0xff]
    %v1357 = vld [vmem:[#allocation7 + $0xe8] sm:$0xff]
    %v1358 = vld [vmem:[#allocation7 + $0xf0] sm:$0xff]
    %v1359 = vld [vmem:[#allocation7 + $0xf8] sm:$0xff]
    %v1360 = vld [vmem:[#allocation7 + $0x100] sm:$0xff]
    %v1361 = vld [vmem:[#allocation7 + $0x108] sm:$0xff]
    %v1362 = vld [vmem:[#allocation7 + $0x110] sm:$0xff]
    %v1363 = vld [vmem:[#allocation7 + $0x118] sm:$0xff]
    %v1364 = vld [vmem:[#allocation7 + $0x120] sm:$0xff]
    %v1365 = vld [vmem:[#allocation7 + $0x128] sm:$0xff]
    %v1366 = vld [vmem:[#allocation7 + $0x130] sm:$0xff]
    %v1367 = vld [vmem:[#allocation7 + $0x138] sm:$0xff]
    %v1368 = vld [vmem:[#allocation7 + $0x140] sm:$0xff]
    %v1369 = vld [vmem:[#allocation7 + $0x148] sm:$0xff]
    %v1370 = vld [vmem:[#allocation7 + $0x150] sm:$0xff]
    %v1371 = vld [vmem:[#allocation7 + $0x158] sm:$0xff]
    %v1372 = vld [vmem:[#allocation7 + $0x160] sm:$0xff]
    %v1373 = vld [vmem:[#allocation7 + $0x168] sm:$0xff]
    %v1374 = vld [vmem:[#allocation7 + $0x170] sm:$0xff]
    %v1375 = vld [vmem:[#allocation7 + $0x178] sm:$0xff]
    %v1376 = vld [vmem:[#allocation7 + $0x180] sm:$0xff]
    %v1377 = vld [vmem:[#allocation7 + $0x188] sm:$0xff]
    %v1378 = vld [vmem:[#allocation7 + $0x190] sm:$0xff]
    %v1379 = vld [vmem:[#allocation7 + $0x198] sm:$0xff]
    %v1380 = vld [vmem:[#allocation7 + $0x1a0] sm:$0xff]
    %v1381 = vld [vmem:[#allocation7 + $0x1a8] sm:$0xff]
    %v1382 = vld [vmem:[#allocation7 + $0x1b0] sm:$0xff]
    %v1383 = vld [vmem:[#allocation7 + $0x1b8] sm:$0xff]
    %v1384 = vld [vmem:[#allocation7 + $0x1c0] sm:$0xff]
    %v1385 = vld [vmem:[#allocation7 + $0x1c8] sm:$0xff]
    %v1386 = vld [vmem:[#allocation7 + $0x1d0] sm:$0xff]
    %v1387 = vld [vmem:[#allocation7 + $0x1d8] sm:$0xff]
    %v1388 = vld [vmem:[#allocation7 + $0x1e0] sm:$0xff]
    %v1389 = vld [vmem:[#allocation7 + $0x1e8] sm:$0xff]
    %v1390 = vld [vmem:[#allocation7 + $0x1f0] sm:$0xff]
    %v1391 = vld [vmem:[#allocation7 + $0x1f8] sm:$0xff]
    %v1392 = vld [vmem:[#allocation7 + $0x200] sm:$0xff]
    %v1393 = vld [vmem:[#allocation7 + $0x208] sm:$0xff]
    %v1394 = vld [vmem:[#allocation7 + $0x210] sm:$0xff]
    %v1395 = vld [vmem:[#allocation7 + $0x218] sm:$0xff]
    %v1396 = vld [vmem:[#allocation7 + $0x220] sm:$0xff]
    %v1397 = vld [vmem:[#allocation7 + $0x228] sm:$0xff]
    %v1398 = vld [vmem:[#allocation7 + $0x230] sm:$0xff]
    %v1399 = vld [vmem:[#allocation7 + $0x238] sm:$0xff]
    %v1400 = vld [vmem:[#allocation7 + $0x240] sm:$0xff]
    %v1401 = vld [vmem:[#allocation7 + $0x248] sm:$0xff]
    %v1402 = vld [vmem:[#allocation7 + $0x250] sm:$0xff]
    %v1403 = vld [vmem:[#allocation7 + $0x258] sm:$0xff]
    %v1404 = vld [vmem:[#allocation7 + $0x260] sm:$0xff]
    %v1405 = vld [vmem:[#allocation7 + $0x268] sm:$0xff]
    %v1406 = vld [vmem:[#allocation7 + $0x270] sm:$0xff]
    %v1407 = vld [vmem:[#allocation7 + $0x278] sm:$0xff]
    %v1408 = vld [vmem:[#allocation7 + $0x280] sm:$0xff]
    %v1409 = vld [vmem:[#allocation7 + $0x288] sm:$0xff]
    %v1410 = vld [vmem:[#allocation7 + $0x290] sm:$0xff]
    %v1411 = vld [vmem:[#allocation7 + $0x298] sm:$0xff]
    %v1412 = vld [vmem:[#allocation7 + $0x2a0] sm:$0xff]
    %v1413 = vld [vmem:[#allocation7 + $0x2a8] sm:$0xff]
    %v1414 = vld [vmem:[#allocation7 + $0x2b0] sm:$0xff]
    %v1415 = vld [vmem:[#allocation7 + $0x2b8] sm:$0xff]
    %v1416 = vld [vmem:[#allocation7 + $0x2c0] sm:$0xff]
    %v1417 = vld [vmem:[#allocation7 + $0x2c8] sm:$0xff]
    %v1418 = vld [vmem:[#allocation7 + $0x2d0] sm:$0xff]
    %v1419 = vld [vmem:[#allocation7 + $0x2d8] sm:$0xff]
    %v1420 = vld [vmem:[#allocation7 + $0x2e0] sm:$0xff]
    %v1421 = vld [vmem:[#allocation7 + $0x2e8] sm:$0xff]
    %v1422 = vld [vmem:[#allocation7 + $0x2f0] sm:$0xff]
    %v1423 = vld [vmem:[#allocation7 + $0x2f8] sm:$0xff]
    %v1424 = vld [vmem:[#allocation7 + $0x300] sm:$0xff]
    %v1425 = vld [vmem:[#allocation7 + $0x308] sm:$0xff]
    %v1426 = vld [vmem:[#allocation7 + $0x310] sm:$0xff]
    %v1427 = vld [vmem:[#allocation7 + $0x318] sm:$0xff]
    %v1428 = vld [vmem:[#allocation9] sm:$0xf]
    %v1430 = vlaneseq
    %v1431 = vshrl.u32 %v1430, 7
    %v1432 = vsub.s32 0, %v1431
    %v1433 = vrot.slane %v1428, %v1432
    %v1434 = vlaneseq
    %v1435 = vshrl.u32 %v1434, 7
    %v1436 = vsub.s32 1, %v1435
    %v1437 = vrot.slane %v1428, %v1436
    %v1438 = vlaneseq
    %v1439 = vshrl.u32 %v1438, 7
    %v1440 = vsub.s32 2, %v1439
    %v1441 = vrot.slane %v1428, %v1440
    %v1442 = vlaneseq
    %v1443 = vshrl.u32 %v1442, 7
    %v1444 = vsub.s32 3, %v1443
    %v1445 = vrot.slane %v1428, %v1444
    %v1550 = vunpack.c.l.b16 %v1328
    %v1551 = vunpack.c.h.b16 %v1328
    %v1552 = vunpack.c.l.b16 %v1329
    %v1553 = vunpack.c.h.b16 %v1329
    %v1554 = vunpack.c.l.b16 %v1330
    %v1555 = vunpack.c.h.b16 %v1330
    %v1556 = vunpack.c.l.b16 %v1331
    %v1557 = vunpack.c.h.b16 %v1331
    %v1558 = vunpack.c.l.b16 %v1332
    %v1559 = vunpack.c.h.b16 %v1332
    %v1560 = vunpack.c.l.b16 %v1333
    %v1561 = vunpack.c.h.b16 %v1333
    %v1562 = vunpack.c.l.b16 %v1334
    %v1563 = vunpack.c.h.b16 %v1334
    %v1564 = vunpack.c.l.b16 %v1335
    %v1565 = vunpack.c.h.b16 %v1335
    %v1566 = vunpack.c.l.b16 %v1336
    %v1567 = vunpack.c.h.b16 %v1336
    %v1568 = vunpack.c.l.b16 %v1337
    %v1569 = vunpack.c.h.b16 %v1337
    %v1570 = vunpack.c.l.b16 %v1338
    %v1571 = vunpack.c.h.b16 %v1338
    %v1572 = vunpack.c.l.b16 %v1339
    %v1573 = vunpack.c.h.b16 %v1339
    %v1574 = vunpack.c.l.b16 %v1340
    %v1575 = vunpack.c.h.b16 %v1340
    %v1576 = vunpack.c.l.b16 %v1341
    %v1577 = vunpack.c.h.b16 %v1341
    %v1578 = vunpack.c.l.b16 %v1342
    %v1579 = vunpack.c.h.b16 %v1342
    %v1580 = vunpack.c.l.b16 %v1343
    %v1581 = vunpack.c.h.b16 %v1343
    %v1582 = vunpack.c.l.b16 %v1344
    %v1583 = vunpack.c.h.b16 %v1344
    %v1584 = vunpack.c.l.b16 %v1345
    %v1585 = vunpack.c.h.b16 %v1345
    %v1586 = vunpack.c.l.b16 %v1346
    %v1587 = vunpack.c.h.b16 %v1346
    %v1588 = vunpack.c.l.b16 %v1347
    %v1589 = vunpack.c.h.b16 %v1347
    %v1590 = vunpack.c.l.b16 %v1348
    %v1591 = vunpack.c.h.b16 %v1348
    %v1592 = vunpack.c.l.b16 %v1349
    %v1593 = vunpack.c.h.b16 %v1349
    %v1594 = vunpack.c.l.b16 %v1350
    %v1595 = vunpack.c.h.b16 %v1350
    %v1596 = vunpack.c.l.b16 %v1351
    %v1597 = vunpack.c.h.b16 %v1351
    %v1598 = vunpack.c.l.b16 %v1352
    %v1599 = vunpack.c.h.b16 %v1352
    %v1600 = vunpack.c.l.b16 %v1353
    %v1601 = vunpack.c.h.b16 %v1353
    %v1602 = vunpack.c.l.b16 %v1354
    %v1603 = vunpack.c.h.b16 %v1354
    %v1604 = vunpack.c.l.b16 %v1355
    %v1605 = vunpack.c.h.b16 %v1355
    %v1606 = vunpack.c.l.b16 %v1356
    %v1607 = vunpack.c.h.b16 %v1356
    %v1608 = vunpack.c.l.b16 %v1357
    %v1609 = vunpack.c.h.b16 %v1357
    %v1610 = vunpack.c.l.b16 %v1358
    %v1611 = vunpack.c.h.b16 %v1358
    %v1612 = vunpack.c.l.b16 %v1359
    %v1613 = vunpack.c.h.b16 %v1359
    %v1614 = vunpack.c.l.b16 %v1360
    %v1615 = vunpack.c.h.b16 %v1360
    %v1616 = vunpack.c.l.b16 %v1361
    %v1617 = vunpack.c.h.b16 %v1361
    %v1618 = vunpack.c.l.b16 %v1362
    %v1619 = vunpack.c.h.b16 %v1362
    %v1620 = vunpack.c.l.b16 %v1363
    %v1621 = vunpack.c.h.b16 %v1363
    %v1622 = vunpack.c.l.b16 %v1364
    %v1623 = vunpack.c.h.b16 %v1364
    %v1624 = vunpack.c.l.b16 %v1365
    %v1625 = vunpack.c.h.b16 %v1365
    %v1626 = vunpack.c.l.b16 %v1366
    %v1627 = vunpack.c.h.b16 %v1366
    %v1628 = vunpack.c.l.b16 %v1367
    %v1629 = vunpack.c.h.b16 %v1367
    %v1630 = vunpack.c.l.b16 %v1368
    %v1631 = vunpack.c.h.b16 %v1368
    %v1632 = vunpack.c.l.b16 %v1369
    %v1633 = vunpack.c.h.b16 %v1369
    %v1634 = vunpack.c.l.b16 %v1370
    %v1635 = vunpack.c.h.b16 %v1370
    %v1636 = vunpack.c.l.b16 %v1371
    %v1637 = vunpack.c.h.b16 %v1371
    %v1638 = vunpack.c.l.b16 %v1372
    %v1639 = vunpack.c.h.b16 %v1372
    %v1640 = vunpack.c.l.b16 %v1373
    %v1641 = vunpack.c.h.b16 %v1373
    %v1642 = vunpack.c.l.b16 %v1374
    %v1643 = vunpack.c.h.b16 %v1374
    %v1644 = vunpack.c.l.b16 %v1375
    %v1645 = vunpack.c.h.b16 %v1375
    %v1646 = vunpack.c.l.b16 %v1376
    %v1647 = vunpack.c.h.b16 %v1376
    %v1648 = vunpack.c.l.b16 %v1377
    %v1649 = vunpack.c.h.b16 %v1377
    %v1650 = vunpack.c.l.b16 %v1378
    %v1651 = vunpack.c.h.b16 %v1378
    %v1652 = vunpack.c.l.b16 %v1379
    %v1653 = vunpack.c.h.b16 %v1379
    %v1654 = vunpack.c.l.b16 %v1380
    %v1655 = vunpack.c.h.b16 %v1380
    %v1656 = vunpack.c.l.b16 %v1381
    %v1657 = vunpack.c.h.b16 %v1381
    %v1658 = vunpack.c.l.b16 %v1382
    %v1659 = vunpack.c.h.b16 %v1382
    %v1660 = vunpack.c.l.b16 %v1383
    %v1661 = vunpack.c.h.b16 %v1383
    %v1662 = vunpack.c.l.b16 %v1384
    %v1663 = vunpack.c.h.b16 %v1384
    %v1664 = vunpack.c.l.b16 %v1385
    %v1665 = vunpack.c.h.b16 %v1385
    %v1666 = vunpack.c.l.b16 %v1386
    %v1667 = vunpack.c.h.b16 %v1386
    %v1668 = vunpack.c.l.b16 %v1387
    %v1669 = vunpack.c.h.b16 %v1387
    %v1670 = vunpack.c.l.b16 %v1388
    %v1671 = vunpack.c.h.b16 %v1388
    %v1672 = vunpack.c.l.b16 %v1389
    %v1673 = vunpack.c.h.b16 %v1389
    %v1674 = vunpack.c.l.b16 %v1390
    %v1675 = vunpack.c.h.b16 %v1390
    %v1676 = vunpack.c.l.b16 %v1391
    %v1677 = vunpack.c.h.b16 %v1391
    %v1678 = vunpack.c.l.b16 %v1392
    %v1679 = vunpack.c.h.b16 %v1392
    %v1680 = vunpack.c.l.b16 %v1393
    %v1681 = vunpack.c.h.b16 %v1393
    %v1682 = vunpack.c.l.b16 %v1394
    %v1683 = vunpack.c.h.b16 %v1394
    %v1684 = vunpack.c.l.b16 %v1395
    %v1685 = vunpack.c.h.b16 %v1395
    %v1686 = vunpack.c.l.b16 %v1396
    %v1687 = vunpack.c.h.b16 %v1396
    %v1688 = vunpack.c.l.b16 %v1397
    %v1689 = vunpack.c.h.b16 %v1397
    %v1690 = vunpack.c.l.b16 %v1398
    %v1691 = vunpack.c.h.b16 %v1398
    %v1692 = vunpack.c.l.b16 %v1399
    %v1693 = vunpack.c.h.b16 %v1399
    %v1694 = vunpack.c.l.b16 %v1400
    %v1695 = vunpack.c.h.b16 %v1400
    %v1696 = vunpack.c.l.b16 %v1401
    %v1697 = vunpack.c.h.b16 %v1401
    %v1698 = vunpack.c.l.b16 %v1402
    %v1699 = vunpack.c.h.b16 %v1402
    %v1700 = vunpack.c.l.b16 %v1403
    %v1701 = vunpack.c.h.b16 %v1403
    %v1702 = vunpack.c.l.b16 %v1404
    %v1703 = vunpack.c.h.b16 %v1404
    %v1704 = vunpack.c.l.b16 %v1405
    %v1705 = vunpack.c.h.b16 %v1405
    %v1706 = vunpack.c.l.b16 %v1406
    %v1707 = vunpack.c.h.b16 %v1406
    %v1708 = vunpack.c.l.b16 %v1407
    %v1709 = vunpack.c.h.b16 %v1407
    %v1710 = vunpack.c.l.b16 %v1408
    %v1711 = vunpack.c.h.b16 %v1408
    %v1712 = vunpack.c.l.b16 %v1409
    %v1713 = vunpack.c.h.b16 %v1409
    %v1714 = vunpack.c.l.b16 %v1410
    %v1715 = vunpack.c.h.b16 %v1410
    %v1716 = vunpack.c.l.b16 %v1411
    %v1717 = vunpack.c.h.b16 %v1411
    %v1718 = vunpack.c.l.b16 %v1412
    %v1719 = vunpack.c.h.b16 %v1412
    %v1720 = vunpack.c.l.b16 %v1413
    %v1721 = vunpack.c.h.b16 %v1413
    %v1722 = vunpack.c.l.b16 %v1414
    %v1723 = vunpack.c.h.b16 %v1414
    %v1724 = vunpack.c.l.b16 %v1415
    %v1725 = vunpack.c.h.b16 %v1415
    %v1726 = vunpack.c.l.b16 %v1416
    %v1727 = vunpack.c.h.b16 %v1416
    %v1728 = vunpack.c.l.b16 %v1417
    %v1729 = vunpack.c.h.b16 %v1417
    %v1730 = vunpack.c.l.b16 %v1418
    %v1731 = vunpack.c.h.b16 %v1418
    %v1732 = vunpack.c.l.b16 %v1419
    %v1733 = vunpack.c.h.b16 %v1419
    %v1734 = vunpack.c.l.b16 %v1420
    %v1735 = vunpack.c.h.b16 %v1420
    %v1736 = vunpack.c.l.b16 %v1421
    %v1737 = vunpack.c.h.b16 %v1421
    %v1738 = vunpack.c.l.b16 %v1422
    %v1739 = vunpack.c.h.b16 %v1422
    %v1740 = vunpack.c.l.b16 %v1423
    %v1741 = vunpack.c.h.b16 %v1423
    %v1742 = vunpack.c.l.b16 %v1424
    %v1743 = vunpack.c.h.b16 %v1424
    %v1744 = vunpack.c.l.b16 %v1425
    %v1745 = vunpack.c.h.b16 %v1425
    %v1746 = vunpack.c.l.b16 %v1426
    %v1747 = vunpack.c.h.b16 %v1426
    %v1748 = vunpack.c.l.b16 %v1427
    %v1749 = vunpack.c.h.b16 %v1427
    %v1750 = vpack.c.b16 %v1554, %v1550
    %v1751 = vpack.c.b16 %v1555, %v1551
    %v1752 = vpack.c.b16 %v1556, %v1552
    %v1753 = vpack.c.b16 %v1557, %v1553
    %v1754 = vpack.c.b16 %v1562, %v1558
    %v1755 = vpack.c.b16 %v1563, %v1559
    %v1756 = vpack.c.b16 %v1564, %v1560
    %v1757 = vpack.c.b16 %v1565, %v1561
    %v1758 = vpack.c.b16 %v1570, %v1566
    %v1759 = vpack.c.b16 %v1571, %v1567
    %v1760 = vpack.c.b16 %v1572, %v1568
    %v1761 = vpack.c.b16 %v1573, %v1569
    %v1762 = vpack.c.b16 %v1578, %v1574
    %v1763 = vpack.c.b16 %v1579, %v1575
    %v1764 = vpack.c.b16 %v1580, %v1576
    %v1765 = vpack.c.b16 %v1581, %v1577
    %v1766 = vpack.c.b16 %v1586, %v1582
    %v1767 = vpack.c.b16 %v1587, %v1583
    %v1768 = vpack.c.b16 %v1588, %v1584
    %v1769 = vpack.c.b16 %v1589, %v1585
    %v1770 = vpack.c.b16 %v1594, %v1590
    %v1771 = vpack.c.b16 %v1595, %v1591
    %v1772 = vpack.c.b16 %v1596, %v1592
    %v1773 = vpack.c.b16 %v1597, %v1593
    %v1774 = vpack.c.b16 %v1602, %v1598
    %v1775 = vpack.c.b16 %v1603, %v1599
    %v1776 = vpack.c.b16 %v1604, %v1600
    %v1777 = vpack.c.b16 %v1605, %v1601
    %v1778 = vpack.c.b16 %v1610, %v1606
    %v1779 = vpack.c.b16 %v1611, %v1607
    %v1780 = vpack.c.b16 %v1612, %v1608
    %v1781 = vpack.c.b16 %v1613, %v1609
    %v1782 = vpack.c.b16 %v1618, %v1614
    %v1783 = vpack.c.b16 %v1619, %v1615
    %v1784 = vpack.c.b16 %v1620, %v1616
    %v1785 = vpack.c.b16 %v1621, %v1617
    %v1786 = vpack.c.b16 %v1626, %v1622
    %v1787 = vpack.c.b16 %v1627, %v1623
    %v1788 = vpack.c.b16 %v1628, %v1624
    %v1789 = vpack.c.b16 %v1629, %v1625
    %v1790 = vpack.c.b16 %v1634, %v1630
    %v1791 = vpack.c.b16 %v1635, %v1631
    %v1792 = vpack.c.b16 %v1636, %v1632
    %v1793 = vpack.c.b16 %v1637, %v1633
    %v1794 = vpack.c.b16 %v1642, %v1638
    %v1795 = vpack.c.b16 %v1643, %v1639
    %v1796 = vpack.c.b16 %v1644, %v1640
    %v1797 = vpack.c.b16 %v1645, %v1641
    %v1798 = vpack.c.b16 %v1650, %v1646
    %v1799 = vpack.c.b16 %v1651, %v1647
    %v1800 = vpack.c.b16 %v1652, %v1648
    %v1801 = vpack.c.b16 %v1653, %v1649
    %v1802 = vpack.c.b16 %v1658, %v1654
    %v1803 = vpack.c.b16 %v1659, %v1655
    %v1804 = vpack.c.b16 %v1660, %v1656
    %v1805 = vpack.c.b16 %v1661, %v1657
    %v1806 = vpack.c.b16 %v1666, %v1662
    %v1807 = vpack.c.b16 %v1667, %v1663
    %v1808 = vpack.c.b16 %v1668, %v1664
    %v1809 = vpack.c.b16 %v1669, %v1665
    %v1810 = vpack.c.b16 %v1674, %v1670
    %v1811 = vpack.c.b16 %v1675, %v1671
    %v1812 = vpack.c.b16 %v1676, %v1672
    %v1813 = vpack.c.b16 %v1677, %v1673
    %v1814 = vpack.c.b16 %v1682, %v1678
    %v1815 = vpack.c.b16 %v1683, %v1679
    %v1816 = vpack.c.b16 %v1684, %v1680
    %v1817 = vpack.c.b16 %v1685, %v1681
    %v1818 = vpack.c.b16 %v1690, %v1686
    %v1819 = vpack.c.b16 %v1691, %v1687
    %v1820 = vpack.c.b16 %v1692, %v1688
    %v1821 = vpack.c.b16 %v1693, %v1689
    %v1822 = vpack.c.b16 %v1698, %v1694
    %v1823 = vpack.c.b16 %v1699, %v1695
    %v1824 = vpack.c.b16 %v1700, %v1696
    %v1825 = vpack.c.b16 %v1701, %v1697
    %v1826 = vpack.c.b16 %v1706, %v1702
    %v1827 = vpack.c.b16 %v1707, %v1703
    %v1828 = vpack.c.b16 %v1708, %v1704
    %v1829 = vpack.c.b16 %v1709, %v1705
    %v1830 = vpack.c.b16 %v1714, %v1710
    %v1831 = vpack.c.b16 %v1715, %v1711
    %v1832 = vpack.c.b16 %v1716, %v1712
    %v1833 = vpack.c.b16 %v1717, %v1713
    %v1834 = vpack.c.b16 %v1722, %v1718
    %v1835 = vpack.c.b16 %v1723, %v1719
    %v1836 = vpack.c.b16 %v1724, %v1720
    %v1837 = vpack.c.b16 %v1725, %v1721
    %v1838 = vpack.c.b16 %v1730, %v1726
    %v1839 = vpack.c.b16 %v1731, %v1727
    %v1840 = vpack.c.b16 %v1732, %v1728
    %v1841 = vpack.c.b16 %v1733, %v1729
    %v1842 = vpack.c.b16 %v1738, %v1734
    %v1843 = vpack.c.b16 %v1739, %v1735
    %v1844 = vpack.c.b16 %v1740, %v1736
    %v1845 = vpack.c.b16 %v1741, %v1737
    %v1846 = vpack.c.b16 %v1746, %v1742
    %v1847 = vpack.c.b16 %v1747, %v1743
    %v1848 = vpack.c.b16 %v1748, %v1744
    %v1849 = vpack.c.b16 %v1749, %v1745
    %1950 = vmatprep.subr.bf16.mxu0 %v1751
    %1951 = vmatpush1.bf16.msra.mxu0 %v1750
    %1952 = vmatprep.subr.bf16.mxu0 %v1755
    %1953 = vmatpush1.bf16.msra.mxu0 %v1754
    %1954 = vmatprep.subr.bf16.mxu0 %v1759
    %1955 = vmatpush1.bf16.msra.mxu0 %v1758
    %1956 = vmatprep.subr.bf16.mxu0 %v1763
    %1957 = vmatpush1.bf16.msra.mxu0 %v1762
    %1958 = vmatprep.subr.bf16.mxu0 %v1767
    %1959 = vmatpush1.bf16.msra.mxu0 %v1766
    %1960 = vmatprep.subr.bf16.mxu0 %v1771
    %1961 = vmatpush1.bf16.msra.mxu0 %v1770
    %1962 = vmatprep.subr.bf16.mxu0 %v1775
    %1963 = vmatpush1.bf16.msra.mxu0 %v1774
    %1964 = vmatprep.subr.bf16.mxu0 %v1779
    %1965 = vmatpush1.bf16.msra.mxu0 %v1778
    %1966 = vmatprep.subr.bf16.mxu0 %v1783
    %1967 = vmatpush1.bf16.msra.mxu0 %v1782
    %1968 = vmatprep.subr.bf16.mxu0 %v1787
    %1969 = vmatpush1.bf16.msra.mxu0 %v1786
    %1970 = vmatprep.subr.bf16.mxu0 %v1791
    %1971 = vmatpush1.bf16.msra.mxu0 %v1790
    %1972 = vmatprep.subr.bf16.mxu0 %v1795
    %1973 = vmatpush1.bf16.msra.mxu0 %v1794
    %1974 = vmatprep.subr.bf16.mxu0 %v1799
    %1975 = vmatpush1.bf16.msra.mxu0 %v1798
    %1976 = vmatprep.subr.bf16.mxu0 %v1803
    %1977 = vmatpush1.bf16.msra.mxu0 %v1802
    %1978 = vmatprep.subr.bf16.mxu0 %v1807
    %1979 = vmatpush1.bf16.msra.mxu0 %v1806
    %1980 = vmatprep.subr.bf16.mxu0 %v1811
    %1981 = vmatpush1.bf16.msra.mxu0 %v1810
    %1982 = vmatprep.mubr.bf16.mxu0 %v535
    %1983 = vmatmul.mubr.bf16.gmra.mrb[0].mxu0 %v534
    %v1984 = vpop.f32.mrb[0].mxu0
    %v1985 = vadd.f32 %v1433, %v1984
    %v1986 = vpop.f32.mrb[0].mxu0
    %v1987 = vadd.f32 %v1437, %v1986
    %v1988 = vpop.f32.mrb[0].mxu0
    %v1989 = vpop.f32.mrb[0].mxu0
    %1990 = vdwg.mxu0
    %1991 = vmatprep.subr.bf16.mxu0 %v1815
    %1992 = vmatpush1.bf16.msra.mxu0 %v1814
    %1993 = vmatprep.subr.bf16.mxu0 %v1819
    %1994 = vmatpush1.bf16.msra.mxu0 %v1818
    %1995 = vmatprep.subr.bf16.mxu0 %v1823
    %1996 = vmatpush1.bf16.msra.mxu0 %v1822
    %1997 = vmatprep.subr.bf16.mxu0 %v1827
    %1998 = vmatpush1.bf16.msra.mxu0 %v1826
    %1999 = vmatprep.subr.bf16.mxu0 %v1831
    %2000 = vmatpush1.bf16.msra.mxu0 %v1830
    %2001 = vmatprep.subr.bf16.mxu0 %v1835
    %2002 = vmatpush1.bf16.msra.mxu0 %v1834
    %2003 = vmatprep.subr.bf16.mxu0 %v1839
    %2004 = vmatpush1.bf16.msra.mxu0 %v1838
    %2005 = vmatprep.subr.bf16.mxu0 %v1843
    %2006 = vmatpush1.bf16.msra.mxu0 %v1842
    %2007 = vmatprep.subr.bf16.mxu0 %v1847
    %2008 = vmatpush1.bf16.msra.mxu0 %v1846
    %2009 = vmatprep.subr.bf16.mxu0 0
    %2010 = vmatpush1.bf16.msra.mxu0 0
    %2011 = vmatprep.subr.bf16.mxu0 0
    %2012 = vmatpush1.bf16.msra.mxu0 0
    %2013 = vmatprep.subr.bf16.mxu0 0
    %2014 = vmatpush1.bf16.msra.mxu0 0
    %2015 = vmatprep.subr.bf16.mxu0 0
    %2016 = vmatpush1.bf16.msra.mxu0 0
    %2017 = vmatprep.subr.bf16.mxu0 0
    %2018 = vmatpush1.bf16.msra.mxu0 0
    %2019 = vmatprep.subr.bf16.mxu0 0
    %2020 = vmatpush1.bf16.msra.mxu0 0
    %2021 = vmatprep.subr.bf16.mxu0 0
    %2022 = vmatpush1.bf16.msra.mxu0 0
    %2023 = vmatprep.mubr.bf16.mxu0 %v1162
    %2024 = vmatmul.mubr.bf16.gmra.mrb[0].mxu0 %v536
    %v2025 = vpop.f32.mrb[0].mxu0
    %v2026 = vadd.f32 %v1985, %v2025
    %v2027 = vpop.f32.mrb[0].mxu0
    %v2028 = vadd.f32 %v1987, %v2027
    %v2029 = vpop.f32.mrb[0].mxu0
    %v2030 = vpop.f32.mrb[0].mxu0
    %2031 = vdwg.mxu0
    %2032 = vmatprep.subr.bf16.mxu0 %v1753
    %2033 = vmatpush1.bf16.msra.mxu0 %v1752
    %2034 = vmatprep.subr.bf16.mxu0 %v1757
    %2035 = vmatpush1.bf16.msra.mxu0 %v1756
    %2036 = vmatprep.subr.bf16.mxu0 %v1761
    %2037 = vmatpush1.bf16.msra.mxu0 %v1760
    %2038 = vmatprep.subr.bf16.mxu0 %v1765
    %2039 = vmatpush1.bf16.msra.mxu0 %v1764
    %2040 = vmatprep.subr.bf16.mxu0 %v1769
    %2041 = vmatpush1.bf16.msra.mxu0 %v1768
    %2042 = vmatprep.subr.bf16.mxu0 %v1773
    %2043 = vmatpush1.bf16.msra.mxu0 %v1772
    %2044 = vmatprep.subr.bf16.mxu0 %v1777
    %2045 = vmatpush1.bf16.msra.mxu0 %v1776
    %2046 = vmatprep.subr.bf16.mxu0 %v1781
    %2047 = vmatpush1.bf16.msra.mxu0 %v1780
    %2048 = vmatprep.subr.bf16.mxu0 %v1785
    %2049 = vmatpush1.bf16.msra.mxu0 %v1784
    %2050 = vmatprep.subr.bf16.mxu0 %v1789
    %2051 = vmatpush1.bf16.msra.mxu0 %v1788
    %2052 = vmatprep.subr.bf16.mxu0 %v1793
    %2053 = vmatpush1.bf16.msra.mxu0 %v1792
    %2054 = vmatprep.subr.bf16.mxu0 %v1797
    %2055 = vmatpush1.bf16.msra.mxu0 %v1796
    %2056 = vmatprep.subr.bf16.mxu0 %v1801
    %2057 = vmatpush1.bf16.msra.mxu0 %v1800
    %2058 = vmatprep.subr.bf16.mxu0 %v1805
    %2059 = vmatpush1.bf16.msra.mxu0 %v1804
    %2060 = vmatprep.subr.bf16.mxu0 %v1809
    %2061 = vmatpush1.bf16.msra.mxu0 %v1808
    %2062 = vmatprep.subr.bf16.mxu0 %v1813
    %2063 = vmatpush1.bf16.msra.mxu0 %v1812
    %2064 = vmatprep.mubr.bf16.mxu0 %v535
    %2065 = vmatmul.mubr.bf16.gmra.mrb[0].mxu0 %v534
    %v2066 = vpop.f32.mrb[0].mxu0
    %v2067 = vadd.f32 %v1441, %v2066
    %v2068 = vpop.f32.mrb[0].mxu0
    %v2069 = vadd.f32 %v1445, %v2068
    %v2070 = vpop.f32.mrb[0].mxu0
    %v2071 = vpop.f32.mrb[0].mxu0
    %2072 = vdwg.mxu0
    %2073 = vmatprep.subr.bf16.mxu0 %v1817
    %2074 = vmatpush1.bf16.msra.mxu0 %v1816
    %2075 = vmatprep.subr.bf16.mxu0 %v1821
    %2076 = vmatpush1.bf16.msra.mxu0 %v1820
    %2077 = vmatprep.subr.bf16.mxu0 %v1825
    %2078 = vmatpush1.bf16.msra.mxu0 %v1824
    %2079 = vmatprep.subr.bf16.mxu0 %v1829
    %2080 = vmatpush1.bf16.msra.mxu0 %v1828
    %2081 = vmatprep.subr.bf16.mxu0 %v1833
    %2082 = vmatpush1.bf16.msra.mxu0 %v1832
    %2083 = vmatprep.subr.bf16.mxu0 %v1837
    %2084 = vmatpush1.bf16.msra.mxu0 %v1836
    %2085 = vmatprep.subr.bf16.mxu0 %v1841
    %2086 = vmatpush1.bf16.msra.mxu0 %v1840
    %2087 = vmatprep.subr.bf16.mxu0 %v1845
    %2088 = vmatpush1.bf16.msra.mxu0 %v1844
    %2089 = vmatprep.subr.bf16.mxu0 %v1849
    %2090 = vmatpush1.bf16.msra.mxu0 %v1848
    %2091 = vmatprep.subr.bf16.mxu0 0
    %2092 = vmatpush1.bf16.msra.mxu0 0
    %2093 = vmatprep.subr.bf16.mxu0 0
    %2094 = vmatpush1.bf16.msra.mxu0 0
    %2095 = vmatprep.subr.bf16.mxu0 0
    %2096 = vmatpush1.bf16.msra.mxu0 0
    %2097 = vmatprep.subr.bf16.mxu0 0
    %2098 = vmatpush1.bf16.msra.mxu0 0
    %2099 = vmatprep.subr.bf16.mxu0 0
    %2100 = vmatpush1.bf16.msra.mxu0 0
    %2101 = vmatprep.subr.bf16.mxu0 0
    %2102 = vmatpush1.bf16.msra.mxu0 0
    %2103 = vmatprep.subr.bf16.mxu0 0
    %2104 = vmatpush1.bf16.msra.mxu0 0
    %2105 = vmatprep.mubr.bf16.mxu0 %v1162
    %2106 = vmatmul.mubr.bf16.gmra.mrb[0].mxu0 %v536
    %v2107 = vpop.f32.mrb[0].mxu0
    %v2108 = vadd.f32 %v2067, %v2107
    %v2109 = vpop.f32.mrb[0].mxu0
    %v2110 = vadd.f32 %v2069, %v2109
    %v2111 = vpop.f32.mrb[0].mxu0
    %v2112 = vpop.f32.mrb[0].mxu0
    %2113 = vdwg.mxu0
    %v2114 = vld [vmem:[#allocation10] sm:$0xff]
    %v2115 = vld [vmem:[#allocation10 + $0x8] sm:$0xff]
    %v2116 = vld [vmem:[#allocation10 + $0x10] sm:$0xff]
    %v2117 = vld [vmem:[#allocation10 + $0x18] sm:$0xff]
    %v2118 = vld [vmem:[#allocation10 + $0x20] sm:$0xff]
    %v2119 = vld [vmem:[#allocation10 + $0x28] sm:$0xff]
    %v2120 = vld [vmem:[#allocation10 + $0x30] sm:$0xff]
    %v2121 = vld [vmem:[#allocation10 + $0x38] sm:$0xff]
    %v2122 = vld [vmem:[#allocation10 + $0x40] sm:$0xff]
    %v2123 = vld [vmem:[#allocation10 + $0x48] sm:$0xff]
    %v2124 = vld [vmem:[#allocation10 + $0x50] sm:$0xff]
    %v2125 = vld [vmem:[#allocation10 + $0x58] sm:$0xff]
    %v2126 = vld [vmem:[#allocation10 + $0x60] sm:$0xff]
    %v2127 = vld [vmem:[#allocation10 + $0x68] sm:$0xff]
    %v2128 = vld [vmem:[#allocation10 + $0x70] sm:$0xff]
    %v2129 = vld [vmem:[#allocation10 + $0x78] sm:$0xff]
    %v2130 = vld [vmem:[#allocation10 + $0x80] sm:$0xff]
    %v2131 = vld [vmem:[#allocation10 + $0x88] sm:$0xff]
    %v2132 = vld [vmem:[#allocation10 + $0x90] sm:$0xff]
    %v2133 = vld [vmem:[#allocation10 + $0x98] sm:$0xff]
    %v2134 = vld [vmem:[#allocation10 + $0xa0] sm:$0xff]
    %v2135 = vld [vmem:[#allocation10 + $0xa8] sm:$0xff]
    %v2136 = vld [vmem:[#allocation10 + $0xb0] sm:$0xff]
    %v2137 = vld [vmem:[#allocation10 + $0xb8] sm:$0xff]
    %v2138 = vld [vmem:[#allocation10 + $0xc0] sm:$0xff]
    %v2139 = vld [vmem:[#allocation10 + $0xc8] sm:$0xff]
    %v2140 = vld [vmem:[#allocation10 + $0xd0] sm:$0xff]
    %v2141 = vld [vmem:[#allocation10 + $0xd8] sm:$0xff]
    %v2142 = vld [vmem:[#allocation10 + $0xe0] sm:$0xff]
    %v2143 = vld [vmem:[#allocation10 + $0xe8] sm:$0xff]
    %v2144 = vld [vmem:[#allocation10 + $0xf0] sm:$0xff]
    %v2145 = vld [vmem:[#allocation10 + $0xf8] sm:$0xff]
    %v2146 = vld [vmem:[#allocation10 + $0x100] sm:$0xff]
    %v2147 = vld [vmem:[#allocation10 + $0x108] sm:$0xff]
    %v2148 = vld [vmem:[#allocation10 + $0x110] sm:$0xff]
    %v2149 = vld [vmem:[#allocation10 + $0x118] sm:$0xff]
    %v2150 = vld [vmem:[#allocation10 + $0x120] sm:$0xff]
    %v2151 = vld [vmem:[#allocation10 + $0x128] sm:$0xff]
    %v2152 = vld [vmem:[#allocation10 + $0x130] sm:$0xff]
    %v2153 = vld [vmem:[#allocation10 + $0x138] sm:$0xff]
    %v2154 = vld [vmem:[#allocation10 + $0x140] sm:$0xff]
    %v2155 = vld [vmem:[#allocation10 + $0x148] sm:$0xff]
    %v2156 = vld [vmem:[#allocation10 + $0x150] sm:$0xff]
    %v2157 = vld [vmem:[#allocation10 + $0x158] sm:$0xff]
    %v2158 = vld [vmem:[#allocation10 + $0x160] sm:$0xff]
    %v2159 = vld [vmem:[#allocation10 + $0x168] sm:$0xff]
    %v2160 = vld [vmem:[#allocation10 + $0x170] sm:$0xff]
    %v2161 = vld [vmem:[#allocation10 + $0x178] sm:$0xff]
    %v2162 = vld [vmem:[#allocation10 + $0x180] sm:$0xff]
    %v2163 = vld [vmem:[#allocation10 + $0x188] sm:$0xff]
    %v2164 = vld [vmem:[#allocation10 + $0x190] sm:$0xff]
    %v2165 = vld [vmem:[#allocation10 + $0x198] sm:$0xff]
    %v2166 = vld [vmem:[#allocation10 + $0x1a0] sm:$0xff]
    %v2167 = vld [vmem:[#allocation10 + $0x1a8] sm:$0xff]
    %v2168 = vld [vmem:[#allocation10 + $0x1b0] sm:$0xff]
    %v2169 = vld [vmem:[#allocation10 + $0x1b8] sm:$0xff]
    %v2170 = vld [vmem:[#allocation10 + $0x1c0] sm:$0xff]
    %v2171 = vld [vmem:[#allocation10 + $0x1c8] sm:$0xff]
    %v2172 = vld [vmem:[#allocation10 + $0x1d0] sm:$0xff]
    %v2173 = vld [vmem:[#allocation10 + $0x1d8] sm:$0xff]
    %v2174 = vld [vmem:[#allocation10 + $0x1e0] sm:$0xff]
    %v2175 = vld [vmem:[#allocation10 + $0x1e8] sm:$0xff]
    %v2176 = vld [vmem:[#allocation10 + $0x1f0] sm:$0xff]
    %v2177 = vld [vmem:[#allocation10 + $0x1f8] sm:$0xff]
    %v2178 = vld [vmem:[#allocation10 + $0x200] sm:$0xff]
    %v2179 = vld [vmem:[#allocation10 + $0x208] sm:$0xff]
    %v2180 = vld [vmem:[#allocation10 + $0x210] sm:$0xff]
    %v2181 = vld [vmem:[#allocation10 + $0x218] sm:$0xff]
    %v2182 = vld [vmem:[#allocation10 + $0x220] sm:$0xff]
    %v2183 = vld [vmem:[#allocation10 + $0x228] sm:$0xff]
    %v2184 = vld [vmem:[#allocation10 + $0x230] sm:$0xff]
    %v2185 = vld [vmem:[#allocation10 + $0x238] sm:$0xff]
    %v2186 = vld [vmem:[#allocation10 + $0x240] sm:$0xff]
    %v2187 = vld [vmem:[#allocation10 + $0x248] sm:$0xff]
    %v2188 = vld [vmem:[#allocation10 + $0x250] sm:$0xff]
    %v2189 = vld [vmem:[#allocation10 + $0x258] sm:$0xff]
    %v2190 = vld [vmem:[#allocation10 + $0x260] sm:$0xff]
    %v2191 = vld [vmem:[#allocation10 + $0x268] sm:$0xff]
    %v2192 = vld [vmem:[#allocation10 + $0x270] sm:$0xff]
    %v2193 = vld [vmem:[#allocation10 + $0x278] sm:$0xff]
    %v2194 = vld [vmem:[#allocation10 + $0x280] sm:$0xff]
    %v2195 = vld [vmem:[#allocation10 + $0x288] sm:$0xff]
    %v2196 = vld [vmem:[#allocation10 + $0x290] sm:$0xff]
    %v2197 = vld [vmem:[#allocation10 + $0x298] sm:$0xff]
    %v2198 = vld [vmem:[#allocation10 + $0x2a0] sm:$0xff]
    %v2199 = vld [vmem:[#allocation10 + $0x2a8] sm:$0xff]
    %v2200 = vld [vmem:[#allocation10 + $0x2b0] sm:$0xff]
    %v2201 = vld [vmem:[#allocation10 + $0x2b8] sm:$0xff]
    %v2202 = vld [vmem:[#allocation10 + $0x2c0] sm:$0xff]
    %v2203 = vld [vmem:[#allocation10 + $0x2c8] sm:$0xff]
    %v2204 = vld [vmem:[#allocation10 + $0x2d0] sm:$0xff]
    %v2205 = vld [vmem:[#allocation10 + $0x2d8] sm:$0xff]
    %v2206 = vld [vmem:[#allocation10 + $0x2e0] sm:$0xff]
    %v2207 = vld [vmem:[#allocation10 + $0x2e8] sm:$0xff]
    %v2208 = vld [vmem:[#allocation10 + $0x2f0] sm:$0xff]
    %v2209 = vld [vmem:[#allocation10 + $0x2f8] sm:$0xff]
    %v2210 = vld [vmem:[#allocation10 + $0x300] sm:$0xff]
    %v2211 = vld [vmem:[#allocation10 + $0x308] sm:$0xff]
    %v2212 = vld [vmem:[#allocation10 + $0x310] sm:$0xff]
    %v2213 = vld [vmem:[#allocation10 + $0x318] sm:$0xff]
    %v2214 = vld [vmem:[%s10] sm:$0xf]
    %v2216 = vlaneseq
    %v2217 = vshrl.u32 %v2216, 7
    %v2218 = vsub.s32 0, %v2217
    %v2219 = vrot.slane %v2214, %v2218
    %v2220 = vlaneseq
    %v2221 = vshrl.u32 %v2220, 7
    %v2222 = vsub.s32 1, %v2221
    %v2223 = vrot.slane %v2214, %v2222
    %v2224 = vlaneseq
    %v2225 = vshrl.u32 %v2224, 7
    %v2226 = vsub.s32 2, %v2225
    %v2227 = vrot.slane %v2214, %v2226
    %v2228 = vlaneseq
    %v2229 = vshrl.u32 %v2228, 7
    %v2230 = vsub.s32 3, %v2229
    %v2231 = vrot.slane %v2214, %v2230
    %v2336 = vunpack.c.l.b16 %v2114
    %v2337 = vunpack.c.h.b16 %v2114
    %v2338 = vunpack.c.l.b16 %v2115
    %v2339 = vunpack.c.h.b16 %v2115
    %v2340 = vunpack.c.l.b16 %v2116
    %v2341 = vunpack.c.h.b16 %v2116
    %v2342 = vunpack.c.l.b16 %v2117
    %v2343 = vunpack.c.h.b16 %v2117
    %v2344 = vunpack.c.l.b16 %v2118
    %v2345 = vunpack.c.h.b16 %v2118
    %v2346 = vunpack.c.l.b16 %v2119
    %v2347 = vunpack.c.h.b16 %v2119
    %v2348 = vunpack.c.l.b16 %v2120
    %v2349 = vunpack.c.h.b16 %v2120
    %v2350 = vunpack.c.l.b16 %v2121
    %v2351 = vunpack.c.h.b16 %v2121
    %v2352 = vunpack.c.l.b16 %v2122
    %v2353 = vunpack.c.h.b16 %v2122
    %v2354 = vunpack.c.l.b16 %v2123
    %v2355 = vunpack.c.h.b16 %v2123
    %v2356 = vunpack.c.l.b16 %v2124
    %v2357 = vunpack.c.h.b16 %v2124
    %v2358 = vunpack.c.l.b16 %v2125
    %v2359 = vunpack.c.h.b16 %v2125
    %v2360 = vunpack.c.l.b16 %v2126
    %v2361 = vunpack.c.h.b16 %v2126
    %v2362 = vunpack.c.l.b16 %v2127
    %v2363 = vunpack.c.h.b16 %v2127
    %v2364 = vunpack.c.l.b16 %v2128
    %v2365 = vunpack.c.h.b16 %v2128
    %v2366 = vunpack.c.l.b16 %v2129
    %v2367 = vunpack.c.h.b16 %v2129
    %v2368 = vunpack.c.l.b16 %v2130
    %v2369 = vunpack.c.h.b16 %v2130
    %v2370 = vunpack.c.l.b16 %v2131
    %v2371 = vunpack.c.h.b16 %v2131
    %v2372 = vunpack.c.l.b16 %v2132
    %v2373 = vunpack.c.h.b16 %v2132
    %v2374 = vunpack.c.l.b16 %v2133
    %v2375 = vunpack.c.h.b16 %v2133
    %v2376 = vunpack.c.l.b16 %v2134
    %v2377 = vunpack.c.h.b16 %v2134
    %v2378 = vunpack.c.l.b16 %v2135
    %v2379 = vunpack.c.h.b16 %v2135
    %v2380 = vunpack.c.l.b16 %v2136
    %v2381 = vunpack.c.h.b16 %v2136
    %v2382 = vunpack.c.l.b16 %v2137
    %v2383 = vunpack.c.h.b16 %v2137
    %v2384 = vunpack.c.l.b16 %v2138
    %v2385 = vunpack.c.h.b16 %v2138
    %v2386 = vunpack.c.l.b16 %v2139
    %v2387 = vunpack.c.h.b16 %v2139
    %v2388 = vunpack.c.l.b16 %v2140
    %v2389 = vunpack.c.h.b16 %v2140
    %v2390 = vunpack.c.l.b16 %v2141
    %v2391 = vunpack.c.h.b16 %v2141
    %v2392 = vunpack.c.l.b16 %v2142
    %v2393 = vunpack.c.h.b16 %v2142
    %v2394 = vunpack.c.l.b16 %v2143
    %v2395 = vunpack.c.h.b16 %v2143
    %v2396 = vunpack.c.l.b16 %v2144
    %v2397 = vunpack.c.h.b16 %v2144
    %v2398 = vunpack.c.l.b16 %v2145
    %v2399 = vunpack.c.h.b16 %v2145
    %v2400 = vunpack.c.l.b16 %v2146
    %v2401 = vunpack.c.h.b16 %v2146
    %v2402 = vunpack.c.l.b16 %v2147
    %v2403 = vunpack.c.h.b16 %v2147
    %v2404 = vunpack.c.l.b16 %v2148
    %v2405 = vunpack.c.h.b16 %v2148
    %v2406 = vunpack.c.l.b16 %v2149
    %v2407 = vunpack.c.h.b16 %v2149
    %v2408 = vunpack.c.l.b16 %v2150
    %v2409 = vunpack.c.h.b16 %v2150
    %v2410 = vunpack.c.l.b16 %v2151
    %v2411 = vunpack.c.h.b16 %v2151
    %v2412 = vunpack.c.l.b16 %v2152
    %v2413 = vunpack.c.h.b16 %v2152
    %v2414 = vunpack.c.l.b16 %v2153
    %v2415 = vunpack.c.h.b16 %v2153
    %v2416 = vunpack.c.l.b16 %v2154
    %v2417 = vunpack.c.h.b16 %v2154
    %v2418 = vunpack.c.l.b16 %v2155
    %v2419 = vunpack.c.h.b16 %v2155
    %v2420 = vunpack.c.l.b16 %v2156
    %v2421 = vunpack.c.h.b16 %v2156
    %v2422 = vunpack.c.l.b16 %v2157
    %v2423 = vunpack.c.h.b16 %v2157
    %v2424 = vunpack.c.l.b16 %v2158
    %v2425 = vunpack.c.h.b16 %v2158
    %v2426 = vunpack.c.l.b16 %v2159
    %v2427 = vunpack.c.h.b16 %v2159
    %v2428 = vunpack.c.l.b16 %v2160
    %v2429 = vunpack.c.h.b16 %v2160
    %v2430 = vunpack.c.l.b16 %v2161
    %v2431 = vunpack.c.h.b16 %v2161
    %v2432 = vunpack.c.l.b16 %v2162
    %v2433 = vunpack.c.h.b16 %v2162
    %v2434 = vunpack.c.l.b16 %v2163
    %v2435 = vunpack.c.h.b16 %v2163
    %v2436 = vunpack.c.l.b16 %v2164
    %v2437 = vunpack.c.h.b16 %v2164
    %v2438 = vunpack.c.l.b16 %v2165
    %v2439 = vunpack.c.h.b16 %v2165
    %v2440 = vunpack.c.l.b16 %v2166
    %v2441 = vunpack.c.h.b16 %v2166
    %v2442 = vunpack.c.l.b16 %v2167
    %v2443 = vunpack.c.h.b16 %v2167
    %v2444 = vunpack.c.l.b16 %v2168
    %v2445 = vunpack.c.h.b16 %v2168
    %v2446 = vunpack.c.l.b16 %v2169
    %v2447 = vunpack.c.h.b16 %v2169
    %v2448 = vunpack.c.l.b16 %v2170
    %v2449 = vunpack.c.h.b16 %v2170
    %v2450 = vunpack.c.l.b16 %v2171
    %v2451 = vunpack.c.h.b16 %v2171
    %v2452 = vunpack.c.l.b16 %v2172
    %v2453 = vunpack.c.h.b16 %v2172
    %v2454 = vunpack.c.l.b16 %v2173
    %v2455 = vunpack.c.h.b16 %v2173
    %v2456 = vunpack.c.l.b16 %v2174
    %v2457 = vunpack.c.h.b16 %v2174
    %v2458 = vunpack.c.l.b16 %v2175
    %v2459 = vunpack.c.h.b16 %v2175
    %v2460 = vunpack.c.l.b16 %v2176
    %v2461 = vunpack.c.h.b16 %v2176
    %v2462 = vunpack.c.l.b16 %v2177
    %v2463 = vunpack.c.h.b16 %v2177
    %v2464 = vunpack.c.l.b16 %v2178
    %v2465 = vunpack.c.h.b16 %v2178
    %v2466 = vunpack.c.l.b16 %v2179
    %v2467 = vunpack.c.h.b16 %v2179
    %v2468 = vunpack.c.l.b16 %v2180
    %v2469 = vunpack.c.h.b16 %v2180
    %v2470 = vunpack.c.l.b16 %v2181
    %v2471 = vunpack.c.h.b16 %v2181
    %v2472 = vunpack.c.l.b16 %v2182
    %v2473 = vunpack.c.h.b16 %v2182
    %v2474 = vunpack.c.l.b16 %v2183
    %v2475 = vunpack.c.h.b16 %v2183
    %v2476 = vunpack.c.l.b16 %v2184
    %v2477 = vunpack.c.h.b16 %v2184
    %v2478 = vunpack.c.l.b16 %v2185
    %v2479 = vunpack.c.h.b16 %v2185
    %v2480 = vunpack.c.l.b16 %v2186
    %v2481 = vunpack.c.h.b16 %v2186
    %v2482 = vunpack.c.l.b16 %v2187
    %v2483 = vunpack.c.h.b16 %v2187
    %v2484 = vunpack.c.l.b16 %v2188
    %v2485 = vunpack.c.h.b16 %v2188
    %v2486 = vunpack.c.l.b16 %v2189
    %v2487 = vunpack.c.h.b16 %v2189
    %v2488 = vunpack.c.l.b16 %v2190
    %v2489 = vunpack.c.h.b16 %v2190
    %v2490 = vunpack.c.l.b16 %v2191
    %v2491 = vunpack.c.h.b16 %v2191
    %v2492 = vunpack.c.l.b16 %v2192
    %v2493 = vunpack.c.h.b16 %v2192
    %v2494 = vunpack.c.l.b16 %v2193
    %v2495 = vunpack.c.h.b16 %v2193
    %v2496 = vunpack.c.l.b16 %v2194
    %v2497 = vunpack.c.h.b16 %v2194
    %v2498 = vunpack.c.l.b16 %v2195
    %v2499 = vunpack.c.h.b16 %v2195
    %v2500 = vunpack.c.l.b16 %v2196
    %v2501 = vunpack.c.h.b16 %v2196
    %v2502 = vunpack.c.l.b16 %v2197
    %v2503 = vunpack.c.h.b16 %v2197
    %v2504 = vunpack.c.l.b16 %v2198
    %v2505 = vunpack.c.h.b16 %v2198
    %v2506 = vunpack.c.l.b16 %v2199
    %v2507 = vunpack.c.h.b16 %v2199
    %v2508 = vunpack.c.l.b16 %v2200
    %v2509 = vunpack.c.h.b16 %v2200
    %v2510 = vunpack.c.l.b16 %v2201
    %v2511 = vunpack.c.h.b16 %v2201
    %v2512 = vunpack.c.l.b16 %v2202
    %v2513 = vunpack.c.h.b16 %v2202
    %v2514 = vunpack.c.l.b16 %v2203
    %v2515 = vunpack.c.h.b16 %v2203
    %v2516 = vunpack.c.l.b16 %v2204
    %v2517 = vunpack.c.h.b16 %v2204
    %v2518 = vunpack.c.l.b16 %v2205
    %v2519 = vunpack.c.h.b16 %v2205
    %v2520 = vunpack.c.l.b16 %v2206
    %v2521 = vunpack.c.h.b16 %v2206
    %v2522 = vunpack.c.l.b16 %v2207
    %v2523 = vunpack.c.h.b16 %v2207
    %v2524 = vunpack.c.l.b16 %v2208
    %v2525 = vunpack.c.h.b16 %v2208
    %v2526 = vunpack.c.l.b16 %v2209
    %v2527 = vunpack.c.h.b16 %v2209
    %v2528 = vunpack.c.l.b16 %v2210
    %v2529 = vunpack.c.h.b16 %v2210
    %v2530 = vunpack.c.l.b16 %v2211
    %v2531 = vunpack.c.h.b16 %v2211
    %v2532 = vunpack.c.l.b16 %v2212
    %v2533 = vunpack.c.h.b16 %v2212
    %v2534 = vunpack.c.l.b16 %v2213
    %v2535 = vunpack.c.h.b16 %v2213
    %v2536 = vpack.c.b16 %v2340, %v2336
    %v2537 = vpack.c.b16 %v2341, %v2337
    %v2538 = vpack.c.b16 %v2342, %v2338
    %v2539 = vpack.c.b16 %v2343, %v2339
    %v2540 = vpack.c.b16 %v2348, %v2344
    %v2541 = vpack.c.b16 %v2349, %v2345
    %v2542 = vpack.c.b16 %v2350, %v2346
    %v2543 = vpack.c.b16 %v2351, %v2347
    %v2544 = vpack.c.b16 %v2356, %v2352
    %v2545 = vpack.c.b16 %v2357, %v2353
    %v2546 = vpack.c.b16 %v2358, %v2354
    %v2547 = vpack.c.b16 %v2359, %v2355
    %v2548 = vpack.c.b16 %v2364, %v2360
    %v2549 = vpack.c.b16 %v2365, %v2361
    %v2550 = vpack.c.b16 %v2366, %v2362
    %v2551 = vpack.c.b16 %v2367, %v2363
    %v2552 = vpack.c.b16 %v2372, %v2368
    %v2553 = vpack.c.b16 %v2373, %v2369
    %v2554 = vpack.c.b16 %v2374, %v2370
    %v2555 = vpack.c.b16 %v2375, %v2371
    %v2556 = vpack.c.b16 %v2380, %v2376
    %v2557 = vpack.c.b16 %v2381, %v2377
    %v2558 = vpack.c.b16 %v2382, %v2378
    %v2559 = vpack.c.b16 %v2383, %v2379
    %v2560 = vpack.c.b16 %v2388, %v2384
    %v2561 = vpack.c.b16 %v2389, %v2385
    %v2562 = vpack.c.b16 %v2390, %v2386
    %v2563 = vpack.c.b16 %v2391, %v2387
    %v2564 = vpack.c.b16 %v2396, %v2392
    %v2565 = vpack.c.b16 %v2397, %v2393
    %v2566 = vpack.c.b16 %v2398, %v2394
    %v2567 = vpack.c.b16 %v2399, %v2395
    %v2568 = vpack.c.b16 %v2404, %v2400
    %v2569 = vpack.c.b16 %v2405, %v2401
    %v2570 = vpack.c.b16 %v2406, %v2402
    %v2571 = vpack.c.b16 %v2407, %v2403
    %v2572 = vpack.c.b16 %v2412, %v2408
    %v2573 = vpack.c.b16 %v2413, %v2409
    %v2574 = vpack.c.b16 %v2414, %v2410
    %v2575 = vpack.c.b16 %v2415, %v2411
    %v2576 = vpack.c.b16 %v2420, %v2416
    %v2577 = vpack.c.b16 %v2421, %v2417
    %v2578 = vpack.c.b16 %v2422, %v2418
    %v2579 = vpack.c.b16 %v2423, %v2419
    %v2580 = vpack.c.b16 %v2428, %v2424
    %v2581 = vpack.c.b16 %v2429, %v2425
    %v2582 = vpack.c.b16 %v2430, %v2426
    %v2583 = vpack.c.b16 %v2431, %v2427
    %v2584 = vpack.c.b16 %v2436, %v2432
    %v2585 = vpack.c.b16 %v2437, %v2433
    %v2586 = vpack.c.b16 %v2438, %v2434
    %v2587 = vpack.c.b16 %v2439, %v2435
    %v2588 = vpack.c.b16 %v2444, %v2440
    %v2589 = vpack.c.b16 %v2445, %v2441
    %v2590 = vpack.c.b16 %v2446, %v2442
    %v2591 = vpack.c.b16 %v2447, %v2443
    %v2592 = vpack.c.b16 %v2452, %v2448
    %v2593 = vpack.c.b16 %v2453, %v2449
    %v2594 = vpack.c.b16 %v2454, %v2450
    %v2595 = vpack.c.b16 %v2455, %v2451
    %v2596 = vpack.c.b16 %v2460, %v2456
    %v2597 = vpack.c.b16 %v2461, %v2457
    %v2598 = vpack.c.b16 %v2462, %v2458
    %v2599 = vpack.c.b16 %v2463, %v2459
    %v2600 = vpack.c.b16 %v2468, %v2464
    %v2601 = vpack.c.b16 %v2469, %v2465
    %v2602 = vpack.c.b16 %v2470, %v2466
    %v2603 = vpack.c.b16 %v2471, %v2467
    %v2604 = vpack.c.b16 %v2476, %v2472
    %v2605 = vpack.c.b16 %v2477, %v2473
    %v2606 = vpack.c.b16 %v2478, %v2474
    %v2607 = vpack.c.b16 %v2479, %v2475
    %v2608 = vpack.c.b16 %v2484, %v2480
    %v2609 = vpack.c.b16 %v2485, %v2481
    %v2610 = vpack.c.b16 %v2486, %v2482
    %v2611 = vpack.c.b16 %v2487, %v2483
    %v2612 = vpack.c.b16 %v2492, %v2488
    %v2613 = vpack.c.b16 %v2493, %v2489
    %v2614 = vpack.c.b16 %v2494, %v2490
    %v2615 = vpack.c.b16 %v2495, %v2491
    %v2616 = vpack.c.b16 %v2500, %v2496
    %v2617 = vpack.c.b16 %v2501, %v2497
    %v2618 = vpack.c.b16 %v2502, %v2498
    %v2619 = vpack.c.b16 %v2503, %v2499
    %v2620 = vpack.c.b16 %v2508, %v2504
    %v2621 = vpack.c.b16 %v2509, %v2505
    %v2622 = vpack.c.b16 %v2510, %v2506
    %v2623 = vpack.c.b16 %v2511, %v2507
    %v2624 = vpack.c.b16 %v2516, %v2512
    %v2625 = vpack.c.b16 %v2517, %v2513
    %v2626 = vpack.c.b16 %v2518, %v2514
    %v2627 = vpack.c.b16 %v2519, %v2515
    %v2628 = vpack.c.b16 %v2524, %v2520
    %v2629 = vpack.c.b16 %v2525, %v2521
    %v2630 = vpack.c.b16 %v2526, %v2522
    %v2631 = vpack.c.b16 %v2527, %v2523
    %v2632 = vpack.c.b16 %v2532, %v2528
    %v2633 = vpack.c.b16 %v2533, %v2529
    %v2634 = vpack.c.b16 %v2534, %v2530
    %v2635 = vpack.c.b16 %v2535, %v2531
    %2736 = vmatprep.subr.bf16.mxu0 %v2537
    %2737 = vmatpush1.bf16.msra.mxu0 %v2536
    %2738 = vmatprep.subr.bf16.mxu0 %v2541
    %2739 = vmatpush1.bf16.msra.mxu0 %v2540
    %2740 = vmatprep.subr.bf16.mxu0 %v2545
    %2741 = vmatpush1.bf16.msra.mxu0 %v2544
    %2742 = vmatprep.subr.bf16.mxu0 %v2549
    %2743 = vmatpush1.bf16.msra.mxu0 %v2548
    %2744 = vmatprep.subr.bf16.mxu0 %v2553
    %2745 = vmatpush1.bf16.msra.mxu0 %v2552
    %2746 = vmatprep.subr.bf16.mxu0 %v2557
    %2747 = vmatpush1.bf16.msra.mxu0 %v2556
    %2748 = vmatprep.subr.bf16.mxu0 %v2561
    %2749 = vmatpush1.bf16.msra.mxu0 %v2560
    %2750 = vmatprep.subr.bf16.mxu0 %v2565
    %2751 = vmatpush1.bf16.msra.mxu0 %v2564
    %2752 = vmatprep.subr.bf16.mxu0 %v2569
    %2753 = vmatpush1.bf16.msra.mxu0 %v2568
    %2754 = vmatprep.subr.bf16.mxu0 %v2573
    %2755 = vmatpush1.bf16.msra.mxu0 %v2572
    %2756 = vmatprep.subr.bf16.mxu0 %v2577
    %2757 = vmatpush1.bf16.msra.mxu0 %v2576
    %2758 = vmatprep.subr.bf16.mxu0 %v2581
    %2759 = vmatpush1.bf16.msra.mxu0 %v2580
    %2760 = vmatprep.subr.bf16.mxu0 %v2585
    %2761 = vmatpush1.bf16.msra.mxu0 %v2584
    %2762 = vmatprep.subr.bf16.mxu0 %v2589
    %2763 = vmatpush1.bf16.msra.mxu0 %v2588
    %2764 = vmatprep.subr.bf16.mxu0 %v2593
    %2765 = vmatpush1.bf16.msra.mxu0 %v2592
    %2766 = vmatprep.subr.bf16.mxu0 %v2597
    %2767 = vmatpush1.bf16.msra.mxu0 %v2596
    %2768 = vmatprep.mubr.bf16.mxu0 %v535
    %2769 = vmatmul.mubr.bf16.gmra.mrb[0].mxu0 %v534
    %v2770 = vpop.f32.mrb[0].mxu0
    %v2771 = vadd.f32 %v2219, %v2770
    %v2772 = vpop.f32.mrb[0].mxu0
    %v2773 = vadd.f32 %v2223, %v2772
    %v2774 = vpop.f32.mrb[0].mxu0
    %v2775 = vpop.f32.mrb[0].mxu0
    %2776 = vdwg.mxu0
    %2777 = vmatprep.subr.bf16.mxu0 %v2601
    %2778 = vmatpush1.bf16.msra.mxu0 %v2600
    %2779 = vmatprep.subr.bf16.mxu0 %v2605
    %2780 = vmatpush1.bf16.msra.mxu0 %v2604
    %2781 = vmatprep.subr.bf16.mxu0 %v2609
    %2782 = vmatpush1.bf16.msra.mxu0 %v2608
    %2783 = vmatprep.subr.bf16.mxu0 %v2613
    %2784 = vmatpush1.bf16.msra.mxu0 %v2612
    %2785 = vmatprep.subr.bf16.mxu0 %v2617
    %2786 = vmatpush1.bf16.msra.mxu0 %v2616
    %2787 = vmatprep.subr.bf16.mxu0 %v2621
    %2788 = vmatpush1.bf16.msra.mxu0 %v2620
    %2789 = vmatprep.subr.bf16.mxu0 %v2625
    %2790 = vmatpush1.bf16.msra.mxu0 %v2624
    %2791 = vmatprep.subr.bf16.mxu0 %v2629
    %2792 = vmatpush1.bf16.msra.mxu0 %v2628
    %2793 = vmatprep.subr.bf16.mxu0 %v2633
    %2794 = vmatpush1.bf16.msra.mxu0 %v2632
    %2795 = vmatprep.subr.bf16.mxu0 0
    %2796 = vmatpush1.bf16.msra.mxu0 0
    %2797 = vmatprep.subr.bf16.mxu0 0
    %2798 = vmatpush1.bf16.msra.mxu0 0
    %2799 = vmatprep.subr.bf16.mxu0 0
    %2800 = vmatpush1.bf16.msra.mxu0 0
    %2801 = vmatprep.subr.bf16.mxu0 0
    %2802 = vmatpush1.bf16.msra.mxu0 0
    %2803 = vmatprep.subr.bf16.mxu0 0
    %2804 = vmatpush1.bf16.msra.mxu0 0
    %2805 = vmatprep.subr.bf16.mxu0 0
    %2806 = vmatpush1.bf16.msra.mxu0 0
    %2807 = vmatprep.subr.bf16.mxu0 0
    %2808 = vmatpush1.bf16.msra.mxu0 0
    %2809 = vmatprep.mubr.bf16.mxu0 %v1162
    %2810 = vmatmul.mubr.bf16.gmra.mrb[0].mxu0 %v536
    %v2811 = vpop.f32.mrb[0].mxu0
    %v2812 = vadd.f32 %v2771, %v2811
    %v2813 = vpop.f32.mrb[0].mxu0
    %v2814 = vadd.f32 %v2773, %v2813
    %v2815 = vpop.f32.mrb[0].mxu0
    %v2816 = vpop.f32.mrb[0].mxu0
    %2817 = vdwg.mxu0
    %2818 = vmatprep.subr.bf16.mxu0 %v2539
    %2819 = vmatpush1.bf16.msra.mxu0 %v2538
    %2820 = vmatprep.subr.bf16.mxu0 %v2543
    %2821 = vmatpush1.bf16.msra.mxu0 %v2542
    %2822 = vmatprep.subr.bf16.mxu0 %v2547
    %2823 = vmatpush1.bf16.msra.mxu0 %v2546
    %2824 = vmatprep.subr.bf16.mxu0 %v2551
    %2825 = vmatpush1.bf16.msra.mxu0 %v2550
    %2826 = vmatprep.subr.bf16.mxu0 %v2555
    %2827 = vmatpush1.bf16.msra.mxu0 %v2554
    %2828 = vmatprep.subr.bf16.mxu0 %v2559
    %2829 = vmatpush1.bf16.msra.mxu0 %v2558
    %2830 = vmatprep.subr.bf16.mxu0 %v2563
    %2831 = vmatpush1.bf16.msra.mxu0 %v2562
    %2832 = vmatprep.subr.bf16.mxu0 %v2567
    %2833 = vmatpush1.bf16.msra.mxu0 %v2566
    %2834 = vmatprep.subr.bf16.mxu0 %v2571
    %2835 = vmatpush1.bf16.msra.mxu0 %v2570
    %2836 = vmatprep.subr.bf16.mxu0 %v2575
    %2837 = vmatpush1.bf16.msra.mxu0 %v2574
    %2838 = vmatprep.subr.bf16.mxu0 %v2579
    %2839 = vmatpush1.bf16.msra.mxu0 %v2578
    %2840 = vmatprep.subr.bf16.mxu0 %v2583
    %2841 = vmatpush1.bf16.msra.mxu0 %v2582
    %2842 = vmatprep.subr.bf16.mxu0 %v2587
    %2843 = vmatpush1.bf16.msra.mxu0 %v2586
    %2844 = vmatprep.subr.bf16.mxu0 %v2591
    %2845 = vmatpush1.bf16.msra.mxu0 %v2590
    %2846 = vmatprep.subr.bf16.mxu0 %v2595
    %2847 = vmatpush1.bf16.msra.mxu0 %v2594
    %2848 = vmatprep.subr.bf16.mxu0 %v2599
    %2849 = vmatpush1.bf16.msra.mxu0 %v2598
    %2850 = vmatprep.mubr.bf16.mxu0 %v535
    %2851 = vmatmul.mubr.bf16.gmra.mrb[0].mxu0 %v534
    %v2852 = vpop.f32.mrb[0].mxu0
    %v2853 = vadd.f32 %v2227, %v2852
    %v2854 = vpop.f32.mrb[0].mxu0
    %v2855 = vadd.f32 %v2231, %v2854
    %v2856 = vpop.f32.mrb[0].mxu0
    %v2857 = vpop.f32.mrb[0].mxu0
    %2858 = vdwg.mxu0
    %2859 = vmatprep.subr.bf16.mxu0 %v2603
    %2860 = vmatpush1.bf16.msra.mxu0 %v2602
    %2861 = vmatprep.subr.bf16.mxu0 %v2607
    %2862 = vmatpush1.bf16.msra.mxu0 %v2606
    %2863 = vmatprep.subr.bf16.mxu0 %v2611
    %2864 = vmatpush1.bf16.msra.mxu0 %v2610
    %2865 = vmatprep.subr.bf16.mxu0 %v2615
    %2866 = vmatpush1.bf16.msra.mxu0 %v2614
    %2867 = vmatprep.subr.bf16.mxu0 %v2619
    %2868 = vmatpush1.bf16.msra.mxu0 %v2618
    %2869 = vmatprep.subr.bf16.mxu0 %v2623
    %2870 = vmatpush1.bf16.msra.mxu0 %v2622
    %2871 = vmatprep.subr.bf16.mxu0 %v2627
    %2872 = vmatpush1.bf16.msra.mxu0 %v2626
    %2873 = vmatprep.subr.bf16.mxu0 %v2631
    %2874 = vmatpush1.bf16.msra.mxu0 %v2630
    %2875 = vmatprep.subr.bf16.mxu0 %v2635
    %2876 = vmatpush1.bf16.msra.mxu0 %v2634
    %2877 = vmatprep.subr.bf16.mxu0 0
    %2878 = vmatpush1.bf16.msra.mxu0 0
    %2879 = vmatprep.subr.bf16.mxu0 0
    %2880 = vmatpush1.bf16.msra.mxu0 0
    %2881 = vmatprep.subr.bf16.mxu0 0
    %2882 = vmatpush1.bf16.msra.mxu0 0
    %2883 = vmatprep.subr.bf16.mxu0 0
    %2884 = vmatpush1.bf16.msra.mxu0 0
    %2885 = vmatprep.subr.bf16.mxu0 0
    %2886 = vmatpush1.bf16.msra.mxu0 0
    %2887 = vmatprep.subr.bf16.mxu0 0
    %2888 = vmatpush1.bf16.msra.mxu0 0
    %2889 = vmatprep.subr.bf16.mxu0 0
    %2890 = vmatpush1.bf16.msra.mxu0 0
    %2891 = vmatprep.mubr.bf16.mxu0 %v1162
    %2892 = vmatmul.mubr.bf16.gmra.mrb[0].mxu0 %v536
    %v2893 = vpop.f32.mrb[0].mxu0
    %v2894 = vadd.f32 %v2853, %v2893
    %v2895 = vpop.f32.mrb[0].mxu0
    %v2896 = vadd.f32 %v2855, %v2895
    %v2897 = vpop.f32.mrb[0].mxu0
    %v2898 = vpop.f32.mrb[0].mxu0
    %2899 = vdwg.mxu0
    %v2900 = vmul.f32 %v1240, 0.5
    %v2901 = vmul.f32 %v1242, 0.5
    %v2902 = vmul.f32 %v1322, 0.5
    %v2903 = vmul.f32 %v1324, 0.5
    %v2904 = vtanh.pop %v2900
    %v2905 = vtanh.pop %v2901
    %v2906 = vtanh.pop %v2902
    %v2907 = vtanh.pop %v2903
    %v2908 = vadd.f32 %v2904, 1.0
    %v2909 = vadd.f32 %v2905, 1.0
    %v2910 = vadd.f32 %v2906, 1.0
    %v2911 = vadd.f32 %v2907, 1.0
    %v2912 = vmul.f32 %v2908, 0.5
    %v2913 = vmul.f32 %v2909, 0.5
    %v2914 = vmul.f32 %v2910, 0.5
    %v2915 = vmul.f32 %v2911, 0.5
    %v2916 = vtanh.pop %v2026
    %v2917 = vtanh.pop %v2028
    %v2918 = vtanh.pop %v2108
    %v2919 = vtanh.pop %v2110
    %v2920 = vmul.f32 %v2812, 0.5
    %v2921 = vmul.f32 %v2814, 0.5
    %v2922 = vmul.f32 %v2894, 0.5
    %v2923 = vmul.f32 %v2896, 0.5
    %v2924 = vtanh.pop %v2920
    %v2925 = vtanh.pop %v2921
    %v2926 = vtanh.pop %v2922
    %v2927 = vtanh.pop %v2923
    %v2928 = vadd.f32 %v2924, 1.0
    %v2929 = vadd.f32 %v2925, 1.0
    %v2930 = vadd.f32 %v2926, 1.0
    %v2931 = vadd.f32 %v2927, 1.0
    %v2932 = vmul.f32 %v2928, 0.5
    %v2933 = vmul.f32 %v2929, 0.5
    %v2934 = vmul.f32 %v2930, 0.5
    %v2935 = vmul.f32 %v2931, 0.5
    %v2936 = vmul.f32 %v2912, %v2916
    %v2937 = vmul.f32 %v2913, %v2917
    %v2938 = vmul.f32 %v2914, %v2918
    %v2939 = vmul.f32 %v2915, %v2919
    %v2940 = vtanh.pop %v2936
    %v2941 = vtanh.pop %v2937
    %v2942 = vtanh.pop %v2938
    %v2943 = vtanh.pop %v2939
    %v2944 = vmul.f32 %v2932, %v2940
    %v2945 = vmul.f32 %v2933, %v2941
    %v2946 = vmul.f32 %v2934, %v2942
    %v2947 = vmul.f32 %v2935, %v2943
    %v2948 = vmax.f32 %v2944, 0.0
    %v2949 = vmax.f32 %v2945, 0.0
    %v2950 = vmax.f32 %v2946, 0.0
    %v2951 = vmax.f32 %v2947, 0.0
    %v2952 = vpack.c.bf16 %v2948, %v2948
    %v2953 = vpack.c.bf16 %v2949, %v2949
    %v2954 = vpack.c.bf16 %v2950, %v2950
    %v2955 = vpack.c.bf16 %v2951, %v2951
    %v2956 = vld [vmem:[#allocation12] sm:$0xff]
    %v2957 = vld [vmem:[#allocation12 + $0x8] sm:$0xff]
    %v2958 = vld [vmem:[#allocation12 + $0x10] sm:$0xff]
    %v2959 = vld [vmem:[#allocation12 + $0x18] sm:$0xff]
    %v2960 = vld [vmem:[#allocation12 + $0x20] sm:$0xff]
    %v2961 = vld [vmem:[#allocation12 + $0x28] sm:$0xff]
    %v2962 = vld [vmem:[#allocation12 + $0x30] sm:$0xff]
    %v2963 = vld [vmem:[#allocation12 + $0x38] sm:$0xff]
    %v2964 = vld [vmem:[#allocation12 + $0x40] sm:$0xff]
    %v2965 = vld [vmem:[#allocation12 + $0x48] sm:$0xff]
    %v2966 = vld [vmem:[#allocation12 + $0x50] sm:$0xff]
    %v2967 = vld [vmem:[#allocation12 + $0x58] sm:$0xff]
    %v2968 = vld [vmem:[#allocation12 + $0x60] sm:$0xff]
    %v2969 = vld [vmem:[#allocation12 + $0x68] sm:$0xff]
    %v2970 = vld [vmem:[#allocation12 + $0x70] sm:$0xff]
    %v2971 = vld [vmem:[#allocation12 + $0x78] sm:$0xff]
    %v2972 = vld [vmem:[#allocation12 + $0x80] sm:$0xff]
    %v2973 = vld [vmem:[#allocation12 + $0x88] sm:$0xff]
    %v2974 = vld [vmem:[#allocation12 + $0x90] sm:$0xff]
    %v2975 = vld [vmem:[#allocation12 + $0x98] sm:$0xff]
    %v2976 = vld [vmem:[#allocation12 + $0xa0] sm:$0xff]
    %v2977 = vld [vmem:[#allocation12 + $0xa8] sm:$0xff]
    %v2978 = vld [vmem:[#allocation12 + $0xb0] sm:$0xff]
    %v2979 = vld [vmem:[#allocation12 + $0xb8] sm:$0xff]
    %v2980 = vld [vmem:[#allocation12 + $0xc0] sm:$0xff]
    %v2981 = vld [vmem:[#allocation12 + $0xc8] sm:$0xff]
    %v2982 = vld [vmem:[#allocation12 + $0xd0] sm:$0xff]
    %v2983 = vld [vmem:[#allocation12 + $0xd8] sm:$0xff]
    %v2984 = vld [vmem:[#allocation12 + $0xe0] sm:$0xff]
    %v2985 = vld [vmem:[#allocation12 + $0xe8] sm:$0xff]
    %v2986 = vld [vmem:[#allocation12 + $0xf0] sm:$0xff]
    %v2987 = vld [vmem:[#allocation12 + $0xf8] sm:$0xff]
    %v2988 = vld [vmem:[#allocation12 + $0x100] sm:$0xff]
    %v2989 = vld [vmem:[#allocation12 + $0x108] sm:$0xff]
    %v2990 = vld [vmem:[#allocation12 + $0x110] sm:$0xff]
    %v2991 = vld [vmem:[#allocation12 + $0x118] sm:$0xff]
    %v2992 = vld [vmem:[#allocation12 + $0x120] sm:$0xff]
    %v2993 = vld [vmem:[#allocation12 + $0x128] sm:$0xff]
    %v2994 = vld [vmem:[#allocation12 + $0x130] sm:$0xff]
    %v2995 = vld [vmem:[#allocation12 + $0x138] sm:$0xff]
    %v2996 = vld [vmem:[#allocation12 + $0x140] sm:$0xff]
    %v2997 = vld [vmem:[#allocation12 + $0x148] sm:$0xff]
    %v2998 = vld [vmem:[#allocation12 + $0x150] sm:$0xff]
    %v2999 = vld [vmem:[#allocation12 + $0x158] sm:$0xff]
    %v3000 = vld [vmem:[#allocation12 + $0x160] sm:$0xff]
    %v3001 = vld [vmem:[#allocation12 + $0x168] sm:$0xff]
    %v3002 = vld [vmem:[#allocation12 + $0x170] sm:$0xff]
    %v3003 = vld [vmem:[#allocation12 + $0x178] sm:$0xff]
    %v3004 = vld [vmem:[#allocation12 + $0x180] sm:$0xff]
    %v3005 = vld [vmem:[#allocation12 + $0x188] sm:$0xff]
    %v3006 = vld [vmem:[#allocation13] sm:$0xff]
    %v3007 = vld [vmem:[#allocation13 + $0x8] sm:$0xff]
    %v3008 = vld [vmem:[#allocation13 + $0x10] sm:$0xff]
    %v3009 = vld [vmem:[#allocation13 + $0x18] sm:$0xff]
    %v3010 = vld [vmem:[#allocation13 + $0x20] sm:$0xff]
    %v3011 = vld [vmem:[#allocation13 + $0x28] sm:$0xff]
    %v3012 = vld [vmem:[#allocation13 + $0x30] sm:$0xff]
    %v3013 = vld [vmem:[#allocation13 + $0x38] sm:$0xff]
    %v3014 = vld [vmem:[#allocation13 + $0x40] sm:$0xff]
    %v3015 = vld [vmem:[#allocation13 + $0x48] sm:$0xff]
    %v3016 = vld [vmem:[#allocation13 + $0x50] sm:$0xff]
    %v3017 = vld [vmem:[#allocation13 + $0x58] sm:$0xff]
    %v3018 = vld [vmem:[#allocation13 + $0x60] sm:$0xff]
    %v3019 = vld [vmem:[#allocation13 + $0x68] sm:$0xff]
    %v3020 = vld [vmem:[#allocation13 + $0x70] sm:$0xff]
    %v3021 = vld [vmem:[#allocation13 + $0x78] sm:$0xff]
    %v3022 = vld [vmem:[#allocation13 + $0x80] sm:$0xff]
    %v3023 = vld [vmem:[#allocation13 + $0x88] sm:$0xff]
    %v3024 = vld [vmem:[#allocation13 + $0x90] sm:$0xff]
    %v3025 = vld [vmem:[#allocation13 + $0x98] sm:$0xff]
    %v3026 = vld [vmem:[#allocation13 + $0xa0] sm:$0xff]
    %v3027 = vld [vmem:[#allocation13 + $0xa8] sm:$0xff]
    %v3028 = vld [vmem:[#allocation13 + $0xb0] sm:$0xff]
    %v3029 = vld [vmem:[#allocation13 + $0xb8] sm:$0xff]
    %v3030 = vld [vmem:[#allocation13 + $0xc0] sm:$0xff]
    %v3031 = vld [vmem:[#allocation13 + $0xc8] sm:$0xff]
    %v3032 = vld [vmem:[#allocation13 + $0xd0] sm:$0xff]
    %v3033 = vld [vmem:[#allocation13 + $0xd8] sm:$0xff]
    %v3034 = vld [vmem:[#allocation13 + $0xe0] sm:$0xff]
    %v3035 = vld [vmem:[#allocation13 + $0xe8] sm:$0xff]
    %v3036 = vld [vmem:[#allocation13 + $0xf0] sm:$0xff]
    %v3037 = vld [vmem:[#allocation13 + $0xf8] sm:$0xff]
    %v3038 = vld [vmem:[#allocation13 + $0x100] sm:$0xff]
    %v3039 = vld [vmem:[#allocation13 + $0x108] sm:$0xff]
    %v3040 = vld [vmem:[#allocation13 + $0x110] sm:$0xff]
    %v3041 = vld [vmem:[#allocation13 + $0x118] sm:$0xff]
    %v3042 = vld [vmem:[#allocation13 + $0x120] sm:$0xff]
    %v3043 = vld [vmem:[#allocation13 + $0x128] sm:$0xff]
    %v3044 = vld [vmem:[#allocation13 + $0x130] sm:$0xff]
    %v3045 = vld [vmem:[#allocation13 + $0x138] sm:$0xff]
    %v3046 = vld [vmem:[#allocation13 + $0x140] sm:$0xff]
    %v3047 = vld [vmem:[#allocation13 + $0x148] sm:$0xff]
    %v3048 = vld [vmem:[#allocation13 + $0x150] sm:$0xff]
    %v3049 = vld [vmem:[#allocation13 + $0x158] sm:$0xff]
    %v3050 = vld [vmem:[#allocation13 + $0x160] sm:$0xff]
    %v3051 = vld [vmem:[#allocation13 + $0x168] sm:$0xff]
    %v3052 = vld [vmem:[#allocation13 + $0x170] sm:$0xff]
    %v3053 = vld [vmem:[#allocation13 + $0x178] sm:$0xff]
    %v3054 = vld [vmem:[#allocation13 + $0x180] sm:$0xff]
    %v3055 = vld [vmem:[#allocation13 + $0x188] sm:$0xff]
    %v3106 = vunpack.c.l.b16 %v3006
    %v3107 = vunpack.c.h.b16 %v3006
    %v3108 = vunpack.c.l.b16 %v3007
    %v3109 = vunpack.c.h.b16 %v3007
    %v3110 = vunpack.c.l.b16 %v3008
    %v3111 = vunpack.c.h.b16 %v3008
    %v3112 = vunpack.c.l.b16 %v3009
    %v3113 = vunpack.c.h.b16 %v3009
    %v3114 = vunpack.c.l.b16 %v3010
    %v3115 = vunpack.c.h.b16 %v3010
    %v3116 = vunpack.c.l.b16 %v3011
    %v3117 = vunpack.c.h.b16 %v3011
    %v3118 = vunpack.c.l.b16 %v3012
    %v3119 = vunpack.c.h.b16 %v3012
    %v3120 = vunpack.c.l.b16 %v3013
    %v3121 = vunpack.c.h.b16 %v3013
    %v3122 = vunpack.c.l.b16 %v3014
    %v3123 = vunpack.c.h.b16 %v3014
    %v3124 = vunpack.c.l.b16 %v3015
    %v3125 = vunpack.c.h.b16 %v3015
    %v3126 = vunpack.c.l.b16 %v3016
    %v3127 = vunpack.c.h.b16 %v3016
    %v3128 = vunpack.c.l.b16 %v3017
    %v3129 = vunpack.c.h.b16 %v3017
    %v3130 = vunpack.c.l.b16 %v3018
    %v3131 = vunpack.c.h.b16 %v3018
    %v3132 = vunpack.c.l.b16 %v3019
    %v3133 = vunpack.c.h.b16 %v3019
    %v3134 = vunpack.c.l.b16 %v3020
    %v3135 = vunpack.c.h.b16 %v3020
    %v3136 = vunpack.c.l.b16 %v3021
    %v3137 = vunpack.c.h.b16 %v3021
    %v3138 = vunpack.c.l.b16 %v3022
    %v3139 = vunpack.c.h.b16 %v3022
    %v3140 = vunpack.c.l.b16 %v3023
    %v3141 = vunpack.c.h.b16 %v3023
    %v3142 = vunpack.c.l.b16 %v3024
    %v3143 = vunpack.c.h.b16 %v3024
    %v3144 = vunpack.c.l.b16 %v3025
    %v3145 = vunpack.c.h.b16 %v3025
    %v3146 = vunpack.c.l.b16 %v3026
    %v3147 = vunpack.c.h.b16 %v3026
    %v3148 = vunpack.c.l.b16 %v3027
    %v3149 = vunpack.c.h.b16 %v3027
    %v3150 = vunpack.c.l.b16 %v3028
    %v3151 = vunpack.c.h.b16 %v3028
    %v3152 = vunpack.c.l.b16 %v3029
    %v3153 = vunpack.c.h.b16 %v3029
    %v3154 = vunpack.c.l.b16 %v3030
    %v3155 = vunpack.c.h.b16 %v3030
    %v3156 = vunpack.c.l.b16 %v3031
    %v3157 = vunpack.c.h.b16 %v3031
    %v3158 = vunpack.c.l.b16 %v3032
    %v3159 = vunpack.c.h.b16 %v3032
    %v3160 = vunpack.c.l.b16 %v3033
    %v3161 = vunpack.c.h.b16 %v3033
    %v3162 = vunpack.c.l.b16 %v3034
    %v3163 = vunpack.c.h.b16 %v3034
    %v3164 = vunpack.c.l.b16 %v3035
    %v3165 = vunpack.c.h.b16 %v3035
    %v3166 = vunpack.c.l.b16 %v3036
    %v3167 = vunpack.c.h.b16 %v3036
    %v3168 = vunpack.c.l.b16 %v3037
    %v3169 = vunpack.c.h.b16 %v3037
    %v3170 = vunpack.c.l.b16 %v3038
    %v3171 = vunpack.c.h.b16 %v3038
    %v3172 = vunpack.c.l.b16 %v3039
    %v3173 = vunpack.c.h.b16 %v3039
    %v3174 = vunpack.c.l.b16 %v3040
    %v3175 = vunpack.c.h.b16 %v3040
    %v3176 = vunpack.c.l.b16 %v3041
    %v3177 = vunpack.c.h.b16 %v3041
    %v3178 = vunpack.c.l.b16 %v3042
    %v3179 = vunpack.c.h.b16 %v3042
    %v3180 = vunpack.c.l.b16 %v3043
    %v3181 = vunpack.c.h.b16 %v3043
    %v3182 = vunpack.c.l.b16 %v3044
    %v3183 = vunpack.c.h.b16 %v3044
    %v3184 = vunpack.c.l.b16 %v3045
    %v3185 = vunpack.c.h.b16 %v3045
    %v3186 = vunpack.c.l.b16 %v3046
    %v3187 = vunpack.c.h.b16 %v3046
    %v3188 = vunpack.c.l.b16 %v3047
    %v3189 = vunpack.c.h.b16 %v3047
    %v3190 = vunpack.c.l.b16 %v3048
    %v3191 = vunpack.c.h.b16 %v3048
    %v3192 = vunpack.c.l.b16 %v3049
    %v3193 = vunpack.c.h.b16 %v3049
    %v3194 = vunpack.c.l.b16 %v3050
    %v3195 = vunpack.c.h.b16 %v3050
    %v3196 = vunpack.c.l.b16 %v3051
    %v3197 = vunpack.c.h.b16 %v3051
    %v3198 = vunpack.c.l.b16 %v3052
    %v3199 = vunpack.c.h.b16 %v3052
    %v3200 = vunpack.c.l.b16 %v3053
    %v3201 = vunpack.c.h.b16 %v3053
    %v3202 = vunpack.c.l.b16 %v3054
    %v3203 = vunpack.c.h.b16 %v3054
    %v3204 = vunpack.c.l.b16 %v3055
    %v3205 = vunpack.c.h.b16 %v3055
    %v3206 = vpack.c.b16 %v3108, %v3106
    %v3207 = vpack.c.b16 %v3109, %v3107
    %v3208 = vpack.c.b16 %v3112, %v3110
    %v3209 = vpack.c.b16 %v3113, %v3111
    %v3210 = vpack.c.b16 %v3116, %v3114
    %v3211 = vpack.c.b16 %v3117, %v3115
    %v3212 = vpack.c.b16 %v3120, %v3118
    %v3213 = vpack.c.b16 %v3121, %v3119
    %v3214 = vpack.c.b16 %v3124, %v3122
    %v3215 = vpack.c.b16 %v3125, %v3123
    %v3216 = vpack.c.b16 %v3128, %v3126
    %v3217 = vpack.c.b16 %v3129, %v3127
    %v3218 = vpack.c.b16 %v3132, %v3130
    %v3219 = vpack.c.b16 %v3133, %v3131
    %v3220 = vpack.c.b16 %v3136, %v3134
    %v3221 = vpack.c.b16 %v3137, %v3135
    %v3222 = vpack.c.b16 %v3140, %v3138
    %v3223 = vpack.c.b16 %v3141, %v3139
    %v3224 = vpack.c.b16 %v3144, %v3142
    %v3225 = vpack.c.b16 %v3145, %v3143
    %v3226 = vpack.c.b16 %v3148, %v3146
    %v3227 = vpack.c.b16 %v3149, %v3147
    %v3228 = vpack.c.b16 %v3152, %v3150
    %v3229 = vpack.c.b16 %v3153, %v3151
    %v3230 = vpack.c.b16 %v3156, %v3154
    %v3231 = vpack.c.b16 %v3157, %v3155
    %v3232 = vpack.c.b16 %v3160, %v3158
    %v3233 = vpack.c.b16 %v3161, %v3159
    %v3234 = vpack.c.b16 %v3164, %v3162
    %v3235 = vpack.c.b16 %v3165, %v3163
    %v3236 = vpack.c.b16 %v3168, %v3166
    %v3237 = vpack.c.b16 %v3169, %v3167
    %v3238 = vpack.c.b16 %v3172, %v3170
    %v3239 = vpack.c.b16 %v3173, %v3171
    %v3240 = vpack.c.b16 %v3176, %v3174
    %v3241 = vpack.c.b16 %v3177, %v3175
    %v3242 = vpack.c.b16 %v3180, %v3178
    %v3243 = vpack.c.b16 %v3181, %v3179
    %v3244 = vpack.c.b16 %v3184, %v3182
    %v3245 = vpack.c.b16 %v3185, %v3183
    %v3246 = vpack.c.b16 %v3188, %v3186
    %v3247 = vpack.c.b16 %v3189, %v3187
    %v3248 = vpack.c.b16 %v3192, %v3190
    %v3249 = vpack.c.b16 %v3193, %v3191
    %v3250 = vpack.c.b16 %v3196, %v3194
    %v3251 = vpack.c.b16 %v3197, %v3195
    %v3252 = vpack.c.b16 %v3200, %v3198
    %v3253 = vpack.c.b16 %v3201, %v3199
    %v3254 = vpack.c.b16 %v3204, %v3202
    %v3255 = vpack.c.b16 %v3205, %v3203
    %v3307 = vsel %vm1160, %v2955, 0
    %3309 = vmatprep.subr.bf16.mxu0 %v3207
    %3310 = vmatpush1.bf16.msra.mxu0 %v3206
    %3311 = vmatprep.subr.bf16.mxu0 %v3209
    %3312 = vmatpush1.bf16.msra.mxu0 %v3208
    %3313 = vmatprep.subr.bf16.mxu0 %v3211
    %3314 = vmatpush1.bf16.msra.mxu0 %v3210
    %3315 = vmatprep.subr.bf16.mxu0 %v3213
    %3316 = vmatpush1.bf16.msra.mxu0 %v3212
    %3317 = vmatprep.subr.bf16.mxu0 %v3215
    %3318 = vmatpush1.bf16.msra.mxu0 %v3214
    %3319 = vmatprep.subr.bf16.mxu0 %v3217
    %3320 = vmatpush1.bf16.msra.mxu0 %v3216
    %3321 = vmatprep.subr.bf16.mxu0 %v3219
    %3322 = vmatpush1.bf16.msra.mxu0 %v3218
    %3323 = vmatprep.subr.bf16.mxu0 %v3221
    %3324 = vmatpush1.bf16.msra.mxu0 %v3220
    %3325 = vmatprep.subr.bf16.mxu0 %v3223
    %3326 = vmatpush1.bf16.msra.mxu0 %v3222
    %3327 = vmatprep.subr.bf16.mxu0 %v3225
    %3328 = vmatpush1.bf16.msra.mxu0 %v3224
    %3329 = vmatprep.subr.bf16.mxu0 %v3227
    %3330 = vmatpush1.bf16.msra.mxu0 %v3226
    %3331 = vmatprep.subr.bf16.mxu0 %v3229
    %3332 = vmatpush1.bf16.msra.mxu0 %v3228
    %3333 = vmatprep.subr.bf16.mxu0 %v3231
    %3334 = vmatpush1.bf16.msra.mxu0 %v3230
    %3335 = vmatprep.subr.bf16.mxu0 %v3233
    %3336 = vmatpush1.bf16.msra.mxu0 %v3232
    %3337 = vmatprep.subr.bf16.mxu0 %v3235
    %3338 = vmatpush1.bf16.msra.mxu0 %v3234
    %3339 = vmatprep.subr.bf16.mxu0 %v3237
    %3340 = vmatpush1.bf16.msra.mxu0 %v3236
    %3341 = vmatprep.mubr.bf16.mxu0 %v2953
    %3342 = vmatmul.mubr.bf16.gmra.mrb[0].mxu0 %v2952
    %v3343 = vpop.f32.mrb[0].mxu0
    %v3344 = vadd.f32 0.0, %v3343
    %v3345 = vpop.f32.mrb[0].mxu0
    %v3346 = vadd.f32 0.0, %v3345
    %v3347 = vpop.f32.mrb[0].mxu0
    %v3348 = vpop.f32.mrb[0].mxu0
    %3349 = vdwg.mxu0
    %3350 = vmatprep.subr.bf16.mxu0 %v3239
    %3351 = vmatpush1.bf16.msra.mxu0 %v3238
    %3352 = vmatprep.subr.bf16.mxu0 %v3241
    %3353 = vmatpush1.bf16.msra.mxu0 %v3240
    %3354 = vmatprep.subr.bf16.mxu0 %v3243
    %3355 = vmatpush1.bf16.msra.mxu0 %v3242
    %3356 = vmatprep.subr.bf16.mxu0 %v3245
    %3357 = vmatpush1.bf16.msra.mxu0 %v3244
    %3358 = vmatprep.subr.bf16.mxu0 %v3247
    %3359 = vmatpush1.bf16.msra.mxu0 %v3246
    %3360 = vmatprep.subr.bf16.mxu0 %v3249
    %3361 = vmatpush1.bf16.msra.mxu0 %v3248
    %3362 = vmatprep.subr.bf16.mxu0 %v3251
    %3363 = vmatpush1.bf16.msra.mxu0 %v3250
    %3364 = vmatprep.subr.bf16.mxu0 %v3253
    %3365 = vmatpush1.bf16.msra.mxu0 %v3252
    %3366 = vmatprep.subr.bf16.mxu0 %v3255
    %3367 = vmatpush1.bf16.msra.mxu0 %v3254
    %3368 = vmatprep.subr.bf16.mxu0 0
    %3369 = vmatpush1.bf16.msra.mxu0 0
    %3370 = vmatprep.subr.bf16.mxu0 0
    %3371 = vmatpush1.bf16.msra.mxu0 0
    %3372 = vmatprep.subr.bf16.mxu0 0
    %3373 = vmatpush1.bf16.msra.mxu0 0
    %3374 = vmatprep.subr.bf16.mxu0 0
    %3375 = vmatpush1.bf16.msra.mxu0 0
    %3376 = vmatprep.subr.bf16.mxu0 0
    %3377 = vmatpush1.bf16.msra.mxu0 0
    %3378 = vmatprep.subr.bf16.mxu0 0
    %3379 = vmatpush1.bf16.msra.mxu0 0
    %3380 = vmatprep.subr.bf16.mxu0 0
    %3381 = vmatpush1.bf16.msra.mxu0 0
    %3382 = vmatprep.mubr.bf16.mxu0 %v3307
    %3383 = vmatmul.mubr.bf16.gmra.mrb[0].mxu0 %v2954
    %v3384 = vpop.f32.mrb[0].mxu0
    %v3385 = vadd.f32 %v3344, %v3384
    %v3386 = vpop.f32.mrb[0].mxu0
    %v3387 = vadd.f32 %v3346, %v3386
    %v3388 = vpop.f32.mrb[0].mxu0
    %v3389 = vpop.f32.mrb[0].mxu0
    %3390 = vdwg.mxu0
    %v3441 = vunpack.c.l.b16 %v2956
    %v3442 = vunpack.c.h.b16 %v2956
    %v3443 = vunpack.c.l.b16 %v2957
    %v3444 = vunpack.c.h.b16 %v2957
    %v3445 = vunpack.c.l.b16 %v2958
    %v3446 = vunpack.c.h.b16 %v2958
    %v3447 = vunpack.c.l.b16 %v2959
    %v3448 = vunpack.c.h.b16 %v2959
    %v3449 = vunpack.c.l.b16 %v2960
    %v3450 = vunpack.c.h.b16 %v2960
    %v3451 = vunpack.c.l.b16 %v2961
    %v3452 = vunpack.c.h.b16 %v2961
    %v3453 = vunpack.c.l.b16 %v2962
    %v3454 = vunpack.c.h.b16 %v2962
    %v3455 = vunpack.c.l.b16 %v2963
    %v3456 = vunpack.c.h.b16 %v2963
    %v3457 = vunpack.c.l.b16 %v2964
    %v3458 = vunpack.c.h.b16 %v2964
    %v3459 = vunpack.c.l.b16 %v2965
    %v3460 = vunpack.c.h.b16 %v2965
    %v3461 = vunpack.c.l.b16 %v2966
    %v3462 = vunpack.c.h.b16 %v2966
    %v3463 = vunpack.c.l.b16 %v2967
    %v3464 = vunpack.c.h.b16 %v2967
    %v3465 = vunpack.c.l.b16 %v2968
    %v3466 = vunpack.c.h.b16 %v2968
    %v3467 = vunpack.c.l.b16 %v2969
    %v3468 = vunpack.c.h.b16 %v2969
    %v3469 = vunpack.c.l.b16 %v2970
    %v3470 = vunpack.c.h.b16 %v2970
    %v3471 = vunpack.c.l.b16 %v2971
    %v3472 = vunpack.c.h.b16 %v2971
    %v3473 = vunpack.c.l.b16 %v2972
    %v3474 = vunpack.c.h.b16 %v2972
    %v3475 = vunpack.c.l.b16 %v2973
    %v3476 = vunpack.c.h.b16 %v2973
    %v3477 = vunpack.c.l.b16 %v2974
    %v3478 = vunpack.c.h.b16 %v2974
    %v3479 = vunpack.c.l.b16 %v2975
    %v3480 = vunpack.c.h.b16 %v2975
    %v3481 = vunpack.c.l.b16 %v2976
    %v3482 = vunpack.c.h.b16 %v2976
    %v3483 = vunpack.c.l.b16 %v2977
    %v3484 = vunpack.c.h.b16 %v2977
    %v3485 = vunpack.c.l.b16 %v2978
    %v3486 = vunpack.c.h.b16 %v2978
    %v3487 = vunpack.c.l.b16 %v2979
    %v3488 = vunpack.c.h.b16 %v2979
    %v3489 = vunpack.c.l.b16 %v2980
    %v3490 = vunpack.c.h.b16 %v2980
    %v3491 = vunpack.c.l.b16 %v2981
    %v3492 = vunpack.c.h.b16 %v2981
    %v3493 = vunpack.c.l.b16 %v2982
    %v3494 = vunpack.c.h.b16 %v2982
    %v3495 = vunpack.c.l.b16 %v2983
    %v3496 = vunpack.c.h.b16 %v2983
    %v3497 = vunpack.c.l.b16 %v2984
    %v3498 = vunpack.c.h.b16 %v2984
    %v3499 = vunpack.c.l.b16 %v2985
    %v3500 = vunpack.c.h.b16 %v2985
    %v3501 = vunpack.c.l.b16 %v2986
    %v3502 = vunpack.c.h.b16 %v2986
    %v3503 = vunpack.c.l.b16 %v2987
    %v3504 = vunpack.c.h.b16 %v2987
    %v3505 = vunpack.c.l.b16 %v2988
    %v3506 = vunpack.c.h.b16 %v2988
    %v3507 = vunpack.c.l.b16 %v2989
    %v3508 = vunpack.c.h.b16 %v2989
    %v3509 = vunpack.c.l.b16 %v2990
    %v3510 = vunpack.c.h.b16 %v2990
    %v3511 = vunpack.c.l.b16 %v2991
    %v3512 = vunpack.c.h.b16 %v2991
    %v3513 = vunpack.c.l.b16 %v2992
    %v3514 = vunpack.c.h.b16 %v2992
    %v3515 = vunpack.c.l.b16 %v2993
    %v3516 = vunpack.c.h.b16 %v2993
    %v3517 = vunpack.c.l.b16 %v2994
    %v3518 = vunpack.c.h.b16 %v2994
    %v3519 = vunpack.c.l.b16 %v2995
    %v3520 = vunpack.c.h.b16 %v2995
    %v3521 = vunpack.c.l.b16 %v2996
    %v3522 = vunpack.c.h.b16 %v2996
    %v3523 = vunpack.c.l.b16 %v2997
    %v3524 = vunpack.c.h.b16 %v2997
    %v3525 = vunpack.c.l.b16 %v2998
    %v3526 = vunpack.c.h.b16 %v2998
    %v3527 = vunpack.c.l.b16 %v2999
    %v3528 = vunpack.c.h.b16 %v2999
    %v3529 = vunpack.c.l.b16 %v3000
    %v3530 = vunpack.c.h.b16 %v3000
    %v3531 = vunpack.c.l.b16 %v3001
    %v3532 = vunpack.c.h.b16 %v3001
    %v3533 = vunpack.c.l.b16 %v3002
    %v3534 = vunpack.c.h.b16 %v3002
    %v3535 = vunpack.c.l.b16 %v3003
    %v3536 = vunpack.c.h.b16 %v3003
    %v3537 = vunpack.c.l.b16 %v3004
    %v3538 = vunpack.c.h.b16 %v3004
    %v3539 = vunpack.c.l.b16 %v3005
    %v3540 = vunpack.c.h.b16 %v3005
    %v3541 = vpack.c.b16 %v3443, %v3441
    %v3542 = vpack.c.b16 %v3444, %v3442
    %v3543 = vpack.c.b16 %v3447, %v3445
    %v3544 = vpack.c.b16 %v3448, %v3446
    %v3545 = vpack.c.b16 %v3451, %v3449
    %v3546 = vpack.c.b16 %v3452, %v3450
    %v3547 = vpack.c.b16 %v3455, %v3453
    %v3548 = vpack.c.b16 %v3456, %v3454
    %v3549 = vpack.c.b16 %v3459, %v3457
    %v3550 = vpack.c.b16 %v3460, %v3458
    %v3551 = vpack.c.b16 %v3463, %v3461
    %v3552 = vpack.c.b16 %v3464, %v3462
    %v3553 = vpack.c.b16 %v3467, %v3465
    %v3554 = vpack.c.b16 %v3468, %v3466
    %v3555 = vpack.c.b16 %v3471, %v3469
    %v3556 = vpack.c.b16 %v3472, %v3470
    %v3557 = vpack.c.b16 %v3475, %v3473
    %v3558 = vpack.c.b16 %v3476, %v3474
    %v3559 = vpack.c.b16 %v3479, %v3477
    %v3560 = vpack.c.b16 %v3480, %v3478
    %v3561 = vpack.c.b16 %v3483, %v3481
    %v3562 = vpack.c.b16 %v3484, %v3482
    %v3563 = vpack.c.b16 %v3487, %v3485
    %v3564 = vpack.c.b16 %v3488, %v3486
    %v3565 = vpack.c.b16 %v3491, %v3489
    %v3566 = vpack.c.b16 %v3492, %v3490
    %v3567 = vpack.c.b16 %v3495, %v3493
    %v3568 = vpack.c.b16 %v3496, %v3494
    %v3569 = vpack.c.b16 %v3499, %v3497
    %v3570 = vpack.c.b16 %v3500, %v3498
    %v3571 = vpack.c.b16 %v3503, %v3501
    %v3572 = vpack.c.b16 %v3504, %v3502
    %v3573 = vpack.c.b16 %v3507, %v3505
    %v3574 = vpack.c.b16 %v3508, %v3506
    %v3575 = vpack.c.b16 %v3511, %v3509
    %v3576 = vpack.c.b16 %v3512, %v3510
    %v3577 = vpack.c.b16 %v3515, %v3513
    %v3578 = vpack.c.b16 %v3516, %v3514
    %v3579 = vpack.c.b16 %v3519, %v3517
    %v3580 = vpack.c.b16 %v3520, %v3518
    %v3581 = vpack.c.b16 %v3523, %v3521
    %v3582 = vpack.c.b16 %v3524, %v3522
    %v3583 = vpack.c.b16 %v3527, %v3525
    %v3584 = vpack.c.b16 %v3528, %v3526
    %v3585 = vpack.c.b16 %v3531, %v3529
    %v3586 = vpack.c.b16 %v3532, %v3530
    %v3587 = vpack.c.b16 %v3535, %v3533
    %v3588 = vpack.c.b16 %v3536, %v3534
    %v3589 = vpack.c.b16 %v3539, %v3537
    %v3590 = vpack.c.b16 %v3540, %v3538
    %v3642 = vsel %vm1160, %v377, 0
    %3644 = vmatprep.subr.bf16.mxu0 %v3542
    %3645 = vmatpush1.bf16.msra.mxu0 %v3541
    %3646 = vmatprep.subr.bf16.mxu0 %v3544
    %3647 = vmatpush1.bf16.msra.mxu0 %v3543
    %3648 = vmatprep.subr.bf16.mxu0 %v3546
    %3649 = vmatpush1.bf16.msra.mxu0 %v3545
    %3650 = vmatprep.subr.bf16.mxu0 %v3548
    %3651 = vmatpush1.bf16.msra.mxu0 %v3547
    %3652 = vmatprep.subr.bf16.mxu0 %v3550
    %3653 = vmatpush1.bf16.msra.mxu0 %v3549
    %3654 = vmatprep.subr.bf16.mxu0 %v3552
    %3655 = vmatpush1.bf16.msra.mxu0 %v3551
    %3656 = vmatprep.subr.bf16.mxu0 %v3554
    %3657 = vmatpush1.bf16.msra.mxu0 %v3553
    %3658 = vmatprep.subr.bf16.mxu0 %v3556
    %3659 = vmatpush1.bf16.msra.mxu0 %v3555
    %3660 = vmatprep.subr.bf16.mxu0 %v3558
    %3661 = vmatpush1.bf16.msra.mxu0 %v3557
    %3662 = vmatprep.subr.bf16.mxu0 %v3560
    %3663 = vmatpush1.bf16.msra.mxu0 %v3559
    %3664 = vmatprep.subr.bf16.mxu0 %v3562
    %3665 = vmatpush1.bf16.msra.mxu0 %v3561
    %3666 = vmatprep.subr.bf16.mxu0 %v3564
    %3667 = vmatpush1.bf16.msra.mxu0 %v3563
    %3668 = vmatprep.subr.bf16.mxu0 %v3566
    %3669 = vmatpush1.bf16.msra.mxu0 %v3565
    %3670 = vmatprep.subr.bf16.mxu0 %v3568
    %3671 = vmatpush1.bf16.msra.mxu0 %v3567
    %3672 = vmatprep.subr.bf16.mxu0 %v3570
    %3673 = vmatpush1.bf16.msra.mxu0 %v3569
    %3674 = vmatprep.subr.bf16.mxu0 %v3572
    %3675 = vmatpush1.bf16.msra.mxu0 %v3571
    %3676 = vmatprep.mubr.bf16.mxu0 %v375
    %3677 = vmatmul.mubr.bf16.gmra.mrb[0].mxu0 %v374
    %v3678 = vpop.f32.mrb[0].mxu0
    %v3679 = vadd.f32 %v3385, %v3678
    %v3680 = vpop.f32.mrb[0].mxu0
    %v3681 = vadd.f32 %v3387, %v3680
    %v3682 = vpop.f32.mrb[0].mxu0
    %v3683 = vpop.f32.mrb[0].mxu0
    %3684 = vdwg.mxu0
    %3685 = vmatprep.subr.bf16.mxu0 %v3574
    %3686 = vmatpush1.bf16.msra.mxu0 %v3573
    %3687 = vmatprep.subr.bf16.mxu0 %v3576
    %3688 = vmatpush1.bf16.msra.mxu0 %v3575
    %3689 = vmatprep.subr.bf16.mxu0 %v3578
    %3690 = vmatpush1.bf16.msra.mxu0 %v3577
    %3691 = vmatprep.subr.bf16.mxu0 %v3580
    %3692 = vmatpush1.bf16.msra.mxu0 %v3579
    %3693 = vmatprep.subr.bf16.mxu0 %v3582
    %3694 = vmatpush1.bf16.msra.mxu0 %v3581
    %3695 = vmatprep.subr.bf16.mxu0 %v3584
    %3696 = vmatpush1.bf16.msra.mxu0 %v3583
    %3697 = vmatprep.subr.bf16.mxu0 %v3586
    %3698 = vmatpush1.bf16.msra.mxu0 %v3585
    %3699 = vmatprep.subr.bf16.mxu0 %v3588
    %3700 = vmatpush1.bf16.msra.mxu0 %v3587
    %3701 = vmatprep.subr.bf16.mxu0 %v3590
    %3702 = vmatpush1.bf16.msra.mxu0 %v3589
    %3703 = vmatprep.subr.bf16.mxu0 0
    %3704 = vmatpush1.bf16.msra.mxu0 0
    %3705 = vmatprep.subr.bf16.mxu0 0
    %3706 = vmatpush1.bf16.msra.mxu0 0
    %3707 = vmatprep.subr.bf16.mxu0 0
    %3708 = vmatpush1.bf16.msra.mxu0 0
    %3709 = vmatprep.subr.bf16.mxu0 0
    %3710 = vmatpush1.bf16.msra.mxu0 0
    %3711 = vmatprep.subr.bf16.mxu0 0
    %3712 = vmatpush1.bf16.msra.mxu0 0
    %3713 = vmatprep.subr.bf16.mxu0 0
    %3714 = vmatpush1.bf16.msra.mxu0 0
    %3715 = vmatprep.subr.bf16.mxu0 0
    %3716 = vmatpush1.bf16.msra.mxu0 0
    %3717 = vmatprep.mubr.bf16.mxu0 %v3642
    %3718 = vmatmul.mubr.bf16.gmra.mrb[0].mxu0 %v376
    %v3719 = vpop.f32.mrb[0].mxu0
    %v3720 = vadd.f32 %v3679, %v3719
    %v3721 = vpop.f32.mrb[0].mxu0
    %v3722 = vadd.f32 %v3681, %v3721
    %v3723 = vpop.f32.mrb[0].mxu0
    %v3724 = vpop.f32.mrb[0].mxu0
    %3725 = vdwg.mxu0
    %v3726 = vld [vmem:[#allocation15] sm:$0x3]
    %v3728 = vlaneseq
    %v3729 = vshrl.u32 %v3728, 7
    %v3730 = vsub.s32 0, %v3729
    %v3731 = vrot.slane %v3726, %v3730
    %v3732 = vlaneseq
    %v3733 = vshrl.u32 %v3732, 7
    %v3734 = vsub.s32 1, %v3733
    %v3735 = vrot.slane %v3726, %v3734
    %v3738 = vadd.f32 %v3720, %v3731
    %v3739 = vadd.f32 %v3722, %v3735
    %v3740 = vmax.f32 %v3738, 0.0
    %v3741 = vmax.f32 %v3739, 0.0
    %v3742 = vpack.c.bf16 %v3740, %v3740
    %v3743 = vpack.c.bf16 %v3741, %v3741
    %v3744 = vld [vmem:[#allocation16] sm:$0xf]
    %v3745 = vld [vmem:[#allocation16 + $0x4] sm:$0xf]
    %v3746 = vld [vmem:[#allocation16 + $0x8] sm:$0xf]
    %v3747 = vld [vmem:[#allocation16 + $0xc] sm:$0xf]
    %v3748 = vld [vmem:[#allocation16 + $0x10] sm:$0xf]
    %v3749 = vld [vmem:[#allocation16 + $0x14] sm:$0xf]
    %v3750 = vld [vmem:[#allocation16 + $0x18] sm:$0xf]
    %v3751 = vld [vmem:[#allocation16 + $0x1c] sm:$0xf]
    %v3752 = vld [vmem:[#allocation16 + $0x20] sm:$0xf]
    %v3753 = vld [vmem:[#allocation16 + $0x24] sm:$0xf]
    %v3754 = vld [vmem:[#allocation16 + $0x28] sm:$0xf]
    %v3755 = vld [vmem:[#allocation16 + $0x2c] sm:$0xf]
    %v3756 = vld [vmem:[#allocation16 + $0x30] sm:$0xf]
    %v3757 = vld [vmem:[#allocation16 + $0x34] sm:$0xf]
    %v3758 = vld [vmem:[#allocation16 + $0x38] sm:$0xf]
    %v3759 = vld [vmem:[#allocation16 + $0x3c] sm:$0xf]
    %v3760 = vld [vmem:[#allocation16 + $0x40] sm:$0xf]
    %v3761 = vld [vmem:[#allocation16 + $0x44] sm:$0xf]
    %v3762 = vld [vmem:[#allocation16 + $0x48] sm:$0xf]
    %v3763 = vld [vmem:[#allocation16 + $0x4c] sm:$0xf]
    %v3764 = vld [vmem:[#allocation16 + $0x50] sm:$0xf]
    %v3765 = vld [vmem:[#allocation16 + $0x54] sm:$0xf]
    %v3766 = vld [vmem:[#allocation16 + $0x58] sm:$0xf]
    %v3767 = vld [vmem:[#allocation16 + $0x5c] sm:$0xf]
    %v3768 = vld [vmem:[#allocation16 + $0x60] sm:$0xf]
    %v3769 = vld [vmem:[#allocation16 + $0x64] sm:$0xf]
    %v3770 = vld [vmem:[#allocation16 + $0x68] sm:$0xf]
    %v3771 = vld [vmem:[#allocation16 + $0x6c] sm:$0xf]
    %v3772 = vld [vmem:[#allocation16 + $0x70] sm:$0xf]
    %v3773 = vld [vmem:[#allocation16 + $0x74] sm:$0xf]
    %v3774 = vld [vmem:[#allocation16 + $0x78] sm:$0xf]
    %v3775 = vld [vmem:[#allocation16 + $0x7c] sm:$0xf]
    %v3776 = vld [vmem:[#allocation18] sm:$0x1]
    %v3778 = vlaneseq
    %v3779 = vshrl.u32 %v3778, 7
    %v3780 = vsub.s32 0, %v3779
    %v3781 = vrot.slane %v3776, %v3780
    %v3815 = vunpack.c.l.b16 %v3744
    %v3816 = vunpack.c.l.b16 %v3745
    %v3817 = vunpack.c.l.b16 %v3746
    %v3818 = vunpack.c.l.b16 %v3747
    %v3819 = vunpack.c.l.b16 %v3748
    %v3820 = vunpack.c.l.b16 %v3749
    %v3821 = vunpack.c.l.b16 %v3750
    %v3822 = vunpack.c.l.b16 %v3751
    %v3823 = vunpack.c.l.b16 %v3752
    %v3824 = vunpack.c.l.b16 %v3753
    %v3825 = vunpack.c.l.b16 %v3754
    %v3826 = vunpack.c.l.b16 %v3755
    %v3827 = vunpack.c.l.b16 %v3756
    %v3828 = vunpack.c.l.b16 %v3757
    %v3829 = vunpack.c.l.b16 %v3758
    %v3830 = vunpack.c.l.b16 %v3759
    %v3831 = vunpack.c.l.b16 %v3760
    %v3832 = vunpack.c.l.b16 %v3761
    %v3833 = vunpack.c.l.b16 %v3762
    %v3834 = vunpack.c.l.b16 %v3763
    %v3835 = vunpack.c.l.b16 %v3764
    %v3836 = vunpack.c.l.b16 %v3765
    %v3837 = vunpack.c.l.b16 %v3766
    %v3838 = vunpack.c.l.b16 %v3767
    %v3839 = vunpack.c.l.b16 %v3768
    %v3840 = vunpack.c.l.b16 %v3769
    %v3841 = vunpack.c.l.b16 %v3770
    %v3842 = vunpack.c.l.b16 %v3771
    %v3843 = vunpack.c.l.b16 %v3772
    %v3844 = vunpack.c.l.b16 %v3773
    %v3845 = vunpack.c.l.b16 %v3774
    %v3846 = vunpack.c.l.b16 %v3775
    %v3847 = vpack.c.b16 %v3816, %v3815
    %v3848 = vpack.c.b16 %v3818, %v3817
    %v3849 = vpack.c.b16 %v3820, %v3819
    %v3850 = vpack.c.b16 %v3822, %v3821
    %v3851 = vpack.c.b16 %v3824, %v3823
    %v3852 = vpack.c.b16 %v3826, %v3825
    %v3853 = vpack.c.b16 %v3828, %v3827
    %v3854 = vpack.c.b16 %v3830, %v3829
    %v3855 = vpack.c.b16 %v3832, %v3831
    %v3856 = vpack.c.b16 %v3834, %v3833
    %v3857 = vpack.c.b16 %v3836, %v3835
    %v3858 = vpack.c.b16 %v3838, %v3837
    %v3859 = vpack.c.b16 %v3840, %v3839
    %v3860 = vpack.c.b16 %v3842, %v3841
    %v3861 = vpack.c.b16 %v3844, %v3843
    %v3862 = vpack.c.b16 %v3846, %v3845
    %3879 = vmatprep.subr.bf16.mxu0 0
    %3880 = vmatpush1.bf16.msra.mxu0 %v3847
    %3881 = vmatprep.subr.bf16.mxu0 0
    %3882 = vmatpush1.bf16.msra.mxu0 %v3848
    %3883 = vmatprep.subr.bf16.mxu0 0
    %3884 = vmatpush1.bf16.msra.mxu0 %v3849
    %3885 = vmatprep.subr.bf16.mxu0 0
    %3886 = vmatpush1.bf16.msra.mxu0 %v3850
    %3887 = vmatprep.subr.bf16.mxu0 0
    %3888 = vmatpush1.bf16.msra.mxu0 %v3851
    %3889 = vmatprep.subr.bf16.mxu0 0
    %3890 = vmatpush1.bf16.msra.mxu0 %v3852
    %3891 = vmatprep.subr.bf16.mxu0 0
    %3892 = vmatpush1.bf16.msra.mxu0 %v3853
    %3893 = vmatprep.subr.bf16.mxu0 0
    %3894 = vmatpush1.bf16.msra.mxu0 %v3854
    %3895 = vmatprep.subr.bf16.mxu0 0
    %3896 = vmatpush1.bf16.msra.mxu0 %v3855
    %3897 = vmatprep.subr.bf16.mxu0 0
    %3898 = vmatpush1.bf16.msra.mxu0 %v3856
    %3899 = vmatprep.subr.bf16.mxu0 0
    %3900 = vmatpush1.bf16.msra.mxu0 %v3857
    %3901 = vmatprep.subr.bf16.mxu0 0
    %3902 = vmatpush1.bf16.msra.mxu0 %v3858
    %3903 = vmatprep.subr.bf16.mxu0 0
    %3904 = vmatpush1.bf16.msra.mxu0 %v3859
    %3905 = vmatprep.subr.bf16.mxu0 0
    %3906 = vmatpush1.bf16.msra.mxu0 %v3860
    %3907 = vmatprep.subr.bf16.mxu0 0
    %3908 = vmatpush1.bf16.msra.mxu0 %v3861
    %3909 = vmatprep.subr.bf16.mxu0 0
    %3910 = vmatpush1.bf16.msra.mxu0 %v3862
    %3911 = vmatprep.mubr.bf16.mxu0 %v3743
    %3912 = vmatmul.mubr.bf16.gmra.mrb[0].mxu0 %v3742
    %v3913 = vpop.f32.mrb[0].mxu0
    %v3914 = vadd.f32 %v3781, %v3913
    %v3915 = vpop.f32.mrb[0].mxu0
    %v3916 = vpop.f32.mrb[0].mxu0
    %v3917 = vpop.f32.mrb[0].mxu0
    %3918 = vdwg.mxu0
    %v3919 = vmax.f32 %v3914, 0.0
    %v3920 = vpack.c.bf16 %v3919, %v3919
    %v3921 = vld [vmem:[%s16] sm:$0xf]
    %v3922 = vld [vmem:[%s16 + $0x4] sm:$0xf]
    %v3923 = vld [vmem:[%s16 + $0x8] sm:$0xf]
    %v3924 = vld [vmem:[%s16 + $0xc] sm:$0xf]
    %v3925 = vld [vmem:[%s16 + $0x10] sm:$0xf]
    %v3926 = vld [vmem:[%s16 + $0x14] sm:$0xf]
    %v3927 = vld [vmem:[%s16 + $0x18] sm:$0xf]
    %v3928 = vld [vmem:[%s16 + $0x1c] sm:$0xf]
    %v3929 = vld [vmem:[%s16 + $0x20] sm:$0xf]
    %v3930 = vld [vmem:[%s16 + $0x24] sm:$0xf]
    %v3931 = vld [vmem:[%s16 + $0x28] sm:$0xf]
    %v3932 = vld [vmem:[%s16 + $0x2c] sm:$0xf]
    %v3933 = vld [vmem:[%s16 + $0x30] sm:$0xf]
    %v3934 = vld [vmem:[%s16 + $0x34] sm:$0xf]
    %v3935 = vld [vmem:[%s16 + $0x38] sm:$0xf]
    %v3936 = vld [vmem:[%s16 + $0x3c] sm:$0xf]
    %v3937 = vld [vmem:[#allocation19] sm:$0x1]
    %v3939 = vlaneseq
    %v3940 = vshrl.u32 %v3939, 7
    %v3941 = vsub.s32 0, %v3940
    %v3942 = vrot.slane %v3937, %v3941
    %v3960 = vunpack.c.l.b16 %v3921
    %v3961 = vunpack.c.l.b16 %v3922
    %v3962 = vunpack.c.l.b16 %v3923
    %v3963 = vunpack.c.l.b16 %v3924
    %v3964 = vunpack.c.l.b16 %v3925
    %v3965 = vunpack.c.l.b16 %v3926
    %v3966 = vunpack.c.l.b16 %v3927
    %v3967 = vunpack.c.l.b16 %v3928
    %v3968 = vunpack.c.l.b16 %v3929
    %v3969 = vunpack.c.l.b16 %v3930
    %v3970 = vunpack.c.l.b16 %v3931
    %v3971 = vunpack.c.l.b16 %v3932
    %v3972 = vunpack.c.l.b16 %v3933
    %v3973 = vunpack.c.l.b16 %v3934
    %v3974 = vunpack.c.l.b16 %v3935
    %v3975 = vunpack.c.l.b16 %v3936
    %v3976 = vpack.c.b16 %v3961, %v3960
    %v3977 = vpack.c.b16 %v3963, %v3962
    %v3978 = vpack.c.b16 %v3965, %v3964
    %v3979 = vpack.c.b16 %v3967, %v3966
    %v3980 = vpack.c.b16 %v3969, %v3968
    %v3981 = vpack.c.b16 %v3971, %v3970
    %v3982 = vpack.c.b16 %v3973, %v3972
    %v3983 = vpack.c.b16 %v3975, %v3974
    %3992 = vmatprep.subr.bf16.mxu0 0
    %3993 = vmatpush1.bf16.msra.mxu0 %v3976
    %3994 = vmatprep.subr.bf16.mxu0 0
    %3995 = vmatpush1.bf16.msra.mxu0 %v3977
    %3996 = vmatprep.subr.bf16.mxu0 0
    %3997 = vmatpush1.bf16.msra.mxu0 %v3978
    %3998 = vmatprep.subr.bf16.mxu0 0
    %3999 = vmatpush1.bf16.msra.mxu0 %v3979
    %4000 = vmatprep.subr.bf16.mxu0 0
    %4001 = vmatpush1.bf16.msra.mxu0 %v3980
    %4002 = vmatprep.subr.bf16.mxu0 0
    %4003 = vmatpush1.bf16.msra.mxu0 %v3981
    %4004 = vmatprep.subr.bf16.mxu0 0
    %4005 = vmatpush1.bf16.msra.mxu0 %v3982
    %4006 = vmatprep.subr.bf16.mxu0 0
    %4007 = vmatpush1.bf16.msra.mxu0 %v3983
    %4008 = vmatprep.subr.bf16.mxu0 0
    %4009 = vmatpush1.bf16.msra.mxu0 0
    %4010 = vmatprep.subr.bf16.mxu0 0
    %4011 = vmatpush1.bf16.msra.mxu0 0
    %4012 = vmatprep.subr.bf16.mxu0 0
    %4013 = vmatpush1.bf16.msra.mxu0 0
    %4014 = vmatprep.subr.bf16.mxu0 0
    %4015 = vmatpush1.bf16.msra.mxu0 0
    %4016 = vmatprep.subr.bf16.mxu0 0
    %4017 = vmatpush1.bf16.msra.mxu0 0
    %4018 = vmatprep.subr.bf16.mxu0 0
    %4019 = vmatpush1.bf16.msra.mxu0 0
    %4020 = vmatprep.subr.bf16.mxu0 0
    %4021 = vmatpush1.bf16.msra.mxu0 0
    %4022 = vmatprep.subr.bf16.mxu0 0
    %4023 = vmatpush1.bf16.msra.mxu0 0
    %4024 = vmatprep.mubr.bf16.mxu0 0
    %4025 = vmatmul.mubr.bf16.gmra.mrb[0].mxu0 %v3920
    %v4026 = vpop.f32.mrb[0].mxu0
    %v4027 = vadd.f32 %v3942, %v4026
    %v4028 = vpop.f32.mrb[0].mxu0
    %v4029 = vpop.f32.mrb[0].mxu0
    %v4030 = vpop.f32.mrb[0].mxu0
    %4031 = vdwg.mxu0
    %v4032 = vtanh.pop %v4027
    %vm4033 = vcmask 56320
    %4034 = vst.msk [vmem:[%s18] sm:$0xff] %vm4033, %v4032
    // Predicated region
    $region122: #{rdpg_actor_forward.1} parent=1 // pred_check
      _
    $region123: #{rdpg_actor_forward.1} parent=1 // pred_check_branch
      %4036 = sbr.rel (0) target = $region125
    $region124: #{rdpg_actor_forward.1} parent=1 // pred_region
      _
    $region125: #{rdpg_actor_forward.1} parent=1 // pred_fallthru
      _
    // Predicated region
    $region126: #{rdpg_actor_forward.1} parent=1 // pred_check
      _
    $region127: #{rdpg_actor_forward.1} parent=1 // pred_check_branch
      %4038 = sbr.rel (0) target = $region129
    $region128: #{rdpg_actor_forward.1} parent=1 // pred_region
      _
    $region129: #{rdpg_actor_forward.1} parent=1 // pred_fallthru
      _
    %4039 = vsyncpa [#allocation3], 1
    %4040 = vsyncpa [#allocation5], 1
    %4041 = vsyncpa [#allocation8], 1
    %4042 = vsyncpa [#allocation11], 1
    %4043 = vsyncpa [#allocation14], 1
    %4044 = vsyncpa [#allocation17], 1
    %4045 = vsyncpa [#allocation20], 1

</llo_original>
